<compile_context>
chip_gen: v6e
topology: v6e:2x2x1
jax: 0.10.0
libtpu: 0.0.40
codegen_flags: <defaults>
</compile_context>

<pallas_src>
import functools
import math

import jax
import jax.numpy as jnp
from jax.experimental import pallas as pl
from jax.experimental.pallas import tpu as pltpu


def _layer_norm(x, gamma, beta, eps):
    mean = jnp.mean(x, axis=-1, keepdims=True)
    var = jnp.mean(jnp.square(x - mean), axis=-1, keepdims=True)
    return (x - mean) * jax.lax.rsqrt(var + eps) * gamma + beta


def _gelu_tanh(x):
    # PyTorch F.gelu(x, approximate="tanh")
    c = math.sqrt(2.0 / math.pi)
    return 0.5 * x * (1.0 + jnp.tanh(c * (x + 0.044715 * x * x * x)))


def encoder_layer_kernel(
    x_ref,
    ln1_g_ref, ln1_b_ref,
    wqkv_ref, bqkv_ref, wo_ref, bo_ref,
    ln2_g_ref, ln2_b_ref,
    w1_ref, b1_ref, w2_ref, b2_ref,
    out_ref,
    q_scr, k_scr, v_scr, o_scr,
    *, num_heads, head_dim, eps, i_chunk, tq, recompute_kv,
):
    f32 = jnp.float32
    bf16 = jnp.bfloat16
    qi = pl.program_id(1)
    N = x_ref.shape[1]
    D = x_ref.shape[2]

    # ---- LN1 + fused QKV projection for the full sequence (once per batch) ----
    def compute_qkv():
        x_all = x_ref[0]                                              # (N, D) f32
        h_all = _layer_norm(x_all, ln1_g_ref[...], ln1_b_ref[...], eps).astype(bf16)
        qkv = jnp.dot(h_all, wqkv_ref[...],
                      preferred_element_type=f32) + bqkv_ref[...]     # (N, 3D) f32
        scale = head_dim ** -0.5
        q_scr[...] = (qkv[:, :D] * scale).astype(bf16)                # scaled q
        k_scr[...] = qkv[:, D:2 * D].astype(bf16)
        v_scr[...] = qkv[:, 2 * D:].astype(bf16)

    if recompute_kv:                       # rare B==1 megacore-split case
        compute_qkv()
    else:
        @pl.when(qi == 0)                  # once per batch; reused across q-tiles
        def _():
            compute_qkv()

    # Query rows owned by this grid step (residual path stays f32).
    if tq == N:
        x_tile = x_ref[0]                  # (tq, D) f32
        q_tile = q_scr[...]                # (tq, D) bf16 (scaled)
    else:
        row0 = pl.multiple_of(qi * tq, tq)
        x_tile = x_ref[0, pl.ds(row0, tq), :]
        q_tile = q_scr[pl.ds(row0, tq), :]

    # ---- Per-head attention: only one (tq, N) score tile live at a time ----
    # TODO(synk): lax.fori_loop + head-major scratch to bound live ranges at large H.
    for h in range(num_heads):
        lo = h * head_dim
        hi = lo + head_dim
        s = jax.lax.dot_general(q_tile[:, lo:hi], k_scr[:, lo:hi],
                                (((1,), (1,)), ((), ())),
                                preferred_element_type=f32)           # (tq, N)
        s = s - jnp.max(s, axis=-1, keepdims=True)
        p = jnp.exp(s)
        p = p * pl.reciprocal(jnp.sum(p, axis=-1, keepdims=True), approx=True)
        # attention dropout p = 0.0 -> identity
        o_scr[:, lo:hi] = jnp.dot(p.astype(bf16), v_scr[:, lo:hi],
                                  preferred_element_type=f32)         # (tq, hd)

    # Single full-D-contraction output projection (MXU-friendly).
    attn = jnp.dot(o_scr[...].astype(bf16), wo_ref[...], preferred_element_type=f32)
    x1 = x_tile + attn + bo_ref[...]                                  # residual 1

    # ---- MLP block, chunked over the intermediate dim ----
    h2 = _layer_norm(x1, ln2_g_ref[...], ln2_b_ref[...], eps).astype(bf16)
    I = w1_ref.shape[1]
    acc = x1 + b2_ref[...]                 # residual 2 + fc2 bias folded into init
    c0 = 0
    while c0 < I:                          # static loop over I-chunks
        c1 = min(c0 + i_chunk, I)
        t = jnp.dot(h2, w1_ref[:, c0:c1], preferred_element_type=f32) + b1_ref[:, c0:c1]
        t = _gelu_tanh(t)                  # f32 elementwise (tanh rides the EUP slot)
        acc = acc + jnp.dot(t.astype(bf16), w2_ref[c0:c1, :],
                            preferred_element_type=f32)
        c0 = c1

    out_ref[0] = acc.astype(out_ref.dtype)


def _vmem_budget_bytes():
    """Generation-aware VMEM budget: ~75% of physical, capped at ~100 MiB."""
    cap = 64 * 1024 * 1024
    try:
        info = pltpu.get_tpu_info()
        cap = int(getattr(info, "vmem_capacity_bytes", cap)) or cap
    except Exception:
        pass
    return int(min(cap * 3 // 4, 100 * 1024 * 1024))


def _is_v7x():
    try:
        return "7" in jax.devices()[0].device_kind
    except Exception:
        return False


def _pick_q_tile(n, act_budget_bytes, per_row_bytes):
    """Largest query-row tile that fits the activation budget (prefer full N)."""
    if n <= 128 or n * per_row_bytes <= act_budget_bytes:
        return n
    divs = [t for t in range(8, n, 8) if n % t == 0]
    fitting = [t for t in divs if t * per_row_bytes <= act_budget_bytes]
    if fitting:
        return max(fitting)
    return min(divs) if divs else n


def encoder_layer(x, params, *, num_heads, eps=1e-6):
    B, N, D = x.shape
    head_dim = D // num_heads
    I = params["w1"].shape[1]

    bf16 = jnp.bfloat16
    f32 = jnp.float32
    row = lambda a: jnp.asarray(a, f32).reshape(1, -1)   # (1, D)/(1, I) lane-major

    vmem_budget = _vmem_budget_bytes()
    # Resident single-buffered weights (bf16) + row biases (f32).
    weight_bytes = 2 * (3 * D * D + D * D + 2 * D * I) + 4 * (3 * D + 4 * D + I)
    # Larger MLP chunk where VMEM allows (fewer chunk-loop iterations).
    i_chunk = min(I, 2048 if vmem_budget >= 80 * 1024 * 1024 else 512)
    # Q/K/V scratch (bf16, full sequence) + double-buffered full-sequence x block.
    scratch_bytes = 3 * N * D * 2 + 2 * N * D * 4
    act_budget = max(vmem_budget - weight_bytes - scratch_bytes, 2 * 1024 * 1024)
    per_row_bytes = 4 * (2 * N + 8 * D + 2 * i_chunk)   # scores/softmax + f32 temporaries
    tq = _pick_q_tile(N, act_budget, per_row_bytes)
    n_q = N // tq

    recompute_kv = False
    if B == 1 and n_q == 1 and N % 16 == 0 and _is_v7x():
        # Split the single tile so both v7x TensorCores get work; the redundant
        # full-sequence QKV projection is cheap relative to the 2x core win.
        tq, n_q, recompute_kv = N // 2, 2, True

    wqkv = jnp.concatenate(
        [jnp.asarray(params["wq"]), jnp.asarray(params["wk"]), jnp.asarray(params["wv"])],
        axis=1).astype(bf16)                                   # (D, 3D)
    bqkv = jnp.concatenate(
        [jnp.ravel(params["bq"]), jnp.ravel(params["bk"]), jnp.ravel(params["bv"])]
    ).reshape(1, -1).astype(f32)                               # (1, 3D)

    args = (
        x,
        row(params["ln1_g"]), row(params["ln1_b"]),
        wqkv, bqkv,
        params["wo"].astype(bf16), row(params["bo"]),
        row(params["ln2_g"]), row(params["ln2_b"]),
        params["w1"].astype(bf16), row(params["b1"]),
        params["w2"].astype(bf16), row(params["b2"]),
    )

    kernel = functools.partial(
        encoder_layer_kernel, num_heads=num_heads, head_dim=head_dim,
        eps=eps, i_chunk=i_chunk, tq=tq, recompute_kv=recompute_kv)

    out_shape = jax.ShapeDtypeStruct((B, N, D), x.dtype)
    scratch_shapes = [
        pltpu.VMEM((N, D), bf16),   # scaled q (full sequence)
        pltpu.VMEM((N, D), bf16),   # k
        pltpu.VMEM((N, D), bf16),   # v
        pltpu.VMEM((tq, D), f32),   # per-head attention output assembly
    ]
    dim_sems = ("parallel", "parallel" if recompute_kv else "arbitrary")

    def run(single_buffer_weights):
        def const_spec(shape):
            idx = lambda b, qi: (0,) * len(shape)
            if single_buffer_weights:
                return pl.BlockSpec(shape, idx, pipeline_mode=pl.Buffered(1))
            return pl.BlockSpec(shape, idx)

        in_specs = [
            pl.BlockSpec((1, N, D), lambda b, qi: (b, 0, 0)),   # x: full sequence/batch
            const_spec((1, D)), const_spec((1, D)),             # ln1 gamma/beta
            const_spec((D, 3 * D)), const_spec((1, 3 * D)),     # fused qkv proj
            const_spec((D, D)), const_spec((1, D)),             # out proj
            const_spec((1, D)), const_spec((1, D)),             # ln2 gamma/beta
            const_spec((D, I)), const_spec((1, I)),             # fc1
            const_spec((I, D)), const_spec((1, D)),             # fc2
        ]
        return pl.pallas_call(
            kernel,
            out_shape=out_shape,
            grid_spec=pltpu.PrefetchScalarGridSpec(
                num_scalar_prefetch=0,
                grid=(B, n_q),
                in_specs=in_specs,
                out_specs=pl.BlockSpec((1, tq, D), lambda b, qi: (b, qi, 0)),
                scratch_shapes=scratch_shapes),
            compiler_params=pltpu.CompilerParams(
                dimension_semantics=dim_sems,
                vmem_limit_bytes=vmem_budget),
        )(*args)

    try:
        return run(True)      # single-buffered constant weights (halves weight VMEM)
    except Exception:
        # Fallback if this jax version rejects pipeline_mode=pl.Buffered(1).
        return run(False)


def encoder_layer_ref(x, params, *, num_heads, eps=1e-6):
    """Plain-JAX f32 reference mirroring the PyTorch forward."""
    B, N, D = x.shape
    hd = D // num_heads

    def ln(v, g, b):
        m = jnp.mean(v, axis=-1, keepdims=True)
        var = jnp.mean(jnp.square(v - m), axis=-1, keepdims=True)
        return (v - m) * jax.lax.rsqrt(var + eps) * g + b

    res = x
    h = ln(x, params["ln1_g"], params["ln1_b"])
    q = h @ params["wq"] + params["bq"]
    k = h @ params["wk"] + params["bk"]
    v = h @ params["wv"] + params["bv"]
    q = q.reshape(B, N, num_heads, hd)
    k = k.reshape(B, N, num_heads, hd)
    v = v.reshape(B, N, num_heads, hd)
    s = jnp.einsum("bnhd,bmhd->bhnm", q, k) * (hd ** -0.5)
    p = jax.nn.softmax(s, axis=-1)
    a = jnp.einsum("bhnm,bmhd->bnhd", p, v).reshape(B, N, D)
    a = a @ params["wo"] + params["bo"]
    x = res + a
    res = x
    h = ln(x, params["ln2_g"], params["ln2_b"])
    h = jax.nn.gelu(h @ params["w1"] + params["b1"], approximate=True)
    h = h @ params["w2"] + params["b2"]
    return res + h


def make_params(key, D, I):
    ks = jax.random.split(key, 12)
    s = 0.02
    return {
        "ln1_g": jnp.ones((D,), jnp.float32),
        "ln1_b": jnp.zeros((D,), jnp.float32),
        "wq": s * jax.random.normal(ks[0], (D, D), jnp.float32),
        "bq": s * jax.random.normal(ks[1], (D,), jnp.float32),
        "wk": s * jax.random.normal(ks[2], (D, D), jnp.float32),
        "bk": s * jax.random.normal(ks[3], (D,), jnp.float32),
        "wv": s * jax.random.normal(ks[4], (D, D), jnp.float32),
        "bv": s * jax.random.normal(ks[5], (D,), jnp.float32),
        "wo": s * jax.random.normal(ks[6], (D, D), jnp.float32),
        "bo": s * jax.random.normal(ks[7], (D,), jnp.float32),
        "ln2_g": jnp.ones((D,), jnp.float32),
        "ln2_b": jnp.zeros((D,), jnp.float32),
        "w1": s * jax.random.normal(ks[8], (D, I), jnp.float32),
        "b1": s * jax.random.normal(ks[9], (I,), jnp.float32),
        "w2": s * jax.random.normal(ks[10], (I, D), jnp.float32),
        "b2": s * jax.random.normal(ks[11], (D,), jnp.float32),
    }


if __name__ == "__main__":
    # Small config consistent with the module: hidden=32, heads=4, intermediate=64.
    B, N, D, H = 2, 8, 32, 4
    I = 2 * D

    key = jax.random.PRNGKey(0)
    kx, kp = jax.random.split(key)
    x = jax.random.normal(kx, (B, N, D), jnp.float32)
    params = make_params(kp, D, I)

    out = encoder_layer(x, params, num_heads=H)
    out = jax.block_until_ready(out)

    ref = encoder_layer_ref(x, params, num_heads=H)
    assert out.shape == (B, N, D)
    # bf16 matmul operands + approx softmax reciprocal -> small drift vs f32 ref.
    assert jnp.allclose(out, ref, rtol=1e-2, atol=1e-2), "mismatch vs reference"

    print("KERNEL_OK")
</pallas_src>

<mosaic_0001>
module attributes {stable_mosaic.version = 11 : i64} {
  func.func @encoder_layer_kernel(%arg0: i32, %arg1: i32, %arg2: memref<1x8x32xf32, #tpu.memory_space<vmem>>, %arg3: memref<1x32xf32, #tpu.memory_space<vmem>>, %arg4: memref<1x32xf32, #tpu.memory_space<vmem>>, %arg5: memref<32x96xbf16, #tpu.memory_space<vmem>>, %arg6: memref<1x96xf32, #tpu.memory_space<vmem>>, %arg7: memref<32x32xbf16, #tpu.memory_space<vmem>>, %arg8: memref<1x32xf32, #tpu.memory_space<vmem>>, %arg9: memref<1x32xf32, #tpu.memory_space<vmem>>, %arg10: memref<1x32xf32, #tpu.memory_space<vmem>>, %arg11: memref<32x64xbf16, #tpu.memory_space<vmem>>, %arg12: memref<1x64xf32, #tpu.memory_space<vmem>>, %arg13: memref<64x32xbf16, #tpu.memory_space<vmem>>, %arg14: memref<1x32xf32, #tpu.memory_space<vmem>>, %arg15: memref<1x8x32xf32, #tpu.memory_space<vmem>>, %arg16: memref<8x32xbf16, #tpu.memory_space<vmem>>, %arg17: memref<8x32xbf16, #tpu.memory_space<vmem>>, %arg18: memref<8x32xbf16, #tpu.memory_space<vmem>>, %arg19: memref<8x32xf32, #tpu.memory_space<vmem>>) attributes {dimension_semantics = [#tpu.dimension_semantics<parallel>, #tpu.dimension_semantics<arbitrary>], iteration_bounds = array<i64: 2, 1>, scalar_prefetch = 0 : i64, scratch_operands = 4 : i64, tpu.core_type = #tpu.core_type<tc>, window_params = [{transform_indices = @transform_0, window_bounds = array<i64: 1, 8, 32>}, {pipeline_mode = #tpu.pipeline_mode<synchronous>, transform_indices = @transform_1, window_bounds = array<i64: 1, 32>}, {pipeline_mode = #tpu.pipeline_mode<synchronous>, transform_indices = @transform_2, window_bounds = array<i64: 1, 32>}, {pipeline_mode = #tpu.pipeline_mode<synchronous>, transform_indices = @transform_3, window_bounds = array<i64: 32, 96>}, {pipeline_mode = #tpu.pipeline_mode<synchronous>, transform_indices = @transform_4, window_bounds = array<i64: 1, 96>}, {pipeline_mode = #tpu.pipeline_mode<synchronous>, transform_indices = @transform_5, window_bounds = array<i64: 32, 32>}, {pipeline_mode = #tpu.pipeline_mode<synchronous>, transform_indices = @transform_6, window_bounds = array<i64: 1, 32>}, {pipeline_mode = #tpu.pipeline_mode<synchronous>, transform_indices = @transform_7, window_bounds = array<i64: 1, 32>}, {pipeline_mode = #tpu.pipeline_mode<synchronous>, transform_indices = @transform_8, window_bounds = array<i64: 1, 32>}, {pipeline_mode = #tpu.pipeline_mode<synchronous>, transform_indices = @transform_9, window_bounds = array<i64: 32, 64>}, {pipeline_mode = #tpu.pipeline_mode<synchronous>, transform_indices = @transform_10, window_bounds = array<i64: 1, 64>}, {pipeline_mode = #tpu.pipeline_mode<synchronous>, transform_indices = @transform_11, window_bounds = array<i64: 64, 32>}, {pipeline_mode = #tpu.pipeline_mode<synchronous>, transform_indices = @transform_12, window_bounds = array<i64: 1, 32>}, {transform_indices = @transform_13, window_bounds = array<i64: 1, 8, 32>}]} {
    %c0_i32 = arith.constant 0 : i32
    %0 = arith.cmpi eq, %arg1, %c0_i32 : i32
    %1 = arith.extui %0 : i1 to i32
    %c0_i32_0 = arith.constant 0 : i32
    %2 = arith.cmpi ne, %1, %c0_i32_0 : i32
    scf.if %2 {
      %c0_74 = arith.constant 0 : index
      %c0_75 = arith.constant 0 : index
      %c0_76 = arith.constant 0 : index
      %135 = vector.load %arg2[%c0_74, %c0_75, %c0_76] : memref<1x8x32xf32, #tpu.memory_space<vmem>>, vector<1x8x32xf32>
      %136 = vector.shape_cast %135 : vector<1x8x32xf32> to vector<8x32xf32>
      %c0_77 = arith.constant 0 : index
      %c0_78 = arith.constant 0 : index
      %137 = vector.load %arg3[%c0_77, %c0_78] : memref<1x32xf32, #tpu.memory_space<vmem>>, vector<1x32xf32>
      %c0_79 = arith.constant 0 : index
      %c0_80 = arith.constant 0 : index
      %138 = vector.load %arg4[%c0_79, %c0_80] : memref<1x32xf32, #tpu.memory_space<vmem>>, vector<1x32xf32>
      %cst_81 = arith.constant dense<0.000000e+00> : vector<8xf32>
      %139 = vector.multi_reduction <add>, %136, %cst_81 [1] : vector<8x32xf32> to vector<8xf32>
      %140 = vector.shape_cast %139 : vector<8xf32> to vector<8x1xf32>
      %cst_82 = arith.constant 3.200000e+01 : f32
      %141 = vector.broadcast %cst_82 : f32 to vector<8x1xf32>
      %142 = arith.divf %140, %141 : vector<8x1xf32>
      %143 = vector.broadcast %142 : vector<8x1xf32> to vector<8x32xf32>
      %144 = arith.subf %136, %143 : vector<8x32xf32>
      %145 = arith.mulf %144, %144 : vector<8x32xf32>
      %cst_83 = arith.constant dense<0.000000e+00> : vector<8xf32>
      %146 = vector.multi_reduction <add>, %145, %cst_83 [1] : vector<8x32xf32> to vector<8xf32>
      %147 = vector.shape_cast %146 : vector<8xf32> to vector<8x1xf32>
      %cst_84 = arith.constant 3.200000e+01 : f32
      %148 = vector.broadcast %cst_84 : f32 to vector<8x1xf32>
      %149 = arith.divf %147, %148 : vector<8x1xf32>
      %150 = vector.broadcast %142 : vector<8x1xf32> to vector<8x32xf32>
      %151 = arith.subf %136, %150 : vector<8x32xf32>
      %cst_85 = arith.constant 9.99999997E-7 : f32
      %152 = vector.broadcast %cst_85 : f32 to vector<8x1xf32>
      %153 = arith.addf %149, %152 : vector<8x1xf32>
      %154 = math.rsqrt %153 : vector<8x1xf32>
      %155 = vector.broadcast %154 : vector<8x1xf32> to vector<8x32xf32>
      %156 = arith.mulf %151, %155 : vector<8x32xf32>
      %157 = vector.broadcast %137 : vector<1x32xf32> to vector<8x32xf32>
      %158 = arith.mulf %156, %157 : vector<8x32xf32>
      %159 = vector.broadcast %138 : vector<1x32xf32> to vector<8x32xf32>
      %160 = arith.addf %158, %159 : vector<8x32xf32>
      %161 = arith.truncf %160 : vector<8x32xf32> to vector<8x32xbf16>
      %c0_86 = arith.constant 0 : index
      %c0_87 = arith.constant 0 : index
      %162 = vector.load %arg5[%c0_86, %c0_87] : memref<32x96xbf16, #tpu.memory_space<vmem>>, vector<32x96xbf16>
      %cst_88 = arith.constant dense<0.000000e+00> : vector<8x96xf32>
      %163 = tpu.matmul %161, %162, %cst_88 {dimension_numbers = #tpu.dot_dimension_numbers<[1], [0], [0], [1], [0, 0, 1, 1], [], []>} : vector<8x32xbf16>, vector<32x96xbf16>, vector<8x96xf32> -> vector<8x96xf32>
      %c0_89 = arith.constant 0 : index
      %c0_90 = arith.constant 0 : index
      %164 = vector.load %arg6[%c0_89, %c0_90] : memref<1x96xf32, #tpu.memory_space<vmem>>, vector<1x96xf32>
      %165 = vector.broadcast %164 : vector<1x96xf32> to vector<8x96xf32>
      %166 = arith.addf %163, %165 : vector<8x96xf32>
      %167 = vector.extract_strided_slice %166 {offsets = [0, 0], sizes = [8, 32], strides = [1, 1]} : vector<8x96xf32> to vector<8x32xf32>
      %cst_91 = arith.constant 0.353553385 : f32
      %168 = vector.broadcast %cst_91 : f32 to vector<8x32xf32>
      %169 = arith.mulf %167, %168 : vector<8x32xf32>
      %170 = arith.truncf %169 : vector<8x32xf32> to vector<8x32xbf16>
      %c0_92 = arith.constant 0 : index
      %c0_93 = arith.constant 0 : index
      %171 = vector.load %arg16[%c0_92, %c0_93] : memref<8x32xbf16, #tpu.memory_space<vmem>>, vector<8x32xbf16>
      tpu.vector_store %arg16[%c0_92, %c0_93], %170 {strides = array<i32>} : memref<8x32xbf16, #tpu.memory_space<vmem>>, vector<8x32xbf16>,
      %172 = vector.extract_strided_slice %166 {offsets = [0, 32], sizes = [8, 32], strides = [1, 1]} : vector<8x96xf32> to vector<8x32xf32>
      %173 = arith.truncf %172 : vector<8x32xf32> to vector<8x32xbf16>
      %c0_94 = arith.constant 0 : index
      %c0_95 = arith.constant 0 : index
      %174 = vector.load %arg17[%c0_94, %c0_95] : memref<8x32xbf16, #tpu.memory_space<vmem>>, vector<8x32xbf16>
      tpu.vector_store %arg17[%c0_94, %c0_95], %173 {strides = array<i32>} : memref<8x32xbf16, #tpu.memory_space<vmem>>, vector<8x32xbf16>,
      %175 = vector.extract_strided_slice %166 {offsets = [0, 64], sizes = [8, 32], strides = [1, 1]} : vector<8x96xf32> to vector<8x32xf32>
      %176 = arith.truncf %175 : vector<8x32xf32> to vector<8x32xbf16>
      %c0_96 = arith.constant 0 : index
      %c0_97 = arith.constant 0 : index
      %177 = vector.load %arg18[%c0_96, %c0_97] : memref<8x32xbf16, #tpu.memory_space<vmem>>, vector<8x32xbf16>
      tpu.vector_store %arg18[%c0_96, %c0_97], %176 {strides = array<i32>} : memref<8x32xbf16, #tpu.memory_space<vmem>>, vector<8x32xbf16>,
    } else {
    }
    %c0 = arith.constant 0 : index
    %c0_1 = arith.constant 0 : index
    %c0_2 = arith.constant 0 : index
    %3 = vector.load %arg2[%c0, %c0_1, %c0_2] : memref<1x8x32xf32, #tpu.memory_space<vmem>>, vector<1x8x32xf32>
    %4 = vector.shape_cast %3 : vector<1x8x32xf32> to vector<8x32xf32>
    %c0_3 = arith.constant 0 : index
    %c0_4 = arith.constant 0 : index
    %5 = vector.load %arg16[%c0_3, %c0_4] : memref<8x32xbf16, #tpu.memory_space<vmem>>, vector<8x32xbf16>
    %6 = vector.extract_strided_slice %5 {offsets = [0, 0], sizes = [8, 8], strides = [1, 1]} : vector<8x32xbf16> to vector<8x8xbf16>
    %c0_5 = arith.constant 0 : index
    %c0_6 = arith.constant 0 : index
    %7 = vector.load %arg17[%c0_5, %c0_6] : memref<8x32xbf16, #tpu.memory_space<vmem>>, vector<8x8xbf16>
    %cst = arith.constant dense<0.000000e+00> : vector<8x8xf32>
    %8 = tpu.matmul %6, %7, %cst {dimension_numbers = #tpu.dot_dimension_numbers<[1], [1], [0], [0], [0, 0, 1, 0], [], []>} : vector<8x8xbf16>, vector<8x8xbf16>, vector<8x8xf32> -> vector<8x8xf32>
    %cst_7 = arith.constant dense<0xFF800000> : vector<8xf32>
    %9 = vector.multi_reduction <maximumf>, %8, %cst_7 [1] : vector<8x8xf32> to vector<8xf32>
    %10 = vector.shape_cast %9 : vector<8xf32> to vector<8x1xf32>
    %11 = vector.broadcast %10 : vector<8x1xf32> to vector<8x8xf32>
    %12 = arith.subf %8, %11 : vector<8x8xf32>
    %13 = math.exp %12 : vector<8x8xf32>
    %cst_8 = arith.constant dense<0.000000e+00> : vector<8xf32>
    %14 = vector.multi_reduction <add>, %13, %cst_8 [1] : vector<8x8xf32> to vector<8xf32>
    %15 = vector.shape_cast %14 : vector<8xf32> to vector<8x1xf32>
    %16 = tpu.reciprocal %15 {approx = true} : vector<8x1xf32> -> vector<8x1xf32>
    %17 = vector.broadcast %16 : vector<8x1xf32> to vector<8x8xf32>
    %18 = arith.mulf %13, %17 : vector<8x8xf32>
    %19 = arith.truncf %18 : vector<8x8xf32> to vector<8x8xbf16>
    %c0_9 = arith.constant 0 : index
    %c0_10 = arith.constant 0 : index
    %20 = vector.load %arg18[%c0_9, %c0_10] : memref<8x32xbf16, #tpu.memory_space<vmem>>, vector<8x8xbf16>
    %cst_11 = arith.constant dense<0.000000e+00> : vector<8x8xf32>
    %21 = tpu.matmul %19, %20, %cst_11 {dimension_numbers = #tpu.dot_dimension_numbers<[1], [0], [0], [1], [0, 0, 1, 1], [], []>} : vector<8x8xbf16>, vector<8x8xbf16>, vector<8x8xf32> -> vector<8x8xf32>
    %c0_12 = arith.constant 0 : index
    %c0_13 = arith.constant 0 : index
    %22 = vector.load %arg19[%c0_12, %c0_13] : memref<8x32xf32, #tpu.memory_space<vmem>>, vector<8x8xf32>
    tpu.vector_store %arg19[%c0_12, %c0_13], %21 {strides = array<i32>} : memref<8x32xf32, #tpu.memory_space<vmem>>, vector<8x8xf32>,
    %23 = vector.extract_strided_slice %5 {offsets = [0, 8], sizes = [8, 8], strides = [1, 1]} : vector<8x32xbf16> to vector<8x8xbf16>
    %c0_14 = arith.constant 0 : index
    %c8 = arith.constant 8 : index
    %24 = vector.load %arg17[%c0_14, %c8] : memref<8x32xbf16, #tpu.memory_space<vmem>>, vector<8x8xbf16>
    %cst_15 = arith.constant dense<0.000000e+00> : vector<8x8xf32>
    %25 = tpu.matmul %23, %24, %cst_15 {dimension_numbers = #tpu.dot_dimension_numbers<[1], [1], [0], [0], [0, 0, 1, 0], [], []>} : vector<8x8xbf16>, vector<8x8xbf16>, vector<8x8xf32> -> vector<8x8xf32>
    %cst_16 = arith.constant dense<0xFF800000> : vector<8xf32>
    %26 = vector.multi_reduction <maximumf>, %25, %cst_16 [1] : vector<8x8xf32> to vector<8xf32>
    %27 = vector.shape_cast %26 : vector<8xf32> to vector<8x1xf32>
    %28 = vector.broadcast %27 : vector<8x1xf32> to vector<8x8xf32>
    %29 = arith.subf %25, %28 : vector<8x8xf32>
    %30 = math.exp %29 : vector<8x8xf32>
    %cst_17 = arith.constant dense<0.000000e+00> : vector<8xf32>
    %31 = vector.multi_reduction <add>, %30, %cst_17 [1] : vector<8x8xf32> to vector<8xf32>
    %32 = vector.shape_cast %31 : vector<8xf32> to vector<8x1xf32>
    %33 = tpu.reciprocal %32 {approx = true} : vector<8x1xf32> -> vector<8x1xf32>
    %34 = vector.broadcast %33 : vector<8x1xf32> to vector<8x8xf32>
    %35 = arith.mulf %30, %34 : vector<8x8xf32>
    %36 = arith.truncf %35 : vector<8x8xf32> to vector<8x8xbf16>
    %c0_18 = arith.constant 0 : index
    %c8_19 = arith.constant 8 : index
    %37 = vector.load %arg18[%c0_18, %c8_19] : memref<8x32xbf16, #tpu.memory_space<vmem>>, vector<8x8xbf16>
    %cst_20 = arith.constant dense<0.000000e+00> : vector<8x8xf32>
    %38 = tpu.matmul %36, %37, %cst_20 {dimension_numbers = #tpu.dot_dimension_numbers<[1], [0], [0], [1], [0, 0, 1, 1], [], []>} : vector<8x8xbf16>, vector<8x8xbf16>, vector<8x8xf32> -> vector<8x8xf32>
    %c0_21 = arith.constant 0 : index
    %c8_22 = arith.constant 8 : index
    %39 = vector.load %arg19[%c0_21, %c8_22] : memref<8x32xf32, #tpu.memory_space<vmem>>, vector<8x8xf32>
    tpu.vector_store %arg19[%c0_21, %c8_22], %38 {strides = array<i32>} : memref<8x32xf32, #tpu.memory_space<vmem>>, vector<8x8xf32>,
    %40 = vector.extract_strided_slice %5 {offsets = [0, 16], sizes = [8, 8], strides = [1, 1]} : vector<8x32xbf16> to vector<8x8xbf16>
    %c0_23 = arith.constant 0 : index
    %c16 = arith.constant 16 : index
    %41 = vector.load %arg17[%c0_23, %c16] : memref<8x32xbf16, #tpu.memory_space<vmem>>, vector<8x8xbf16>
    %cst_24 = arith.constant dense<0.000000e+00> : vector<8x8xf32>
    %42 = tpu.matmul %40, %41, %cst_24 {dimension_numbers = #tpu.dot_dimension_numbers<[1], [1], [0], [0], [0, 0, 1, 0], [], []>} : vector<8x8xbf16>, vector<8x8xbf16>, vector<8x8xf32> -> vector<8x8xf32>
    %cst_25 = arith.constant dense<0xFF800000> : vector<8xf32>
    %43 = vector.multi_reduction <maximumf>, %42, %cst_25 [1] : vector<8x8xf32> to vector<8xf32>
    %44 = vector.shape_cast %43 : vector<8xf32> to vector<8x1xf32>
    %45 = vector.broadcast %44 : vector<8x1xf32> to vector<8x8xf32>
    %46 = arith.subf %42, %45 : vector<8x8xf32>
    %47 = math.exp %46 : vector<8x8xf32>
    %cst_26 = arith.constant dense<0.000000e+00> : vector<8xf32>
    %48 = vector.multi_reduction <add>, %47, %cst_26 [1] : vector<8x8xf32> to vector<8xf32>
    %49 = vector.shape_cast %48 : vector<8xf32> to vector<8x1xf32>
    %50 = tpu.reciprocal %49 {approx = true} : vector<8x1xf32> -> vector<8x1xf32>
    %51 = vector.broadcast %50 : vector<8x1xf32> to vector<8x8xf32>
    %52 = arith.mulf %47, %51 : vector<8x8xf32>
    %53 = arith.truncf %52 : vector<8x8xf32> to vector<8x8xbf16>
    %c0_27 = arith.constant 0 : index
    %c16_28 = arith.constant 16 : index
    %54 = vector.load %arg18[%c0_27, %c16_28] : memref<8x32xbf16, #tpu.memory_space<vmem>>, vector<8x8xbf16>
    %cst_29 = arith.constant dense<0.000000e+00> : vector<8x8xf32>
    %55 = tpu.matmul %53, %54, %cst_29 {dimension_numbers = #tpu.dot_dimension_numbers<[1], [0], [0], [1], [0, 0, 1, 1], [], []>} : vector<8x8xbf16>, vector<8x8xbf16>, vector<8x8xf32> -> vector<8x8xf32>
    %c0_30 = arith.constant 0 : index
    %c16_31 = arith.constant 16 : index
    %56 = vector.load %arg19[%c0_30, %c16_31] : memref<8x32xf32, #tpu.memory_space<vmem>>, vector<8x8xf32>
    tpu.vector_store %arg19[%c0_30, %c16_31], %55 {strides = array<i32>} : memref<8x32xf32, #tpu.memory_space<vmem>>, vector<8x8xf32>,
    %57 = vector.extract_strided_slice %5 {offsets = [0, 24], sizes = [8, 8], strides = [1, 1]} : vector<8x32xbf16> to vector<8x8xbf16>
    %c0_32 = arith.constant 0 : index
    %c24 = arith.constant 24 : index
    %58 = vector.load %arg17[%c0_32, %c24] : memref<8x32xbf16, #tpu.memory_space<vmem>>, vector<8x8xbf16>
    %cst_33 = arith.constant dense<0.000000e+00> : vector<8x8xf32>
    %59 = tpu.matmul %57, %58, %cst_33 {dimension_numbers = #tpu.dot_dimension_numbers<[1], [1], [0], [0], [0, 0, 1, 0], [], []>} : vector<8x8xbf16>, vector<8x8xbf16>, vector<8x8xf32> -> vector<8x8xf32>
    %cst_34 = arith.constant dense<0xFF800000> : vector<8xf32>
    %60 = vector.multi_reduction <maximumf>, %59, %cst_34 [1] : vector<8x8xf32> to vector<8xf32>
    %61 = vector.shape_cast %60 : vector<8xf32> to vector<8x1xf32>
    %62 = vector.broadcast %61 : vector<8x1xf32> to vector<8x8xf32>
    %63 = arith.subf %59, %62 : vector<8x8xf32>
    %64 = math.exp %63 : vector<8x8xf32>
    %cst_35 = arith.constant dense<0.000000e+00> : vector<8xf32>
    %65 = vector.multi_reduction <add>, %64, %cst_35 [1] : vector<8x8xf32> to vector<8xf32>
    %66 = vector.shape_cast %65 : vector<8xf32> to vector<8x1xf32>
    %67 = tpu.reciprocal %66 {approx = true} : vector<8x1xf32> -> vector<8x1xf32>
    %68 = vector.broadcast %67 : vector<8x1xf32> to vector<8x8xf32>
    %69 = arith.mulf %64, %68 : vector<8x8xf32>
    %70 = arith.truncf %69 : vector<8x8xf32> to vector<8x8xbf16>
    %c0_36 = arith.constant 0 : index
    %c24_37 = arith.constant 24 : index
    %71 = vector.load %arg18[%c0_36, %c24_37] : memref<8x32xbf16, #tpu.memory_space<vmem>>, vector<8x8xbf16>
    %cst_38 = arith.constant dense<0.000000e+00> : vector<8x8xf32>
    %72 = tpu.matmul %70, %71, %cst_38 {dimension_numbers = #tpu.dot_dimension_numbers<[1], [0], [0], [1], [0, 0, 1, 1], [], []>} : vector<8x8xbf16>, vector<8x8xbf16>, vector<8x8xf32> -> vector<8x8xf32>
    %c0_39 = arith.constant 0 : index
    %c24_40 = arith.constant 24 : index
    %73 = vector.load %arg19[%c0_39, %c24_40] : memref<8x32xf32, #tpu.memory_space<vmem>>, vector<8x8xf32>
    tpu.vector_store %arg19[%c0_39, %c24_40], %72 {strides = array<i32>} : memref<8x32xf32, #tpu.memory_space<vmem>>, vector<8x8xf32>,
    %c0_41 = arith.constant 0 : index
    %c0_42 = arith.constant 0 : index
    %74 = vector.load %arg19[%c0_41, %c0_42] : memref<8x32xf32, #tpu.memory_space<vmem>>, vector<8x32xf32>
    %75 = arith.truncf %74 : vector<8x32xf32> to vector<8x32xbf16>
    %c0_43 = arith.constant 0 : index
    %c0_44 = arith.constant 0 : index
    %76 = vector.load %arg7[%c0_43, %c0_44] : memref<32x32xbf16, #tpu.memory_space<vmem>>, vector<32x32xbf16>
    %cst_45 = arith.constant dense<0.000000e+00> : vector<8x32xf32>
    %77 = tpu.matmul %75, %76, %cst_45 {dimension_numbers = #tpu.dot_dimension_numbers<[1], [0], [0], [1], [0, 0, 1, 1], [], []>} : vector<8x32xbf16>, vector<32x32xbf16>, vector<8x32xf32> -> vector<8x32xf32>
    %78 = arith.addf %4, %77 : vector<8x32xf32>
    %c0_46 = arith.constant 0 : index
    %c0_47 = arith.constant 0 : index
    %79 = vector.load %arg8[%c0_46, %c0_47] : memref<1x32xf32, #tpu.memory_space<vmem>>, vector<1x32xf32>
    %80 = vector.broadcast %79 : vector<1x32xf32> to vector<8x32xf32>
    %81 = arith.addf %78, %80 : vector<8x32xf32>
    %c0_48 = arith.constant 0 : index
    %c0_49 = arith.constant 0 : index
    %82 = vector.load %arg9[%c0_48, %c0_49] : memref<1x32xf32, #tpu.memory_space<vmem>>, vector<1x32xf32>
    %c0_50 = arith.constant 0 : index
    %c0_51 = arith.constant 0 : index
    %83 = vector.load %arg10[%c0_50, %c0_51] : memref<1x32xf32, #tpu.memory_space<vmem>>, vector<1x32xf32>
    %cst_52 = arith.constant dense<0.000000e+00> : vector<8xf32>
    %84 = vector.multi_reduction <add>, %81, %cst_52 [1] : vector<8x32xf32> to vector<8xf32>
    %85 = vector.shape_cast %84 : vector<8xf32> to vector<8x1xf32>
    %cst_53 = arith.constant 3.200000e+01 : f32
    %86 = vector.broadcast %cst_53 : f32 to vector<8x1xf32>
    %87 = arith.divf %85, %86 : vector<8x1xf32>
    %88 = vector.broadcast %87 : vector<8x1xf32> to vector<8x32xf32>
    %89 = arith.subf %81, %88 : vector<8x32xf32>
    %90 = arith.mulf %89, %89 : vector<8x32xf32>
    %cst_54 = arith.constant dense<0.000000e+00> : vector<8xf32>
    %91 = vector.multi_reduction <add>, %90, %cst_54 [1] : vector<8x32xf32> to vector<8xf32>
    %92 = vector.shape_cast %91 : vector<8xf32> to vector<8x1xf32>
    %cst_55 = arith.constant 3.200000e+01 : f32
    %93 = vector.broadcast %cst_55 : f32 to vector<8x1xf32>
    %94 = arith.divf %92, %93 : vector<8x1xf32>
    %95 = vector.broadcast %87 : vector<8x1xf32> to vector<8x32xf32>
    %96 = arith.subf %81, %95 : vector<8x32xf32>
    %cst_56 = arith.constant 9.99999997E-7 : f32
    %97 = vector.broadcast %cst_56 : f32 to vector<8x1xf32>
    %98 = arith.addf %94, %97 : vector<8x1xf32>
    %99 = math.rsqrt %98 : vector<8x1xf32>
    %100 = vector.broadcast %99 : vector<8x1xf32> to vector<8x32xf32>
    %101 = arith.mulf %96, %100 : vector<8x32xf32>
    %102 = vector.broadcast %82 : vector<1x32xf32> to vector<8x32xf32>
    %103 = arith.mulf %101, %102 : vector<8x32xf32>
    %104 = vector.broadcast %83 : vector<1x32xf32> to vector<8x32xf32>
    %105 = arith.addf %103, %104 : vector<8x32xf32>
    %106 = arith.truncf %105 : vector<8x32xf32> to vector<8x32xbf16>
    %c0_57 = arith.constant 0 : index
    %c0_58 = arith.constant 0 : index
    %107 = vector.load %arg14[%c0_57, %c0_58] : memref<1x32xf32, #tpu.memory_space<vmem>>, vector<1x32xf32>
    %108 = vector.broadcast %107 : vector<1x32xf32> to vector<8x32xf32>
    %109 = arith.addf %81, %108 : vector<8x32xf32>
    %c0_59 = arith.constant 0 : index
    %c0_60 = arith.constant 0 : index
    %110 = vector.load %arg11[%c0_59, %c0_60] : memref<32x64xbf16, #tpu.memory_space<vmem>>, vector<32x64xbf16>
    %cst_61 = arith.constant dense<0.000000e+00> : vector<8x64xf32>
    %111 = tpu.matmul %106, %110, %cst_61 {dimension_numbers = #tpu.dot_dimension_numbers<[1], [0], [0], [1], [0, 0, 1, 1], [], []>} : vector<8x32xbf16>, vector<32x64xbf16>, vector<8x64xf32> -> vector<8x64xf32>
    %c0_62 = arith.constant 0 : index
    %c0_63 = arith.constant 0 : index
    %112 = vector.load %arg12[%c0_62, %c0_63] : memref<1x64xf32, #tpu.memory_space<vmem>>, vector<1x64xf32>
    %113 = vector.broadcast %112 : vector<1x64xf32> to vector<8x64xf32>
    %114 = arith.addf %111, %113 : vector<8x64xf32>
    %cst_64 = arith.constant 5.000000e-01 : f32
    %115 = vector.broadcast %cst_64 : f32 to vector<8x64xf32>
    %116 = arith.mulf %115, %114 : vector<8x64xf32>
    %cst_65 = arith.constant 4.471500e-02 : f32
    %117 = vector.broadcast %cst_65 : f32 to vector<8x64xf32>
    %118 = arith.mulf %117, %114 : vector<8x64xf32>
    %119 = arith.mulf %118, %114 : vector<8x64xf32>
    %120 = arith.mulf %119, %114 : vector<8x64xf32>
    %121 = arith.addf %114, %120 : vector<8x64xf32>
    %cst_66 = arith.constant 0.797884583 : f32
    %122 = vector.broadcast %cst_66 : f32 to vector<8x64xf32>
    %123 = arith.mulf %122, %121 : vector<8x64xf32>
    %124 = math.tanh %123 : vector<8x64xf32>
    %cst_67 = arith.constant 1.000000e+00 : f32
    %125 = vector.broadcast %cst_67 : f32 to vector<8x64xf32>
    %126 = arith.addf %125, %124 : vector<8x64xf32>
    %127 = arith.mulf %116, %126 : vector<8x64xf32>
    %128 = arith.truncf %127 : vector<8x64xf32> to vector<8x64xbf16>
    %c0_68 = arith.constant 0 : index
    %c0_69 = arith.constant 0 : index
    %129 = vector.load %arg13[%c0_68, %c0_69] : memref<64x32xbf16, #tpu.memory_space<vmem>>, vector<64x32xbf16>
    %cst_70 = arith.constant dense<0.000000e+00> : vector<8x32xf32>
    %130 = tpu.matmul %128, %129, %cst_70 {dimension_numbers = #tpu.dot_dimension_numbers<[1], [0], [0], [1], [0, 0, 1, 1], [], []>} : vector<8x64xbf16>, vector<64x32xbf16>, vector<8x32xf32> -> vector<8x32xf32>
    %131 = arith.addf %109, %130 : vector<8x32xf32>
    %c0_71 = arith.constant 0 : index
    %c0_72 = arith.constant 0 : index
    %c0_73 = arith.constant 0 : index
    %132 = vector.load %arg15[%c0_71, %c0_72, %c0_73] : memref<1x8x32xf32, #tpu.memory_space<vmem>>, vector<1x8x32xf32>
    %133 = vector.shape_cast %132 : vector<1x8x32xf32> to vector<8x32xf32>
    %134 = vector.shape_cast %131 : vector<8x32xf32> to vector<1x8x32xf32>
    tpu.vector_store %arg15[%c0_71, %c0_72, %c0_73], %134 {strides = array<i32>} : memref<1x8x32xf32, #tpu.memory_space<vmem>>, vector<1x8x32xf32>,
    return
  }
  func.func @transform_0(%arg0: i32, %arg1: i32) -> (i32, i32, i32) {
    %c0_i32 = arith.constant 0 : i32
    %c0_i32_0 = arith.constant 0 : i32
    %c0_i32_1 = arith.constant 0 : i32
    return %arg0, %c0_i32, %c0_i32_0 : i32, i32, i32
  }
  func.func @transform_1(%arg0: i32, %arg1: i32) -> (i32, i32) {
    %c0_i32 = arith.constant 0 : i32
    %c0_i32_0 = arith.constant 0 : i32
    %c0_i32_1 = arith.constant 0 : i32
    return %c0_i32, %c0_i32_0 : i32, i32
  }
  func.func @transform_2(%arg0: i32, %arg1: i32) -> (i32, i32) {
    %c0_i32 = arith.constant 0 : i32
    %c0_i32_0 = arith.constant 0 : i32
    %c0_i32_1 = arith.constant 0 : i32
    return %c0_i32, %c0_i32_0 : i32, i32
  }
  func.func @transform_3(%arg0: i32, %arg1: i32) -> (i32, i32) {
    %c0_i32 = arith.constant 0 : i32
    %c0_i32_0 = arith.constant 0 : i32
    %c0_i32_1 = arith.constant 0 : i32
    return %c0_i32, %c0_i32_0 : i32, i32
  }
  func.func @transform_4(%arg0: i32, %arg1: i32) -> (i32, i32) {
    %c0_i32 = arith.constant 0 : i32
    %c0_i32_0 = arith.constant 0 : i32
    %c0_i32_1 = arith.constant 0 : i32
    return %c0_i32, %c0_i32_0 : i32, i32
  }
  func.func @transform_5(%arg0: i32, %arg1: i32) -> (i32, i32) {
    %c0_i32 = arith.constant 0 : i32
    %c0_i32_0 = arith.constant 0 : i32
    %c0_i32_1 = arith.constant 0 : i32
    return %c0_i32, %c0_i32_0 : i32, i32
  }
  func.func @transform_6(%arg0: i32, %arg1: i32) -> (i32, i32) {
    %c0_i32 = arith.constant 0 : i32
    %c0_i32_0 = arith.constant 0 : i32
    %c0_i32_1 = arith.constant 0 : i32
    return %c0_i32, %c0_i32_0 : i32, i32
  }
  func.func @transform_7(%arg0: i32, %arg1: i32) -> (i32, i32) {
    %c0_i32 = arith.constant 0 : i32
    %c0_i32_0 = arith.constant 0 : i32
    %c0_i32_1 = arith.constant 0 : i32
    return %c0_i32, %c0_i32_0 : i32, i32
  }
  func.func @transform_8(%arg0: i32, %arg1: i32) -> (i32, i32) {
    %c0_i32 = arith.constant 0 : i32
    %c0_i32_0 = arith.constant 0 : i32
    %c0_i32_1 = arith.constant 0 : i32
    return %c0_i32, %c0_i32_0 : i32, i32
  }
  func.func @transform_9(%arg0: i32, %arg1: i32) -> (i32, i32) {
    %c0_i32 = arith.constant 0 : i32
    %c0_i32_0 = arith.constant 0 : i32
    %c0_i32_1 = arith.constant 0 : i32
    return %c0_i32, %c0_i32_0 : i32, i32
  }
  func.func @transform_10(%arg0: i32, %arg1: i32) -> (i32, i32) {
    %c0_i32 = arith.constant 0 : i32
    %c0_i32_0 = arith.constant 0 : i32
    %c0_i32_1 = arith.constant 0 : i32
    return %c0_i32, %c0_i32_0 : i32, i32
  }
  func.func @transform_11(%arg0: i32, %arg1: i32) -> (i32, i32) {
    %c0_i32 = arith.constant 0 : i32
    %c0_i32_0 = arith.constant 0 : i32
    %c0_i32_1 = arith.constant 0 : i32
    return %c0_i32, %c0_i32_0 : i32, i32
  }
  func.func @transform_12(%arg0: i32, %arg1: i32) -> (i32, i32) {
    %c0_i32 = arith.constant 0 : i32
    %c0_i32_0 = arith.constant 0 : i32
    %c0_i32_1 = arith.constant 0 : i32
    return %c0_i32, %c0_i32_0 : i32, i32
  }
  func.func @transform_13(%arg0: i32, %arg1: i32) -> (i32, i32, i32) {
    %c0_i32 = arith.constant 0 : i32
    %c0_i32_0 = arith.constant 0 : i32
    return %arg0, %arg1, %c0_i32 : i32, i32, i32
  }
}

module attributes {stable_mosaic.version = 11 : i64} {
  func.func @encoder_layer_kernel(%arg0: i32, %arg1: i32, %arg2: memref<1x8x32xf32, #tpu.memory_space<vmem>>, %arg3: memref<1x32xf32, #tpu.memory_space<vmem>>, %arg4: memref<1x32xf32, #tpu.memory_space<vmem>>, %arg5: memref<32x96xbf16, #tpu.memory_space<vmem>>, %arg6: memref<1x96xf32, #tpu.memory_space<vmem>>, %arg7: memref<32x32xbf16, #tpu.memory_space<vmem>>, %arg8: memref<1x32xf32, #tpu.memory_space<vmem>>, %arg9: memref<1x32xf32, #tpu.memory_space<vmem>>, %arg10: memref<1x32xf32, #tpu.memory_space<vmem>>, %arg11: memref<32x64xbf16, #tpu.memory_space<vmem>>, %arg12: memref<1x64xf32, #tpu.memory_space<vmem>>, %arg13: memref<64x32xbf16, #tpu.memory_space<vmem>>, %arg14: memref<1x32xf32, #tpu.memory_space<vmem>>, %arg15: memref<1x8x32xf32, #tpu.memory_space<vmem>>, %arg16: memref<8x32xbf16, #tpu.memory_space<vmem>>, %arg17: memref<8x32xbf16, #tpu.memory_space<vmem>>, %arg18: memref<8x32xbf16, #tpu.memory_space<vmem>>, %arg19: memref<8x32xf32, #tpu.memory_space<vmem>>) attributes {dimension_semantics = [#tpu.dimension_semantics<parallel>, #tpu.dimension_semantics<arbitrary>], iteration_bounds = array<i64: 2, 1>, scalar_prefetch = 0 : i64, scratch_operands = 4 : i64, tpu.core_type = #tpu.core_type<tc>, window_params = [{transform_indices = @transform_0, window_bounds = array<i64: 1, 8, 32>}, {pipeline_mode = #tpu.pipeline_mode<synchronous>, transform_indices = @transform_1, window_bounds = array<i64: 1, 32>}, {pipeline_mode = #tpu.pipeline_mode<synchronous>, transform_indices = @transform_2, window_bounds = array<i64: 1, 32>}, {pipeline_mode = #tpu.pipeline_mode<synchronous>, transform_indices = @transform_3, window_bounds = array<i64: 32, 96>}, {pipeline_mode = #tpu.pipeline_mode<synchronous>, transform_indices = @transform_4, window_bounds = array<i64: 1, 96>}, {pipeline_mode = #tpu.pipeline_mode<synchronous>, transform_indices = @transform_5, window_bounds = array<i64: 32, 32>}, {pipeline_mode = #tpu.pipeline_mode<synchronous>, transform_indices = @transform_6, window_bounds = array<i64: 1, 32>}, {pipeline_mode = #tpu.pipeline_mode<synchronous>, transform_indices = @transform_7, window_bounds = array<i64: 1, 32>}, {pipeline_mode = #tpu.pipeline_mode<synchronous>, transform_indices = @transform_8, window_bounds = array<i64: 1, 32>}, {pipeline_mode = #tpu.pipeline_mode<synchronous>, transform_indices = @transform_9, window_bounds = array<i64: 32, 64>}, {pipeline_mode = #tpu.pipeline_mode<synchronous>, transform_indices = @transform_10, window_bounds = array<i64: 1, 64>}, {pipeline_mode = #tpu.pipeline_mode<synchronous>, transform_indices = @transform_11, window_bounds = array<i64: 64, 32>}, {pipeline_mode = #tpu.pipeline_mode<synchronous>, transform_indices = @transform_12, window_bounds = array<i64: 1, 32>}, {transform_indices = @transform_13, window_bounds = array<i64: 1, 8, 32>}]} {
    %c0_i32 = arith.constant 0 : i32
    %0 = arith.cmpi eq, %arg1, %c0_i32 : i32
    %1 = arith.extui %0 : i1 to i32
    %c0_i32_0 = arith.constant 0 : i32
    %2 = arith.cmpi ne, %1, %c0_i32_0 : i32
    scf.if %2 {
      %c0_74 = arith.constant 0 : index
      %c0_75 = arith.constant 0 : index
      %c0_76 = arith.constant 0 : index
      %135 = vector.load %arg2[%c0_74, %c0_75, %c0_76] : memref<1x8x32xf32, #tpu.memory_space<vmem>>, vector<1x8x32xf32>
      %136 = vector.shape_cast %135 : vector<1x8x32xf32> to vector<8x32xf32>
      %c0_77 = arith.constant 0 : index
      %c0_78 = arith.constant 0 : index
      %137 = vector.load %arg3[%c0_77, %c0_78] : memref<1x32xf32, #tpu.memory_space<vmem>>, vector<1x32xf32>
      %c0_79 = arith.constant 0 : index
      %c0_80 = arith.constant 0 : index
      %138 = vector.load %arg4[%c0_79, %c0_80] : memref<1x32xf32, #tpu.memory_space<vmem>>, vector<1x32xf32>
      %cst_81 = arith.constant dense<0.000000e+00> : vector<8xf32>
      %139 = vector.multi_reduction <add>, %136, %cst_81 [1] : vector<8x32xf32> to vector<8xf32>
      %140 = vector.shape_cast %139 : vector<8xf32> to vector<8x1xf32>
      %cst_82 = arith.constant 3.200000e+01 : f32
      %141 = vector.broadcast %cst_82 : f32 to vector<8x1xf32>
      %142 = arith.divf %140, %141 : vector<8x1xf32>
      %143 = vector.broadcast %142 : vector<8x1xf32> to vector<8x32xf32>
      %144 = arith.subf %136, %143 : vector<8x32xf32>
      %145 = arith.mulf %144, %144 : vector<8x32xf32>
      %cst_83 = arith.constant dense<0.000000e+00> : vector<8xf32>
      %146 = vector.multi_reduction <add>, %145, %cst_83 [1] : vector<8x32xf32> to vector<8xf32>
      %147 = vector.shape_cast %146 : vector<8xf32> to vector<8x1xf32>
      %cst_84 = arith.constant 3.200000e+01 : f32
      %148 = vector.broadcast %cst_84 : f32 to vector<8x1xf32>
      %149 = arith.divf %147, %148 : vector<8x1xf32>
      %150 = vector.broadcast %142 : vector<8x1xf32> to vector<8x32xf32>
      %151 = arith.subf %136, %150 : vector<8x32xf32>
      %cst_85 = arith.constant 9.99999997E-7 : f32
      %152 = vector.broadcast %cst_85 : f32 to vector<8x1xf32>
      %153 = arith.addf %149, %152 : vector<8x1xf32>
      %154 = math.rsqrt %153 : vector<8x1xf32>
      %155 = vector.broadcast %154 : vector<8x1xf32> to vector<8x32xf32>
      %156 = arith.mulf %151, %155 : vector<8x32xf32>
      %157 = vector.broadcast %137 : vector<1x32xf32> to vector<8x32xf32>
      %158 = arith.mulf %156, %157 : vector<8x32xf32>
      %159 = vector.broadcast %138 : vector<1x32xf32> to vector<8x32xf32>
      %160 = arith.addf %158, %159 : vector<8x32xf32>
      %161 = arith.truncf %160 : vector<8x32xf32> to vector<8x32xbf16>
      %c0_86 = arith.constant 0 : index
      %c0_87 = arith.constant 0 : index
      %162 = vector.load %arg5[%c0_86, %c0_87] : memref<32x96xbf16, #tpu.memory_space<vmem>>, vector<32x96xbf16>
      %cst_88 = arith.constant dense<0.000000e+00> : vector<8x96xf32>
      %163 = tpu.matmul %161, %162, %cst_88 {dimension_numbers = #tpu.dot_dimension_numbers<[1], [0], [0], [1], [0, 0, 1, 1], [], []>} : vector<8x32xbf16>, vector<32x96xbf16>, vector<8x96xf32> -> vector<8x96xf32>
      %c0_89 = arith.constant 0 : index
      %c0_90 = arith.constant 0 : index
      %164 = vector.load %arg6[%c0_89, %c0_90] : memref<1x96xf32, #tpu.memory_space<vmem>>, vector<1x96xf32>
      %165 = vector.broadcast %164 : vector<1x96xf32> to vector<8x96xf32>
      %166 = arith.addf %163, %165 : vector<8x96xf32>
      %167 = vector.extract_strided_slice %166 {offsets = [0, 0], sizes = [8, 32], strides = [1, 1]} : vector<8x96xf32> to vector<8x32xf32>
      %cst_91 = arith.constant 0.353553385 : f32
      %168 = vector.broadcast %cst_91 : f32 to vector<8x32xf32>
      %169 = arith.mulf %167, %168 : vector<8x32xf32>
      %170 = arith.truncf %169 : vector<8x32xf32> to vector<8x32xbf16>
      %c0_92 = arith.constant 0 : index
      %c0_93 = arith.constant 0 : index
      %171 = vector.load %arg16[%c0_92, %c0_93] : memref<8x32xbf16, #tpu.memory_space<vmem>>, vector<8x32xbf16>
      tpu.vector_store %arg16[%c0_92, %c0_93], %170 {strides = array<i32>} : memref<8x32xbf16, #tpu.memory_space<vmem>>, vector<8x32xbf16>,
      %172 = vector.extract_strided_slice %166 {offsets = [0, 32], sizes = [8, 32], strides = [1, 1]} : vector<8x96xf32> to vector<8x32xf32>
      %173 = arith.truncf %172 : vector<8x32xf32> to vector<8x32xbf16>
      %c0_94 = arith.constant 0 : index
      %c0_95 = arith.constant 0 : index
      %174 = vector.load %arg17[%c0_94, %c0_95] : memref<8x32xbf16, #tpu.memory_space<vmem>>, vector<8x32xbf16>
      tpu.vector_store %arg17[%c0_94, %c0_95], %173 {strides = array<i32>} : memref<8x32xbf16, #tpu.memory_space<vmem>>, vector<8x32xbf16>,
      %175 = vector.extract_strided_slice %166 {offsets = [0, 64], sizes = [8, 32], strides = [1, 1]} : vector<8x96xf32> to vector<8x32xf32>
      %176 = arith.truncf %175 : vector<8x32xf32> to vector<8x32xbf16>
      %c0_96 = arith.constant 0 : index
      %c0_97 = arith.constant 0 : index
      %177 = vector.load %arg18[%c0_96, %c0_97] : memref<8x32xbf16, #tpu.memory_space<vmem>>, vector<8x32xbf16>
      tpu.vector_store %arg18[%c0_96, %c0_97], %176 {strides = array<i32>} : memref<8x32xbf16, #tpu.memory_space<vmem>>, vector<8x32xbf16>,
    } else {
    }
    %c0 = arith.constant 0 : index
    %c0_1 = arith.constant 0 : index
    %c0_2 = arith.constant 0 : index
    %3 = vector.load %arg2[%c0, %c0_1, %c0_2] : memref<1x8x32xf32, #tpu.memory_space<vmem>>, vector<1x8x32xf32>
    %4 = vector.shape_cast %3 : vector<1x8x32xf32> to vector<8x32xf32>
    %c0_3 = arith.constant 0 : index
    %c0_4 = arith.constant 0 : index
    %5 = vector.load %arg16[%c0_3, %c0_4] : memref<8x32xbf16, #tpu.memory_space<vmem>>, vector<8x32xbf16>
    %6 = vector.extract_strided_slice %5 {offsets = [0, 0], sizes = [8, 8], strides = [1, 1]} : vector<8x32xbf16> to vector<8x8xbf16>
    %c0_5 = arith.constant 0 : index
    %c0_6 = arith.constant 0 : index
    %7 = vector.load %arg17[%c0_5, %c0_6] : memref<8x32xbf16, #tpu.memory_space<vmem>>, vector<8x8xbf16>
    %cst = arith.constant dense<0.000000e+00> : vector<8x8xf32>
    %8 = tpu.matmul %6, %7, %cst {dimension_numbers = #tpu.dot_dimension_numbers<[1], [1], [0], [0], [0, 0, 1, 0], [], []>} : vector<8x8xbf16>, vector<8x8xbf16>, vector<8x8xf32> -> vector<8x8xf32>
    %cst_7 = arith.constant dense<0xFF800000> : vector<8xf32>
    %9 = vector.multi_reduction <maximumf>, %8, %cst_7 [1] : vector<8x8xf32> to vector<8xf32>
    %10 = vector.shape_cast %9 : vector<8xf32> to vector<8x1xf32>
    %11 = vector.broadcast %10 : vector<8x1xf32> to vector<8x8xf32>
    %12 = arith.subf %8, %11 : vector<8x8xf32>
    %13 = math.exp %12 : vector<8x8xf32>
    %cst_8 = arith.constant dense<0.000000e+00> : vector<8xf32>
    %14 = vector.multi_reduction <add>, %13, %cst_8 [1] : vector<8x8xf32> to vector<8xf32>
    %15 = vector.shape_cast %14 : vector<8xf32> to vector<8x1xf32>
    %16 = tpu.reciprocal %15 {approx = true} : vector<8x1xf32> -> vector<8x1xf32>
    %17 = vector.broadcast %16 : vector<8x1xf32> to vector<8x8xf32>
    %18 = arith.mulf %13, %17 : vector<8x8xf32>
    %19 = arith.truncf %18 : vector<8x8xf32> to vector<8x8xbf16>
    %c0_9 = arith.constant 0 : index
    %c0_10 = arith.constant 0 : index
    %20 = vector.load %arg18[%c0_9, %c0_10] : memref<8x32xbf16, #tpu.memory_space<vmem>>, vector<8x8xbf16>
    %cst_11 = arith.constant dense<0.000000e+00> : vector<8x8xf32>
    %21 = tpu.matmul %19, %20, %cst_11 {dimension_numbers = #tpu.dot_dimension_numbers<[1], [0], [0], [1], [0, 0, 1, 1], [], []>} : vector<8x8xbf16>, vector<8x8xbf16>, vector<8x8xf32> -> vector<8x8xf32>
    %c0_12 = arith.constant 0 : index
    %c0_13 = arith.constant 0 : index
    %22 = vector.load %arg19[%c0_12, %c0_13] : memref<8x32xf32, #tpu.memory_space<vmem>>, vector<8x8xf32>
    tpu.vector_store %arg19[%c0_12, %c0_13], %21 {strides = array<i32>} : memref<8x32xf32, #tpu.memory_space<vmem>>, vector<8x8xf32>,
    %23 = vector.extract_strided_slice %5 {offsets = [0, 8], sizes = [8, 8], strides = [1, 1]} : vector<8x32xbf16> to vector<8x8xbf16>
    %c0_14 = arith.constant 0 : index
    %c8 = arith.constant 8 : index
    %24 = vector.load %arg17[%c0_14, %c8] : memref<8x32xbf16, #tpu.memory_space<vmem>>, vector<8x8xbf16>
    %cst_15 = arith.constant dense<0.000000e+00> : vector<8x8xf32>
    %25 = tpu.matmul %23, %24, %cst_15 {dimension_numbers = #tpu.dot_dimension_numbers<[1], [1], [0], [0], [0, 0, 1, 0], [], []>} : vector<8x8xbf16>, vector<8x8xbf16>, vector<8x8xf32> -> vector<8x8xf32>
    %cst_16 = arith.constant dense<0xFF800000> : vector<8xf32>
    %26 = vector.multi_reduction <maximumf>, %25, %cst_16 [1] : vector<8x8xf32> to vector<8xf32>
    %27 = vector.shape_cast %26 : vector<8xf32> to vector<8x1xf32>
    %28 = vector.broadcast %27 : vector<8x1xf32> to vector<8x8xf32>
    %29 = arith.subf %25, %28 : vector<8x8xf32>
    %30 = math.exp %29 : vector<8x8xf32>
    %cst_17 = arith.constant dense<0.000000e+00> : vector<8xf32>
    %31 = vector.multi_reduction <add>, %30, %cst_17 [1] : vector<8x8xf32> to vector<8xf32>
    %32 = vector.shape_cast %31 : vector<8xf32> to vector<8x1xf32>
    %33 = tpu.reciprocal %32 {approx = true} : vector<8x1xf32> -> vector<8x1xf32>
    %34 = vector.broadcast %33 : vector<8x1xf32> to vector<8x8xf32>
    %35 = arith.mulf %30, %34 : vector<8x8xf32>
    %36 = arith.truncf %35 : vector<8x8xf32> to vector<8x8xbf16>
    %c0_18 = arith.constant 0 : index
    %c8_19 = arith.constant 8 : index
    %37 = vector.load %arg18[%c0_18, %c8_19] : memref<8x32xbf16, #tpu.memory_space<vmem>>, vector<8x8xbf16>
    %cst_20 = arith.constant dense<0.000000e+00> : vector<8x8xf32>
    %38 = tpu.matmul %36, %37, %cst_20 {dimension_numbers = #tpu.dot_dimension_numbers<[1], [0], [0], [1], [0, 0, 1, 1], [], []>} : vector<8x8xbf16>, vector<8x8xbf16>, vector<8x8xf32> -> vector<8x8xf32>
    %c0_21 = arith.constant 0 : index
    %c8_22 = arith.constant 8 : index
    %39 = vector.load %arg19[%c0_21, %c8_22] : memref<8x32xf32, #tpu.memory_space<vmem>>, vector<8x8xf32>
    tpu.vector_store %arg19[%c0_21, %c8_22], %38 {strides = array<i32>} : memref<8x32xf32, #tpu.memory_space<vmem>>, vector<8x8xf32>,
    %40 = vector.extract_strided_slice %5 {offsets = [0, 16], sizes = [8, 8], strides = [1, 1]} : vector<8x32xbf16> to vector<8x8xbf16>
    %c0_23 = arith.constant 0 : index
    %c16 = arith.constant 16 : index
    %41 = vector.load %arg17[%c0_23, %c16] : memref<8x32xbf16, #tpu.memory_space<vmem>>, vector<8x8xbf16>
    %cst_24 = arith.constant dense<0.000000e+00> : vector<8x8xf32>
    %42 = tpu.matmul %40, %41, %cst_24 {dimension_numbers = #tpu.dot_dimension_numbers<[1], [1], [0], [0], [0, 0, 1, 0], [], []>} : vector<8x8xbf16>, vector<8x8xbf16>, vector<8x8xf32> -> vector<8x8xf32>
    %cst_25 = arith.constant dense<0xFF800000> : vector<8xf32>
    %43 = vector.multi_reduction <maximumf>, %42, %cst_25 [1] : vector<8x8xf32> to vector<8xf32>
    %44 = vector.shape_cast %43 : vector<8xf32> to vector<8x1xf32>
    %45 = vector.broadcast %44 : vector<8x1xf32> to vector<8x8xf32>
    %46 = arith.subf %42, %45 : vector<8x8xf32>
    %47 = math.exp %46 : vector<8x8xf32>
    %cst_26 = arith.constant dense<0.000000e+00> : vector<8xf32>
    %48 = vector.multi_reduction <add>, %47, %cst_26 [1] : vector<8x8xf32> to vector<8xf32>
    %49 = vector.shape_cast %48 : vector<8xf32> to vector<8x1xf32>
    %50 = tpu.reciprocal %49 {approx = true} : vector<8x1xf32> -> vector<8x1xf32>
    %51 = vector.broadcast %50 : vector<8x1xf32> to vector<8x8xf32>
    %52 = arith.mulf %47, %51 : vector<8x8xf32>
    %53 = arith.truncf %52 : vector<8x8xf32> to vector<8x8xbf16>
    %c0_27 = arith.constant 0 : index
    %c16_28 = arith.constant 16 : index
    %54 = vector.load %arg18[%c0_27, %c16_28] : memref<8x32xbf16, #tpu.memory_space<vmem>>, vector<8x8xbf16>
    %cst_29 = arith.constant dense<0.000000e+00> : vector<8x8xf32>
    %55 = tpu.matmul %53, %54, %cst_29 {dimension_numbers = #tpu.dot_dimension_numbers<[1], [0], [0], [1], [0, 0, 1, 1], [], []>} : vector<8x8xbf16>, vector<8x8xbf16>, vector<8x8xf32> -> vector<8x8xf32>
    %c0_30 = arith.constant 0 : index
    %c16_31 = arith.constant 16 : index
    %56 = vector.load %arg19[%c0_30, %c16_31] : memref<8x32xf32, #tpu.memory_space<vmem>>, vector<8x8xf32>
    tpu.vector_store %arg19[%c0_30, %c16_31], %55 {strides = array<i32>} : memref<8x32xf32, #tpu.memory_space<vmem>>, vector<8x8xf32>,
    %57 = vector.extract_strided_slice %5 {offsets = [0, 24], sizes = [8, 8], strides = [1, 1]} : vector<8x32xbf16> to vector<8x8xbf16>
    %c0_32 = arith.constant 0 : index
    %c24 = arith.constant 24 : index
    %58 = vector.load %arg17[%c0_32, %c24] : memref<8x32xbf16, #tpu.memory_space<vmem>>, vector<8x8xbf16>
    %cst_33 = arith.constant dense<0.000000e+00> : vector<8x8xf32>
    %59 = tpu.matmul %57, %58, %cst_33 {dimension_numbers = #tpu.dot_dimension_numbers<[1], [1], [0], [0], [0, 0, 1, 0], [], []>} : vector<8x8xbf16>, vector<8x8xbf16>, vector<8x8xf32> -> vector<8x8xf32>
    %cst_34 = arith.constant dense<0xFF800000> : vector<8xf32>
    %60 = vector.multi_reduction <maximumf>, %59, %cst_34 [1] : vector<8x8xf32> to vector<8xf32>
    %61 = vector.shape_cast %60 : vector<8xf32> to vector<8x1xf32>
    %62 = vector.broadcast %61 : vector<8x1xf32> to vector<8x8xf32>
    %63 = arith.subf %59, %62 : vector<8x8xf32>
    %64 = math.exp %63 : vector<8x8xf32>
    %cst_35 = arith.constant dense<0.000000e+00> : vector<8xf32>
    %65 = vector.multi_reduction <add>, %64, %cst_35 [1] : vector<8x8xf32> to vector<8xf32>
    %66 = vector.shape_cast %65 : vector<8xf32> to vector<8x1xf32>
    %67 = tpu.reciprocal %66 {approx = true} : vector<8x1xf32> -> vector<8x1xf32>
    %68 = vector.broadcast %67 : vector<8x1xf32> to vector<8x8xf32>
    %69 = arith.mulf %64, %68 : vector<8x8xf32>
    %70 = arith.truncf %69 : vector<8x8xf32> to vector<8x8xbf16>
    %c0_36 = arith.constant 0 : index
    %c24_37 = arith.constant 24 : index
    %71 = vector.load %arg18[%c0_36, %c24_37] : memref<8x32xbf16, #tpu.memory_space<vmem>>, vector<8x8xbf16>
    %cst_38 = arith.constant dense<0.000000e+00> : vector<8x8xf32>
    %72 = tpu.matmul %70, %71, %cst_38 {dimension_numbers = #tpu.dot_dimension_numbers<[1], [0], [0], [1], [0, 0, 1, 1], [], []>} : vector<8x8xbf16>, vector<8x8xbf16>, vector<8x8xf32> -> vector<8x8xf32>
    %c0_39 = arith.constant 0 : index
    %c24_40 = arith.constant 24 : index
    %73 = vector.load %arg19[%c0_39, %c24_40] : memref<8x32xf32, #tpu.memory_space<vmem>>, vector<8x8xf32>
    tpu.vector_store %arg19[%c0_39, %c24_40], %72 {strides = array<i32>} : memref<8x32xf32, #tpu.memory_space<vmem>>, vector<8x8xf32>,
    %c0_41 = arith.constant 0 : index
    %c0_42 = arith.constant 0 : index
    %74 = vector.load %arg19[%c0_41, %c0_42] : memref<8x32xf32, #tpu.memory_space<vmem>>, vector<8x32xf32>
    %75 = arith.truncf %74 : vector<8x32xf32> to vector<8x32xbf16>
    %c0_43 = arith.constant 0 : index
    %c0_44 = arith.constant 0 : index
    %76 = vector.load %arg7[%c0_43, %c0_44] : memref<32x32xbf16, #tpu.memory_space<vmem>>, vector<32x32xbf16>
    %cst_45 = arith.constant dense<0.000000e+00> : vector<8x32xf32>
    %77 = tpu.matmul %75, %76, %cst_45 {dimension_numbers = #tpu.dot_dimension_numbers<[1], [0], [0], [1], [0, 0, 1, 1], [], []>} : vector<8x32xbf16>, vector<32x32xbf16>, vector<8x32xf32> -> vector<8x32xf32>
    %78 = arith.addf %4, %77 : vector<8x32xf32>
    %c0_46 = arith.constant 0 : index
    %c0_47 = arith.constant 0 : index
    %79 = vector.load %arg8[%c0_46, %c0_47] : memref<1x32xf32, #tpu.memory_space<vmem>>, vector<1x32xf32>
    %80 = vector.broadcast %79 : vector<1x32xf32> to vector<8x32xf32>
    %81 = arith.addf %78, %80 : vector<8x32xf32>
    %c0_48 = arith.constant 0 : index
    %c0_49 = arith.constant 0 : index
    %82 = vector.load %arg9[%c0_48, %c0_49] : memref<1x32xf32, #tpu.memory_space<vmem>>, vector<1x32xf32>
    %c0_50 = arith.constant 0 : index
    %c0_51 = arith.constant 0 : index
    %83 = vector.load %arg10[%c0_50, %c0_51] : memref<1x32xf32, #tpu.memory_space<vmem>>, vector<1x32xf32>
    %cst_52 = arith.constant dense<0.000000e+00> : vector<8xf32>
    %84 = vector.multi_reduction <add>, %81, %cst_52 [1] : vector<8x32xf32> to vector<8xf32>
    %85 = vector.shape_cast %84 : vector<8xf32> to vector<8x1xf32>
    %cst_53 = arith.constant 3.200000e+01 : f32
    %86 = vector.broadcast %cst_53 : f32 to vector<8x1xf32>
    %87 = arith.divf %85, %86 : vector<8x1xf32>
    %88 = vector.broadcast %87 : vector<8x1xf32> to vector<8x32xf32>
    %89 = arith.subf %81, %88 : vector<8x32xf32>
    %90 = arith.mulf %89, %89 : vector<8x32xf32>
    %cst_54 = arith.constant dense<0.000000e+00> : vector<8xf32>
    %91 = vector.multi_reduction <add>, %90, %cst_54 [1] : vector<8x32xf32> to vector<8xf32>
    %92 = vector.shape_cast %91 : vector<8xf32> to vector<8x1xf32>
    %cst_55 = arith.constant 3.200000e+01 : f32
    %93 = vector.broadcast %cst_55 : f32 to vector<8x1xf32>
    %94 = arith.divf %92, %93 : vector<8x1xf32>
    %95 = vector.broadcast %87 : vector<8x1xf32> to vector<8x32xf32>
    %96 = arith.subf %81, %95 : vector<8x32xf32>
    %cst_56 = arith.constant 9.99999997E-7 : f32
    %97 = vector.broadcast %cst_56 : f32 to vector<8x1xf32>
    %98 = arith.addf %94, %97 : vector<8x1xf32>
    %99 = math.rsqrt %98 : vector<8x1xf32>
    %100 = vector.broadcast %99 : vector<8x1xf32> to vector<8x32xf32>
    %101 = arith.mulf %96, %100 : vector<8x32xf32>
    %102 = vector.broadcast %82 : vector<1x32xf32> to vector<8x32xf32>
    %103 = arith.mulf %101, %102 : vector<8x32xf32>
    %104 = vector.broadcast %83 : vector<1x32xf32> to vector<8x32xf32>
    %105 = arith.addf %103, %104 : vector<8x32xf32>
    %106 = arith.truncf %105 : vector<8x32xf32> to vector<8x32xbf16>
    %c0_57 = arith.constant 0 : index
    %c0_58 = arith.constant 0 : index
    %107 = vector.load %arg14[%c0_57, %c0_58] : memref<1x32xf32, #tpu.memory_space<vmem>>, vector<1x32xf32>
    %108 = vector.broadcast %107 : vector<1x32xf32> to vector<8x32xf32>
    %109 = arith.addf %81, %108 : vector<8x32xf32>
    %c0_59 = arith.constant 0 : index
    %c0_60 = arith.constant 0 : index
    %110 = vector.load %arg11[%c0_59, %c0_60] : memref<32x64xbf16, #tpu.memory_space<vmem>>, vector<32x64xbf16>
    %cst_61 = arith.constant dense<0.000000e+00> : vector<8x64xf32>
    %111 = tpu.matmul %106, %110, %cst_61 {dimension_numbers = #tpu.dot_dimension_numbers<[1], [0], [0], [1], [0, 0, 1, 1], [], []>} : vector<8x32xbf16>, vector<32x64xbf16>, vector<8x64xf32> -> vector<8x64xf32>
    %c0_62 = arith.constant 0 : index
    %c0_63 = arith.constant 0 : index
    %112 = vector.load %arg12[%c0_62, %c0_63] : memref<1x64xf32, #tpu.memory_space<vmem>>, vector<1x64xf32>
    %113 = vector.broadcast %112 : vector<1x64xf32> to vector<8x64xf32>
    %114 = arith.addf %111, %113 : vector<8x64xf32>
    %cst_64 = arith.constant 5.000000e-01 : f32
    %115 = vector.broadcast %cst_64 : f32 to vector<8x64xf32>
    %116 = arith.mulf %115, %114 : vector<8x64xf32>
    %cst_65 = arith.constant 4.471500e-02 : f32
    %117 = vector.broadcast %cst_65 : f32 to vector<8x64xf32>
    %118 = arith.mulf %117, %114 : vector<8x64xf32>
    %119 = arith.mulf %118, %114 : vector<8x64xf32>
    %120 = arith.mulf %119, %114 : vector<8x64xf32>
    %121 = arith.addf %114, %120 : vector<8x64xf32>
    %cst_66 = arith.constant 0.797884583 : f32
    %122 = vector.broadcast %cst_66 : f32 to vector<8x64xf32>
    %123 = arith.mulf %122, %121 : vector<8x64xf32>
    %124 = math.tanh %123 : vector<8x64xf32>
    %cst_67 = arith.constant 1.000000e+00 : f32
    %125 = vector.broadcast %cst_67 : f32 to vector<8x64xf32>
    %126 = arith.addf %125, %124 : vector<8x64xf32>
    %127 = arith.mulf %116, %126 : vector<8x64xf32>
    %128 = arith.truncf %127 : vector<8x64xf32> to vector<8x64xbf16>
    %c0_68 = arith.constant 0 : index
    %c0_69 = arith.constant 0 : index
    %129 = vector.load %arg13[%c0_68, %c0_69] : memref<64x32xbf16, #tpu.memory_space<vmem>>, vector<64x32xbf16>
    %cst_70 = arith.constant dense<0.000000e+00> : vector<8x32xf32>
    %130 = tpu.matmul %128, %129, %cst_70 {dimension_numbers = #tpu.dot_dimension_numbers<[1], [0], [0], [1], [0, 0, 1, 1], [], []>} : vector<8x64xbf16>, vector<64x32xbf16>, vector<8x32xf32> -> vector<8x32xf32>
    %131 = arith.addf %109, %130 : vector<8x32xf32>
    %c0_71 = arith.constant 0 : index
    %c0_72 = arith.constant 0 : index
    %c0_73 = arith.constant 0 : index
    %132 = vector.load %arg15[%c0_71, %c0_72, %c0_73] : memref<1x8x32xf32, #tpu.memory_space<vmem>>, vector<1x8x32xf32>
    %133 = vector.shape_cast %132 : vector<1x8x32xf32> to vector<8x32xf32>
    %134 = vector.shape_cast %131 : vector<8x32xf32> to vector<1x8x32xf32>
    tpu.vector_store %arg15[%c0_71, %c0_72, %c0_73], %134 {strides = array<i32>} : memref<1x8x32xf32, #tpu.memory_space<vmem>>, vector<1x8x32xf32>,
    return
  }
  func.func @transform_0(%arg0: i32, %arg1: i32) -> (i32, i32, i32) {
    %c0_i32 = arith.constant 0 : i32
    %c0_i32_0 = arith.constant 0 : i32
    %c0_i32_1 = arith.constant 0 : i32
    return %arg0, %c0_i32, %c0_i32_0 : i32, i32, i32
  }
  func.func @transform_1(%arg0: i32, %arg1: i32) -> (i32, i32) {
    %c0_i32 = arith.constant 0 : i32
    %c0_i32_0 = arith.constant 0 : i32
    %c0_i32_1 = arith.constant 0 : i32
    return %c0_i32, %c0_i32_0 : i32, i32
  }
  func.func @transform_2(%arg0: i32, %arg1: i32) -> (i32, i32) {
    %c0_i32 = arith.constant 0 : i32
    %c0_i32_0 = arith.constant 0 : i32
    %c0_i32_1 = arith.constant 0 : i32
    return %c0_i32, %c0_i32_0 : i32, i32
  }
  func.func @transform_3(%arg0: i32, %arg1: i32) -> (i32, i32) {
    %c0_i32 = arith.constant 0 : i32
    %c0_i32_0 = arith.constant 0 : i32
    %c0_i32_1 = arith.constant 0 : i32
    return %c0_i32, %c0_i32_0 : i32, i32
  }
  func.func @transform_4(%arg0: i32, %arg1: i32) -> (i32, i32) {
    %c0_i32 = arith.constant 0 : i32
    %c0_i32_0 = arith.constant 0 : i32
    %c0_i32_1 = arith.constant 0 : i32
    return %c0_i32, %c0_i32_0 : i32, i32
  }
  func.func @transform_5(%arg0: i32, %arg1: i32) -> (i32, i32) {
    %c0_i32 = arith.constant 0 : i32
    %c0_i32_0 = arith.constant 0 : i32
    %c0_i32_1 = arith.constant 0 : i32
    return %c0_i32, %c0_i32_0 : i32, i32
  }
  func.func @transform_6(%arg0: i32, %arg1: i32) -> (i32, i32) {
    %c0_i32 = arith.constant 0 : i32
    %c0_i32_0 = arith.constant 0 : i32
    %c0_i32_1 = arith.constant 0 : i32
    return %c0_i32, %c0_i32_0 : i32, i32
  }
  func.func @transform_7(%arg0: i32, %arg1: i32) -> (i32, i32) {
    %c0_i32 = arith.constant 0 : i32
    %c0_i32_0 = arith.constant 0 : i32
    %c0_i32_1 = arith.constant 0 : i32
    return %c0_i32, %c0_i32_0 : i32, i32
  }
  func.func @transform_8(%arg0: i32, %arg1: i32) -> (i32, i32) {
    %c0_i32 = arith.constant 0 : i32
    %c0_i32_0 = arith.constant 0 : i32
    %c0_i32_1 = arith.constant 0 : i32
    return %c0_i32, %c0_i32_0 : i32, i32
  }
  func.func @transform_9(%arg0: i32, %arg1: i32) -> (i32, i32) {
    %c0_i32 = arith.constant 0 : i32
    %c0_i32_0 = arith.constant 0 : i32
    %c0_i32_1 = arith.constant 0 : i32
    return %c0_i32, %c0_i32_0 : i32, i32
  }
  func.func @transform_10(%arg0: i32, %arg1: i32) -> (i32, i32) {
    %c0_i32 = arith.constant 0 : i32
    %c0_i32_0 = arith.constant 0 : i32
    %c0_i32_1 = arith.constant 0 : i32
    return %c0_i32, %c0_i32_0 : i32, i32
  }
  func.func @transform_11(%arg0: i32, %arg1: i32) -> (i32, i32) {
    %c0_i32 = arith.constant 0 : i32
    %c0_i32_0 = arith.constant 0 : i32
    %c0_i32_1 = arith.constant 0 : i32
    return %c0_i32, %c0_i32_0 : i32, i32
  }
  func.func @transform_12(%arg0: i32, %arg1: i32) -> (i32, i32) {
    %c0_i32 = arith.constant 0 : i32
    %c0_i32_0 = arith.constant 0 : i32
    %c0_i32_1 = arith.constant 0 : i32
    return %c0_i32, %c0_i32_0 : i32, i32
  }
  func.func @transform_13(%arg0: i32, %arg1: i32) -> (i32, i32, i32) {
    %c0_i32 = arith.constant 0 : i32
    %c0_i32_0 = arith.constant 0 : i32
    return %arg0, %arg1, %c0_i32 : i32, i32, i32
  }
}

</mosaic_0001>

<llo_original>
// kernel: tpu_custom_call.1
$region0: #{tpu_custom_call.1}
  #allocation0 [shape = 'u32[]', space=smem, size = 0x4, offset = 0x4, fixed_abs, tag = 'smem constant byte address 0x4 - core index']
  #allocation1 [shape = 'u32[144,128]{1,0:T(1,128)}', space=vmem, size = 0x12000, scoped, tag = 'internal scratch']
  #allocation2 [shape = 'bf16[8,32]{1,0:T(8,128)(2,1)}', space=vmem, size = 0x800, scoped, tag = 'scratch operand']
  #allocation3 [shape = 'bf16[8,32]{1,0:T(8,128)(2,1)}', space=vmem, size = 0x800, scoped, tag = 'scratch operand']
  #allocation4 [shape = 'bf16[8,32]{1,0:T(8,128)(2,1)}', space=vmem, size = 0x800, scoped, tag = 'scratch operand']
  #allocation5 [shape = 'f32[8,32]{1,0:T(8,128)}', space=vmem, size = 0x1000, scoped, tag = 'scratch operand']
  %s0 = inlined_call_operand.vmem [shape: f32[2,8,32], index: 0, kind: input, shape index: {}]
  %s1 = inlined_call_operand.vmem [shape: f32[1,32], index: 1, kind: input, shape index: {}]
  %s2 = inlined_call_operand.vmem [shape: f32[1,32], index: 2, kind: input, shape index: {}]
  %s3 = inlined_call_operand.vmem [shape: bf16[32,96], index: 3, kind: input, shape index: {}]
  %s4 = inlined_call_operand.vmem [shape: f32[1,96], index: 4, kind: input, shape index: {}]
  %s5 = inlined_call_operand.vmem [shape: bf16[32,32], index: 5, kind: input, shape index: {}]
  %s6 = inlined_call_operand.vmem [shape: f32[1,32], index: 6, kind: input, shape index: {}]
  %s7 = inlined_call_operand.hbm [shape: f32[1,32], index: 7, kind: input, shape index: {}]
  %s8 = inlined_call_operand.hbm [shape: f32[1,32], index: 8, kind: input, shape index: {}]
  %s9 = inlined_call_operand.hbm [shape: bf16[32,64], index: 9, kind: input, shape index: {}]
  %s10 = inlined_call_operand.hbm [shape: f32[1,64], index: 10, kind: input, shape index: {}]
  %s11 = inlined_call_operand.vmem [shape: bf16[64,32], index: 11, kind: input, shape index: {}]
  %s12 = inlined_call_operand.vmem [shape: f32[1,32], index: 12, kind: input, shape index: {}]
  %s13 = inlined_call_operand.hbm [shape: f32[2,8,32], index: 13, kind: output, shape index: {}]
  %s14 = sld [smem:[#allocation0]]
  $region105: #{tpu_custom_call.1} parent=0
    _
  %s16 = ssub.s32 1, %s14
  %s17 = scalar_select 0, %s16, %s14
  $region1: #{tpu_custom_call.1} parent=0
    #allocation6 [shape = 'u8[512]{0}', space=vmem, size = 0x400, scoped, tag = 'input window, operand 7, single buffered']
    #allocation7 [shape = 's32[2]{0}', space=sflag, size = 0x8, scoped, tag = 'scoped memory for tpu_custom_call.1']
    #allocation8 [shape = 's32[2]{0}', space=sflag, size = 0x8, scoped, tag = 'scoped memory for tpu_custom_call.1']
    #allocation9 [shape = 'u8[512]{0}', space=vmem, size = 0x400, scoped, tag = 'input window, operand 8, single buffered']
    #allocation10 [shape = 's32[1]{0}', space=sflag, size = 0x4, scoped, tag = 'scoped memory for tpu_custom_call.1']
    #allocation11 [shape = 'u8[8192]{0}', space=vmem, size = 0x2000, scoped, tag = 'input window, operand 9, single buffered']
    #allocation12 [shape = 'u8[512]{0}', space=vmem, size = 0x400, scoped, tag = 'input window, operand 10, single buffered']
    #allocation13 [shape = 's32[1]{0}', space=sflag, size = 0x4, scoped, tag = 'scoped memory for tpu_custom_call.1']
    #allocation14 [shape = 'u8[8192]{0}', space=vmem, size = 0x2000, scoped, tag = 'output window, operand 0']
    %18 = vsyncpa [#allocation7], 0
    %19 = vsyncpa [#allocation10], 0
    %20 = vsyncpa [#allocation13], 0
    %21 = vsyncpa [#allocation8], 0
    %s22 = scalar_lea.sflag [#allocation8], 1
    %23 = vsyncpa %s22, 0
    loop: start=0, step=1, limit=4
    $region2: #{tpu_custom_call.1} parent=1 // loop_pre_header
      _
    $region3: #{tpu_custom_call.1} parent=1 // loop_header
      %s25 = sphi 0, %s29
      %p26 = scmp.ge.s32.totalorder %s25, 4
      %s32 = sphi 0, %s44
      %s33 = sphi 0, %s40
      %s34 = sphi 0, %s32
      %s35 = sphi 0, %s33
      %s36 = sphi 0, %s34
      %s37 = sphi 0, %s35
      %s47 = sphi 0, %s49
      %s50 = sphi 0, %s47
      %s51 = sphi 0, %s50
      %s67 = sphi 0, %s51
      %s71 = sphi 0, %s71
      %s73 = sphi 0, %s71
      %s74 = sphi 0, %s73
      %s88 = sphi 0, %s74
      %s92 = sphi 0, %s92
      %s94 = sphi 0, %s92
      %s95 = sphi 0, %s94
      %s109 = sphi 0, %s95
      %s113 = sphi 0, %s113
      %s115 = sphi 0, %s113
      %s116 = sphi 0, %s115
      %s130 = sphi 0, %s116
      %s134 = sphi 0, %s134
      %s136 = sphi 0, %s134
      %s137 = sphi 0, %s136
      %s151 = sphi 0, %s137
      %s155 = sphi 0, %s155
      %s157 = sphi 0, %s155
      %s158 = sphi 0, %s157
      %s172 = sphi 0, %s158
      %s176 = sphi 0, %s176
      %s178 = sphi 0, %s176
      %s179 = sphi 0, %s178
      %s193 = sphi 0, %s179
      %s197 = sphi 0, %s197
      %s199 = sphi 0, %s197
      %s200 = sphi 0, %s199
      %s214 = sphi 0, %s200
      %s218 = sphi 0, %s218
      %s220 = sphi 0, %s218
      %s221 = sphi 0, %s220
      %s235 = sphi 0, %s221
      %s239 = sphi 0, %s239
      %s241 = sphi 0, %s239
      %s242 = sphi 0, %s241
      %s256 = sphi 0, %s242
      %s260 = sphi 0, %s260
      %s262 = sphi 0, %s260
      %s263 = sphi 0, %s262
      %s277 = sphi 0, %s263
      %s281 = sphi 0, %s281
      %s283 = sphi 0, %s281
      %s284 = sphi 0, %s283
      %s298 = sphi 0, %s284
      %s302 = sphi 0, %s302
      %s304 = sphi 0, %s302
      %s305 = sphi 0, %s304
      %s319 = sphi 0, %s305
      %s327 = sphi 0, %s329
      %s330 = sphi 0, %s327
      %s331 = sphi 0, %s330
      %s347 = sphi 0, %s331
    $region4: #{tpu_custom_call.1} parent=1 // loop_header_branch
      %28 = sbr.rel (%p26) target = $region8
    $region5: #{tpu_custom_call.1} parent=1 // loop_body
      %s30 = ssub.s32 %s25, 1
      %s31 = ssub.s32 %s25, 2
      %s38 = sadd.s32 1, %s33
      %p39 = scmp.ge.s32.totalorder %s38, 1
      %s40 = scalar_select %p39, 0, %s38
      %s41 = sadd.s32 1, %s32
      %s42 = scalar_select %p39, %s41, %s32
      %p43 = scmp.ge.s32.totalorder %s42, 2
      %s44 = scalar_select %p43, 0, %s42
      %s45 = ssub.s32 %s32, %s44
      %p46 = scmp.eq.s32.totalorder %s45, 0
      %s48 = sadd.s32 %s47, 1
      %s49 = scalar_select %p46, %s47, %s48
      %p52 = pneg %p46
      %p53 = scmp.eq.s32.totalorder %s25, 1
      %p54 = por %p52, %p53
      %p55 = scmp.ne.s32.totalorder %s47, %s50
      %p56 = scmp.eq.s32.totalorder %s25, 0
      %p57 = por %p55, %p56
      %p58 = scmp.ne.s32.totalorder %s47, %s50
      %p59 = scmp.eq.s32.totalorder %s30, 1
      %p60 = por %p58, %p59
      %p61 = scmp.ne.s32.totalorder %s50, %s51
      %p62 = scmp.eq.s32.totalorder %s30, 0
      %p63 = por %p61, %p62
      %p64 = scmp.ne.s32.totalorder %s50, %s51
      %p65 = scmp.eq.s32.totalorder %s31, 1
      %p66 = por %p64, %p65
      %p68 = scmp.ne.s32.totalorder %s51, %s67
      %p69 = scmp.eq.s32.totalorder %s31, 0
      %p70 = por %p68, %p69
      %s72 = sadd.s32 %s71, 1
      %p75 = scmp.eq.s32.totalorder %s25, 1
      %p76 = scmp.ne.s32.totalorder %s71, %s73
      %p77 = scmp.eq.s32.totalorder %s25, 0
      %p78 = por %p76, %p77
      %p79 = scmp.ne.s32.totalorder %s71, %s73
      %p80 = scmp.eq.s32.totalorder %s30, 1
      %p81 = por %p79, %p80
      %p82 = scmp.ne.s32.totalorder %s73, %s74
      %p83 = scmp.eq.s32.totalorder %s30, 0
      %p84 = por %p82, %p83
      %p85 = scmp.ne.s32.totalorder %s73, %s74
      %p86 = scmp.eq.s32.totalorder %s31, 1
      %p87 = por %p85, %p86
      %p89 = scmp.ne.s32.totalorder %s74, %s88
      %p90 = scmp.eq.s32.totalorder %s31, 0
      %p91 = por %p89, %p90
      %s93 = sadd.s32 %s92, 1
      %p96 = scmp.eq.s32.totalorder %s25, 1
      %p97 = scmp.ne.s32.totalorder %s92, %s94
      %p98 = scmp.eq.s32.totalorder %s25, 0
      %p99 = por %p97, %p98
      %p100 = scmp.ne.s32.totalorder %s92, %s94
      %p101 = scmp.eq.s32.totalorder %s30, 1
      %p102 = por %p100, %p101
      %p103 = scmp.ne.s32.totalorder %s94, %s95
      %p104 = scmp.eq.s32.totalorder %s30, 0
      %p105 = por %p103, %p104
      %p106 = scmp.ne.s32.totalorder %s94, %s95
      %p107 = scmp.eq.s32.totalorder %s31, 1
      %p108 = por %p106, %p107
      %p110 = scmp.ne.s32.totalorder %s95, %s109
      %p111 = scmp.eq.s32.totalorder %s31, 0
      %p112 = por %p110, %p111
      %s114 = sadd.s32 %s113, 1
      %p117 = scmp.eq.s32.totalorder %s25, 1
      %p118 = scmp.ne.s32.totalorder %s113, %s115
      %p119 = scmp.eq.s32.totalorder %s25, 0
      %p120 = por %p118, %p119
      %p121 = scmp.ne.s32.totalorder %s113, %s115
      %p122 = scmp.eq.s32.totalorder %s30, 1
      %p123 = por %p121, %p122
      %p124 = scmp.ne.s32.totalorder %s115, %s116
      %p125 = scmp.eq.s32.totalorder %s30, 0
      %p126 = por %p124, %p125
      %p127 = scmp.ne.s32.totalorder %s115, %s116
      %p128 = scmp.eq.s32.totalorder %s31, 1
      %p129 = por %p127, %p128
      %p131 = scmp.ne.s32.totalorder %s116, %s130
      %p132 = scmp.eq.s32.totalorder %s31, 0
      %p133 = por %p131, %p132
      %s135 = sadd.s32 %s134, 1
      %p138 = scmp.eq.s32.totalorder %s25, 1
      %p139 = scmp.ne.s32.totalorder %s134, %s136
      %p140 = scmp.eq.s32.totalorder %s25, 0
      %p141 = por %p139, %p140
      %p142 = scmp.ne.s32.totalorder %s134, %s136
      %p143 = scmp.eq.s32.totalorder %s30, 1
      %p144 = por %p142, %p143
      %p145 = scmp.ne.s32.totalorder %s136, %s137
      %p146 = scmp.eq.s32.totalorder %s30, 0
      %p147 = por %p145, %p146
      %p148 = scmp.ne.s32.totalorder %s136, %s137
      %p149 = scmp.eq.s32.totalorder %s31, 1
      %p150 = por %p148, %p149
      %p152 = scmp.ne.s32.totalorder %s137, %s151
      %p153 = scmp.eq.s32.totalorder %s31, 0
      %p154 = por %p152, %p153
      %s156 = sadd.s32 %s155, 1
      %p159 = scmp.eq.s32.totalorder %s25, 1
      %p160 = scmp.ne.s32.totalorder %s155, %s157
      %p161 = scmp.eq.s32.totalorder %s25, 0
      %p162 = por %p160, %p161
      %p163 = scmp.ne.s32.totalorder %s155, %s157
      %p164 = scmp.eq.s32.totalorder %s30, 1
      %p165 = por %p163, %p164
      %p166 = scmp.ne.s32.totalorder %s157, %s158
      %p167 = scmp.eq.s32.totalorder %s30, 0
      %p168 = por %p166, %p167
      %p169 = scmp.ne.s32.totalorder %s157, %s158
      %p170 = scmp.eq.s32.totalorder %s31, 1
      %p171 = por %p169, %p170
      %p173 = scmp.ne.s32.totalorder %s158, %s172
      %p174 = scmp.eq.s32.totalorder %s31, 0
      %p175 = por %p173, %p174
      %s177 = sadd.s32 %s176, 1
      %p180 = scmp.eq.s32.totalorder %s25, 1
      %p181 = scmp.ne.s32.totalorder %s176, %s178
      %p182 = scmp.eq.s32.totalorder %s25, 0
      %p183 = por %p181, %p182
      %p184 = scmp.ne.s32.totalorder %s176, %s178
      %p185 = scmp.eq.s32.totalorder %s30, 1
      %p186 = por %p184, %p185
      %p187 = scmp.ne.s32.totalorder %s178, %s179
      %p188 = scmp.eq.s32.totalorder %s30, 0
      %p189 = por %p187, %p188
      %p190 = scmp.ne.s32.totalorder %s178, %s179
      %p191 = scmp.eq.s32.totalorder %s31, 1
      %p192 = por %p190, %p191
      %p194 = scmp.ne.s32.totalorder %s179, %s193
      %p195 = scmp.eq.s32.totalorder %s31, 0
      %p196 = por %p194, %p195
      %s198 = sadd.s32 %s197, 1
      %p201 = scmp.eq.s32.totalorder %s25, 1
      %p202 = scmp.ne.s32.totalorder %s197, %s199
      %p203 = scmp.eq.s32.totalorder %s25, 0
      %p204 = por %p202, %p203
      %p205 = scmp.ne.s32.totalorder %s197, %s199
      %p206 = scmp.eq.s32.totalorder %s30, 1
      %p207 = por %p205, %p206
      %p208 = scmp.ne.s32.totalorder %s199, %s200
      %p209 = scmp.eq.s32.totalorder %s30, 0
      %p210 = por %p208, %p209
      %p211 = scmp.ne.s32.totalorder %s199, %s200
      %p212 = scmp.eq.s32.totalorder %s31, 1
      %p213 = por %p211, %p212
      %p215 = scmp.ne.s32.totalorder %s200, %s214
      %p216 = scmp.eq.s32.totalorder %s31, 0
      %p217 = por %p215, %p216
      %s219 = sadd.s32 %s218, 1
      %p222 = scmp.eq.s32.totalorder %s25, 1
      %p223 = scmp.ne.s32.totalorder %s218, %s220
      %p224 = scmp.eq.s32.totalorder %s25, 0
      %p225 = por %p223, %p224
      %p226 = scmp.ne.s32.totalorder %s218, %s220
      %p227 = scmp.eq.s32.totalorder %s30, 1
      %p228 = por %p226, %p227
      %p229 = scmp.ne.s32.totalorder %s220, %s221
      %p230 = scmp.eq.s32.totalorder %s30, 0
      %p231 = por %p229, %p230
      %p232 = scmp.ne.s32.totalorder %s220, %s221
      %p233 = scmp.eq.s32.totalorder %s31, 1
      %p234 = por %p232, %p233
      %p236 = scmp.ne.s32.totalorder %s221, %s235
      %p237 = scmp.eq.s32.totalorder %s31, 0
      %p238 = por %p236, %p237
      %s240 = sadd.s32 %s239, 1
      %p243 = scmp.eq.s32.totalorder %s25, 1
      %p244 = scmp.ne.s32.totalorder %s239, %s241
      %p245 = scmp.eq.s32.totalorder %s25, 0
      %p246 = por %p244, %p245
      %p247 = scmp.ne.s32.totalorder %s239, %s241
      %p248 = scmp.eq.s32.totalorder %s30, 1
      %p249 = por %p247, %p248
      %p250 = scmp.ne.s32.totalorder %s241, %s242
      %p251 = scmp.eq.s32.totalorder %s30, 0
      %p252 = por %p250, %p251
      %p253 = scmp.ne.s32.totalorder %s241, %s242
      %p254 = scmp.eq.s32.totalorder %s31, 1
      %p255 = por %p253, %p254
      %p257 = scmp.ne.s32.totalorder %s242, %s256
      %p258 = scmp.eq.s32.totalorder %s31, 0
      %p259 = por %p257, %p258
      %s261 = sadd.s32 %s260, 1
      %p264 = scmp.eq.s32.totalorder %s25, 1
      %p265 = scmp.ne.s32.totalorder %s260, %s262
      %p266 = scmp.eq.s32.totalorder %s25, 0
      %p267 = por %p265, %p266
      %p268 = scmp.ne.s32.totalorder %s260, %s262
      %p269 = scmp.eq.s32.totalorder %s30, 1
      %p270 = por %p268, %p269
      %p271 = scmp.ne.s32.totalorder %s262, %s263
      %p272 = scmp.eq.s32.totalorder %s30, 0
      %p273 = por %p271, %p272
      %p274 = scmp.ne.s32.totalorder %s262, %s263
      %p275 = scmp.eq.s32.totalorder %s31, 1
      %p276 = por %p274, %p275
      %p278 = scmp.ne.s32.totalorder %s263, %s277
      %p279 = scmp.eq.s32.totalorder %s31, 0
      %p280 = por %p278, %p279
      %s282 = sadd.s32 %s281, 1
      %p285 = scmp.eq.s32.totalorder %s25, 1
      %p286 = scmp.ne.s32.totalorder %s281, %s283
      %p287 = scmp.eq.s32.totalorder %s25, 0
      %p288 = por %p286, %p287
      %p289 = scmp.ne.s32.totalorder %s281, %s283
      %p290 = scmp.eq.s32.totalorder %s30, 1
      %p291 = por %p289, %p290
      %p292 = scmp.ne.s32.totalorder %s283, %s284
      %p293 = scmp.eq.s32.totalorder %s30, 0
      %p294 = por %p292, %p293
      %p295 = scmp.ne.s32.totalorder %s283, %s284
      %p296 = scmp.eq.s32.totalorder %s31, 1
      %p297 = por %p295, %p296
      %p299 = scmp.ne.s32.totalorder %s284, %s298
      %p300 = scmp.eq.s32.totalorder %s31, 0
      %p301 = por %p299, %p300
      %s303 = sadd.s32 %s302, 1
      %p306 = scmp.eq.s32.totalorder %s25, 1
      %p307 = scmp.ne.s32.totalorder %s302, %s304
      %p308 = scmp.eq.s32.totalorder %s25, 0
      %p309 = por %p307, %p308
      %p310 = scmp.ne.s32.totalorder %s302, %s304
      %p311 = scmp.eq.s32.totalorder %s30, 1
      %p312 = por %p310, %p311
      %p313 = scmp.ne.s32.totalorder %s304, %s305
      %p314 = scmp.eq.s32.totalorder %s30, 0
      %p315 = por %p313, %p314
      %p316 = scmp.ne.s32.totalorder %s304, %s305
      %p317 = scmp.eq.s32.totalorder %s31, 1
      %p318 = por %p316, %p317
      %p320 = scmp.ne.s32.totalorder %s305, %s319
      %p321 = scmp.eq.s32.totalorder %s31, 0
      %p322 = por %p320, %p321
      %s323 = ssub.s32 %s32, %s44
      %s324 = ssub.s32 %s33, %s40
      %s325 = sor.u32 %s323, %s324
      %p326 = scmp.eq.s32.totalorder %s325, 0
      %s328 = sadd.s32 %s327, 1
      %s329 = scalar_select %p326, %s327, %s328
      %p332 = pneg %p326
      %p333 = scmp.eq.s32.totalorder %s25, 1
      %p334 = por %p332, %p333
      %p335 = scmp.ne.s32.totalorder %s327, %s330
      %p336 = scmp.eq.s32.totalorder %s25, 0
      %p337 = por %p335, %p336
      %p338 = scmp.ne.s32.totalorder %s327, %s330
      %p339 = scmp.eq.s32.totalorder %s30, 1
      %p340 = por %p338, %p339
      %p341 = scmp.ne.s32.totalorder %s330, %s331
      %p342 = scmp.eq.s32.totalorder %s30, 0
      %p343 = por %p341, %p342
      %p344 = scmp.ne.s32.totalorder %s330, %s331
      %p345 = scmp.eq.s32.totalorder %s31, 1
      %p346 = por %p344, %p345
      %p348 = scmp.ne.s32.totalorder %s331, %s347
      %p349 = scmp.eq.s32.totalorder %s31, 0
      %p350 = por %p348, %p349
      %p351 = scmp.le.s32.totalorder 1, %s25
      %p352 = scmp.lt.s32.totalorder %s25, 3
      %p353 = pnand %p351, %p352
      %p354 = pneg %p353
      // Predicated region
      $region9: #{tpu_custom_call.1} parent=5 // pred_check
        _
      $region10: #{tpu_custom_call.1} parent=5 // pred_check_branch
        %356 = sbr.rel (%p353) target = $region12
      $region11: #{tpu_custom_call.1} parent=5 // pred_region
        %s357 = ssub.s32 %s25, 1
        // Predicated region
        $region13: #{tpu_custom_call.1} parent=11 // pred_check
          %p358 = pneg %p84
        $region14: #{tpu_custom_call.1} parent=11 // pred_check_branch
          %360 = sbr.rel (%p358) target = $region16
        $region15: #{tpu_custom_call.1} parent=11 // pred_region
          _
        $region16: #{tpu_custom_call.1} parent=11 // pred_fallthru
          _
        // Predicated region
        $region17: #{tpu_custom_call.1} parent=11 // pred_check
          %p361 = pneg %p105
        $region18: #{tpu_custom_call.1} parent=11 // pred_check_branch
          %363 = sbr.rel (%p361) target = $region20
        $region19: #{tpu_custom_call.1} parent=11 // pred_region
          _
        $region20: #{tpu_custom_call.1} parent=11 // pred_fallthru
          _
        // Predicated region
        $region21: #{tpu_custom_call.1} parent=11 // pred_check
          %p364 = pneg %p126
        $region22: #{tpu_custom_call.1} parent=11 // pred_check_branch
          %366 = sbr.rel (%p364) target = $region24
        $region23: #{tpu_custom_call.1} parent=11 // pred_region
          _
        $region24: #{tpu_custom_call.1} parent=11 // pred_fallthru
          _
        // Predicated region
        $region25: #{tpu_custom_call.1} parent=11 // pred_check
          %p367 = pneg %p147
        $region26: #{tpu_custom_call.1} parent=11 // pred_check_branch
          %369 = sbr.rel (%p367) target = $region28
        $region27: #{tpu_custom_call.1} parent=11 // pred_region
          _
        $region28: #{tpu_custom_call.1} parent=11 // pred_fallthru
          _
        // Predicated region
        $region29: #{tpu_custom_call.1} parent=11 // pred_check
          %p370 = pneg %p168
        $region30: #{tpu_custom_call.1} parent=11 // pred_check_branch
          %372 = sbr.rel (%p370) target = $region32
        $region31: #{tpu_custom_call.1} parent=11 // pred_region
          _
        $region32: #{tpu_custom_call.1} parent=11 // pred_fallthru
          _
        // Predicated region
        $region33: #{tpu_custom_call.1} parent=11 // pred_check
          %p373 = pneg %p189
        $region34: #{tpu_custom_call.1} parent=11 // pred_check_branch
          %375 = sbr.rel (%p373) target = $region36
        $region35: #{tpu_custom_call.1} parent=11 // pred_region
          _
        $region36: #{tpu_custom_call.1} parent=11 // pred_fallthru
          _
        // Predicated region
        $region37: #{tpu_custom_call.1} parent=11 // pred_check
          %p376 = pneg %p210
        $region38: #{tpu_custom_call.1} parent=11 // pred_check_branch
          %378 = sbr.rel (%p376) target = $region40
        $region39: #{tpu_custom_call.1} parent=11 // pred_region
          %s380 = ssub.s32 16, 16
          %381 = vsyncadd [#allocation7], %s380
          %s383 = sshll.u32 [#allocation6], 4
          %s384 = int_to_ptr.vmem [resolvable:$true] %s383
          %386 = dma.hbm_to_vmem [thread:$0]  %s7, 16, %s384, [#allocation7]
        $region40: #{tpu_custom_call.1} parent=11 // pred_fallthru
          _
        // Predicated region
        $region41: #{tpu_custom_call.1} parent=11 // pred_check
          %p387 = pneg %p231
        $region42: #{tpu_custom_call.1} parent=11 // pred_check_branch
          %389 = sbr.rel (%p387) target = $region44
        $region43: #{tpu_custom_call.1} parent=11 // pred_region
          %s391 = ssub.s32 16, 16
          %392 = vsyncadd [#allocation10], %s391
          %s394 = sshll.u32 [#allocation9], 4
          %s395 = int_to_ptr.vmem [resolvable:$true] %s394
          %397 = dma.hbm_to_vmem [thread:$0]  %s8, 16, %s395, [#allocation10]
        $region44: #{tpu_custom_call.1} parent=11 // pred_fallthru
          _
        // Predicated region
        $region45: #{tpu_custom_call.1} parent=11 // pred_check
          %p398 = pneg %p252
        $region46: #{tpu_custom_call.1} parent=11 // pred_check_branch
          %400 = sbr.rel (%p398) target = $region48
        $region47: #{tpu_custom_call.1} parent=11 // pred_region
          %s402 = ssub.s32 256, 256
          %403 = vsyncadd [#allocation10], %s402
          %s404 = sshll.u32 [#allocation11], 4
          %s405 = int_to_ptr.vmem [resolvable:$true] %s404
          %410 = dma.hbm_to_vmem [thread:$0]  %s9, 256, %s405, [#allocation10], 64, 64, 4
        $region48: #{tpu_custom_call.1} parent=11 // pred_fallthru
          _
        // Predicated region
        $region49: #{tpu_custom_call.1} parent=11 // pred_check
          %p411 = pneg %p273
        $region50: #{tpu_custom_call.1} parent=11 // pred_check_branch
          %413 = sbr.rel (%p411) target = $region52
        $region51: #{tpu_custom_call.1} parent=11 // pred_region
          %s415 = ssub.s32 16, 16
          %416 = vsyncadd [#allocation13], %s415
          %s418 = sshll.u32 [#allocation12], 4
          %s419 = int_to_ptr.vmem [resolvable:$true] %s418
          %421 = dma.hbm_to_vmem [thread:$0]  %s10, 16, %s419, [#allocation13]
        $region52: #{tpu_custom_call.1} parent=11 // pred_fallthru
          _
        // Predicated region
        $region53: #{tpu_custom_call.1} parent=11 // pred_check
          %p422 = pneg %p294
        $region54: #{tpu_custom_call.1} parent=11 // pred_check_branch
          %424 = sbr.rel (%p422) target = $region56
        $region55: #{tpu_custom_call.1} parent=11 // pred_region
          _
        $region56: #{tpu_custom_call.1} parent=11 // pred_fallthru
          _
        // Predicated region
        $region57: #{tpu_custom_call.1} parent=11 // pred_check
          %p425 = pneg %p315
        $region58: #{tpu_custom_call.1} parent=11 // pred_check_branch
          %427 = sbr.rel (%p425) target = $region60
        $region59: #{tpu_custom_call.1} parent=11 // pred_region
          _
        $region60: #{tpu_custom_call.1} parent=11 // pred_fallthru
          _
      $region12: #{tpu_custom_call.1} parent=5 // pred_fallthru
        _
      %p428 = scmp.lt.s32.totalorder %s25, 2
      // Predicated region
      $region61: #{tpu_custom_call.1} parent=5 // pred_check
        %p429 = pneg %p428
      $region62: #{tpu_custom_call.1} parent=5 // pred_check_branch
        %431 = sbr.rel (%p429) target = $region64
      $region63: #{tpu_custom_call.1} parent=5 // pred_region
        // Predicated region
        $region65: #{tpu_custom_call.1} parent=63 // pred_check
          %p432 = pneg %p57
        $region66: #{tpu_custom_call.1} parent=63 // pred_check_branch
          %434 = sbr.rel (%p432) target = $region68
        $region67: #{tpu_custom_call.1} parent=63 // pred_region
          %p435 = scmp.lt.s32.totalorder %s32, 1
          %s436 = scalar_select %p435, %s32, 1
          %s437 = smul.addr %s436, 8
          %s438 = scalar_lea.vmem %s0, %s437
        $region68: #{tpu_custom_call.1} parent=63 // pred_fallthru
          _
      $region64: #{tpu_custom_call.1} parent=5 // pred_fallthru
        _
      %p439 = scmp.le.s32.totalorder 1, %s25
      %p440 = scmp.lt.s32.totalorder %s25, 3
      %p441 = pnand %p439, %p440
      %p442 = pneg %p441
      // Predicated region
      $region69: #{tpu_custom_call.1} parent=5 // pred_check
        _
      $region70: #{tpu_custom_call.1} parent=5 // pred_check_branch
        %444 = sbr.rel (%p441) target = $region72
      $region71: #{tpu_custom_call.1} parent=5 // pred_region
        %s445 = ssub.s32 %s25, 1
        // Predicated region
        $region73: #{tpu_custom_call.1} parent=71 // pred_check
          %p446 = pneg %p210
        $region74: #{tpu_custom_call.1} parent=71 // pred_check_branch
          %448 = sbr.rel (%p446) target = $region76
        $region75: #{tpu_custom_call.1} parent=71 // pred_region
          %449 = dma.done [#allocation7], 16
        $region76: #{tpu_custom_call.1} parent=71 // pred_fallthru
          _
        // Predicated region
        $region77: #{tpu_custom_call.1} parent=71 // pred_check
          %p450 = pneg %p231
        $region78: #{tpu_custom_call.1} parent=71 // pred_check_branch
          %452 = sbr.rel (%p450) target = $region80
        $region79: #{tpu_custom_call.1} parent=71 // pred_region
          %453 = dma.done [#allocation10], 16
        $region80: #{tpu_custom_call.1} parent=71 // pred_fallthru
          _
        // Predicated region
        $region81: #{tpu_custom_call.1} parent=71 // pred_check
          %p454 = pneg %p252
        $region82: #{tpu_custom_call.1} parent=71 // pred_check_branch
          %456 = sbr.rel (%p454) target = $region84
        $region83: #{tpu_custom_call.1} parent=71 // pred_region
          %457 = dma.done [#allocation10], 256
        $region84: #{tpu_custom_call.1} parent=71 // pred_fallthru
          _
        // Predicated region
        $region85: #{tpu_custom_call.1} parent=71 // pred_check
          %p458 = pneg %p273
        $region86: #{tpu_custom_call.1} parent=71 // pred_check_branch
          %460 = sbr.rel (%p458) target = $region88
        $region87: #{tpu_custom_call.1} parent=71 // pred_region
          %461 = dma.done [#allocation13], 16
        $region88: #{tpu_custom_call.1} parent=71 // pred_fallthru
          _
        %p462 = scmp.lt.s32.totalorder %s34, 1
        %s463 = scalar_select %p462, %s34, 1
        %s464 = smul.addr %s463, 8
        %s465 = scalar_lea.vmem %s0, %s464
        %p466 = pneg %p63
        %p467 = pneg %p60
        %p468 = pneg %p84
        %p469 = pneg %p81
        %p470 = pneg %p105
        %p471 = pneg %p102
        %p472 = pneg %p126
        %p473 = pneg %p123
        %p474 = pneg %p147
        %p475 = pneg %p144
        %p476 = pneg %p168
        %p477 = pneg %p165
        %p478 = pneg %p189
        %p479 = pneg %p186
        %p480 = pneg %p210
        %p481 = pneg %p207
        %p482 = pneg %p231
        %p483 = pneg %p228
        %p484 = pneg %p252
        %p485 = pneg %p249
        %p486 = pneg %p273
        %p487 = pneg %p270
        %p488 = pneg %p294
        %p489 = pneg %p291
        %p490 = pneg %p315
        %p491 = pneg %p312
        %p492 = pneg %p343
        %p493 = pneg %p340
        %s494 = sand.u32 %s330, 1
        %s495 = scalar_lea.sflag [#allocation8], %s494
        %s496 = sand.u32 %s330, 1
        %s497 = smul.addr %s496, 8
        %s498 = scalar_lea.vmem [#allocation14], %s497
        %p499 = scmp.lt.s32.totalorder %s34, 1
        %s500 = scalar_select %p499, %s34, 1
        %s501 = smul.addr %s500, 8
        %s502 = scalar_lea.vmem %s0, %s501
        %p504 = scmp.eq.s32.totalorder %s35, 0
        // Predicated region
        $region89: #{tpu_custom_call.1} parent=71 // pred_check
          %p505 = pneg %p504
        $region90: #{tpu_custom_call.1} parent=71 // pred_check_branch
          %507 = sbr.rel (%p505) target = $region92
        $region91: #{tpu_custom_call.1} parent=71 // pred_region
          %v508 = vld [vmem:[%s502] sm:$0xff]
          %v509 = vld [vmem:[%s1] sm:$0x1]
          %v510 = vld [vmem:[%s2] sm:$0x1]
          %vm511 = vcmask 261120
          %v512 = vsel %vm511, %v508, 0.0
          %513 = vadd.xlane.f32.xlu0 %v512
          %v514 = vpop.xlane.xlu0 %513
          %v515 = vrcp.pop 32.0
          %v516 = vmul.f32 %v514, %v515
          %v517 = vsub.f32 %v508, %v516
          %v518 = vmul.f32 %v517, %v517
          %v519 = vsel %vm511, %v518, 0.0
          %520 = vadd.xlane.f32.xlu0 %v519
          %v521 = vpop.xlane.xlu0 %520
          %v522 = vmul.f32 %v521, %v515
          %v523 = vadd.f32 %v522, 1e-06
          %v524 = vrsqrt.pop %v523
          %v525 = vmul.f32 %v517, %v524
          %v527 = vlaneseq
          %v528 = vshrl.u32 %v527, 7
          %v529 = vsub.s32 0, %v528
          %v530 = vrot.slane %v509, %v529
          %v532 = vmul.f32 %v525, %v530
          %v534 = vlaneseq
          %v535 = vshrl.u32 %v534, 7
          %v536 = vsub.s32 0, %v535
          %v537 = vrot.slane %v510, %v536
          %v539 = vadd.f32 %v532, %v537
          %v540 = vpack.c.bf16 %v539, %v539
          %v541 = vld [vmem:[%s3] sm:$0xf]
          %v542 = vld [vmem:[%s3 + $0x4] sm:$0xf]
          %v543 = vld [vmem:[%s3 + $0x8] sm:$0xf]
          %v544 = vld [vmem:[%s3 + $0xc] sm:$0xf]
          %v545 = vld [vmem:[%s4] sm:$0x1]
          %v547 = vlaneseq
          %v548 = vshrl.u32 %v547, 7
          %v549 = vsub.s32 0, %v548
          %v550 = vrot.slane %v545, %v549
          %v556 = vunpack.c.l.b16 %v541
          %v557 = vunpack.c.l.b16 %v542
          %v558 = vunpack.c.l.b16 %v543
          %v559 = vunpack.c.l.b16 %v544
          %v560 = vpack.c.b16 %v557, %v556
          %v561 = vpack.c.b16 %v559, %v558
          %v565 = vsel %vm511, %v540, 0
          %567 = vmatprep.subr.bf16.mxu0 0
          %568 = vmatpush1.bf16.msra.mxu0 0
          %569 = vmatprep.subr.bf16.mxu0 0
          %570 = vmatpush1.bf16.msra.mxu0 0
          %571 = vmatprep.subr.bf16.mxu0 0
          %572 = vmatpush1.bf16.msra.mxu0 0
          %573 = vmatprep.subr.bf16.mxu0 0
          %574 = vmatpush1.bf16.msra.mxu0 0
          %575 = vmatprep.subr.bf16.mxu0 0
          %576 = vmatpush1.bf16.msra.mxu0 0
          %577 = vmatprep.subr.bf16.mxu0 0
          %578 = vmatpush1.bf16.msra.mxu0 0
          %579 = vmatprep.subr.bf16.mxu0 0
          %580 = vmatpush1.bf16.msra.mxu0 %v561
          %581 = vmatprep.subr.bf16.mxu0 0
          %582 = vmatpush1.bf16.msra.mxu0 %v560
          %583 = vmatprep.subr.bf16.mxu0 0
          %584 = vmatpush2.bf16.msra.mxu0 0
          %585 = vmatprep.subr.bf16.mxu0 0
          %586 = vmatpush2.bf16.msra.mxu0 0
          %587 = vmatprep.subr.bf16.mxu0 0
          %588 = vmatpush2.bf16.msra.mxu0 0
          %589 = vmatprep.subr.bf16.mxu0 0
          %590 = vmatpush2.bf16.msra.mxu0 0
          %591 = vmatprep.subr.bf16.mxu0 0
          %592 = vmatpush2.bf16.msra.mxu0 0
          %593 = vmatprep.subr.bf16.mxu0 0
          %594 = vmatpush2.bf16.msra.mxu0 0
          %595 = vmatprep.subr.bf16.mxu0 0
          %596 = vmatpush2.bf16.msra.mxu0 0
          %597 = vmatprep.subr.bf16.mxu0 0
          %598 = vmatpush2.bf16.msra.mxu0 0
          %599 = vmatprep.mubr.bf16.mxu0 0
          %600 = vmatmul.mubr.bf16.gmra.mxu0 %v565
          %v601 = vpop.f32.mrf.mxu0
          %v602 = vadd.f32 %v550, %v601
          %v603 = vpop.f32.mrf.mxu0
          %v604 = vpop.f32.mrf.mxu0
          %v605 = vpop.f32.mrf.mxu0
          %606 = vdwg.mxu0
          %v607 = vmul.f32 %v602, 0.35355338
          %v608 = vpack.c.bf16 %v607, %v607
          %vm609 = vcmask 257024
          %610 = vst.msk [vmem:[#allocation2] sm:$0xf] %vm609, %v608
          %v611 = vpack.c.bf16 %v602, %v602
          %v613 = vunpack.c.l.b16 %v611
          %v614 = vpack.c.b16 %v613, %v613
          %615 = vrot.lane.b32.xlu0 %v614, 96
          %v616 = vpop.permute.xlu0 %615
          %618 = vst.msk [vmem:[#allocation3] sm:$0xf] %vm609, %v616
          %619 = vrot.lane.b32.xlu0 %v614, 64
          %v620 = vpop.permute.xlu0 %619
          %622 = vst.msk [vmem:[#allocation4] sm:$0xf] %vm609, %v620
        $region92: #{tpu_custom_call.1} parent=71 // pred_fallthru
          _
        %v623 = vld [vmem:[%s502] sm:$0xff]
        %v624 = vld [vmem:[#allocation2] sm:$0xf]
        %v625 = vld [vmem:[#allocation3] sm:$0xf]
        %vm626 = vcmask 64512
        %v628 = vsel %vm626, %v624, 0
        %v631 = vsel %vm626, %v625, 0
        %633 = vmatprep.subr.bf16.mxu0 0
        %634 = vmatpush1.bf16.xpose.msra.mxu0 0
        %635 = vmatprep.subr.bf16.mxu0 0
        %636 = vmatpush1.bf16.xpose.msra.mxu0 0
        %637 = vmatprep.subr.bf16.mxu0 0
        %638 = vmatpush1.bf16.xpose.msra.mxu0 0
        %639 = vmatprep.subr.bf16.mxu0 0
        %640 = vmatpush1.bf16.xpose.msra.mxu0 0
        %641 = vmatprep.subr.bf16.mxu0 0
        %642 = vmatpush1.bf16.xpose.msra.mxu0 0
        %643 = vmatprep.subr.bf16.mxu0 0
        %644 = vmatpush1.bf16.xpose.msra.mxu0 0
        %645 = vmatprep.subr.bf16.mxu0 0
        %646 = vmatpush1.bf16.xpose.msra.mxu0 0
        %647 = vmatprep.subr.bf16.mxu0 0
        %648 = vmatpush1.bf16.xpose.msra.mxu0 %v631
        %649 = vmatprep.subr.bf16.mxu0 0
        %650 = vmatpush2.bf16.xpose.msra.mxu0 0
        %651 = vmatprep.subr.bf16.mxu0 0
        %652 = vmatpush2.bf16.xpose.msra.mxu0 0
        %653 = vmatprep.subr.bf16.mxu0 0
        %654 = vmatpush2.bf16.xpose.msra.mxu0 0
        %655 = vmatprep.subr.bf16.mxu0 0
        %656 = vmatpush2.bf16.xpose.msra.mxu0 0
        %657 = vmatprep.subr.bf16.mxu0 0
        %658 = vmatpush2.bf16.xpose.msra.mxu0 0
        %659 = vmatprep.subr.bf16.mxu0 0
        %660 = vmatpush2.bf16.xpose.msra.mxu0 0
        %661 = vmatprep.subr.bf16.mxu0 0
        %662 = vmatpush2.bf16.xpose.msra.mxu0 0
        %663 = vmatprep.subr.bf16.mxu0 0
        %664 = vmatpush2.bf16.xpose.msra.mxu0 0
        %665 = vmatprep.mubr.bf16.mxu0 0
        %666 = vmatmul.mubr.bf16.gmra.mxu0 %v628
        %v667 = vpop.f32.mrf.mxu0
        %v668 = vadd.f32 0.0, %v667
        %v669 = vpop.f32.mrf.mxu0
        %v670 = vpop.f32.mrf.mxu0
        %v671 = vpop.f32.mrf.mxu0
        %672 = vdwg.mxu0
        %v673 = vsel %vm626, %v668, -inf
        %674 = vmax.xlane.f32.xlu0 %v673
        %v675 = vpop.xlane.xlu0 %674
        %v676 = vsub.f32 %v668, %v675
        %v677 = vmul.f32 %v676, 1.442695
        %v678 = vpow.pop %v677
        %v679 = vsel %vm626, %v678, 0.0
        %680 = vadd.xlane.f32.xlu0 %v679
        %v681 = vpop.xlane.xlu0 %680
        %v682 = vrcp.pop %v681
        %v683 = vmul.f32 %v678, %v682
        %v684 = vpack.c.bf16 %v683, %v683
        %v685 = vld [vmem:[#allocation4] sm:$0xf]
        %v687 = vsel %vm626, %v684, 0
        %vm689 = vcmask 1043456
        %v691 = vsel %vm689, %v685, 0
        %693 = vmatprep.subr.bf16.mxu0 0
        %694 = vmatpush1.bf16.msra.mxu0 0
        %695 = vmatprep.subr.bf16.mxu0 0
        %696 = vmatpush1.bf16.msra.mxu0 0
        %697 = vmatprep.subr.bf16.mxu0 0
        %698 = vmatpush1.bf16.msra.mxu0 0
        %699 = vmatprep.subr.bf16.mxu0 0
        %700 = vmatpush1.bf16.msra.mxu0 0
        %701 = vmatprep.subr.bf16.mxu0 0
        %702 = vmatpush1.bf16.msra.mxu0 0
        %703 = vmatprep.subr.bf16.mxu0 0
        %704 = vmatpush1.bf16.msra.mxu0 0
        %705 = vmatprep.subr.bf16.mxu0 0
        %706 = vmatpush1.bf16.msra.mxu0 0
        %707 = vmatprep.subr.bf16.mxu0 0
        %708 = vmatpush1.bf16.msra.mxu0 %v691
        %709 = vmatprep.subr.bf16.mxu0 0
        %710 = vmatpush2.bf16.msra.mxu0 0
        %711 = vmatprep.subr.bf16.mxu0 0
        %712 = vmatpush2.bf16.msra.mxu0 0
        %713 = vmatprep.subr.bf16.mxu0 0
        %714 = vmatpush2.bf16.msra.mxu0 0
        %715 = vmatprep.subr.bf16.mxu0 0
        %716 = vmatpush2.bf16.msra.mxu0 0
        %717 = vmatprep.subr.bf16.mxu0 0
        %718 = vmatpush2.bf16.msra.mxu0 0
        %719 = vmatprep.subr.bf16.mxu0 0
        %720 = vmatpush2.bf16.msra.mxu0 0
        %721 = vmatprep.subr.bf16.mxu0 0
        %722 = vmatpush2.bf16.msra.mxu0 0
        %723 = vmatprep.subr.bf16.mxu0 0
        %724 = vmatpush2.bf16.msra.mxu0 0
        %725 = vmatprep.mubr.bf16.mxu0 0
        %726 = vmatmul.mubr.bf16.gmra.mxu0 %v687
        %v727 = vpop.f32.mrf.mxu0
        %v728 = vadd.f32 0.0, %v727
        %v729 = vpop.f32.mrf.mxu0
        %v730 = vpop.f32.mrf.mxu0
        %v731 = vpop.f32.mrf.mxu0
        %732 = vdwg.mxu0
        %733 = vst.msk [vmem:[#allocation5] sm:$0xff] %vm626, %v728
        %v734 = vld [vmem:[#allocation3] sm:$0xf]
        %v736 = vunpack.c.l.b16 %v624
        %v737 = vpack.c.b16 %v736, %v736
        %738 = vrot.lane.b32.xlu0 %v737, 120
        %v739 = vpop.permute.xlu0 %738
        %v741 = vunpack.c.l.b16 %v734
        %v742 = vpack.c.b16 %v741, %v741
        %743 = vrot.lane.b32.xlu0 %v742, 120
        %v744 = vpop.permute.xlu0 %743
        %v746 = vsel %vm626, %v739, 0
        %v749 = vsel %vm626, %v744, 0
        %751 = vmatprep.subr.bf16.mxu0 0
        %752 = vmatpush1.bf16.xpose.msra.mxu0 0
        %753 = vmatprep.subr.bf16.mxu0 0
        %754 = vmatpush1.bf16.xpose.msra.mxu0 0
        %755 = vmatprep.subr.bf16.mxu0 0
        %756 = vmatpush1.bf16.xpose.msra.mxu0 0
        %757 = vmatprep.subr.bf16.mxu0 0
        %758 = vmatpush1.bf16.xpose.msra.mxu0 0
        %759 = vmatprep.subr.bf16.mxu0 0
        %760 = vmatpush1.bf16.xpose.msra.mxu0 0
        %761 = vmatprep.subr.bf16.mxu0 0
        %762 = vmatpush1.bf16.xpose.msra.mxu0 0
        %763 = vmatprep.subr.bf16.mxu0 0
        %764 = vmatpush1.bf16.xpose.msra.mxu0 0
        %765 = vmatprep.subr.bf16.mxu0 0
        %766 = vmatpush1.bf16.xpose.msra.mxu0 %v749
        %767 = vmatprep.subr.bf16.mxu0 0
        %768 = vmatpush2.bf16.xpose.msra.mxu0 0
        %769 = vmatprep.subr.bf16.mxu0 0
        %770 = vmatpush2.bf16.xpose.msra.mxu0 0
        %771 = vmatprep.subr.bf16.mxu0 0
        %772 = vmatpush2.bf16.xpose.msra.mxu0 0
        %773 = vmatprep.subr.bf16.mxu0 0
        %774 = vmatpush2.bf16.xpose.msra.mxu0 0
        %775 = vmatprep.subr.bf16.mxu0 0
        %776 = vmatpush2.bf16.xpose.msra.mxu0 0
        %777 = vmatprep.subr.bf16.mxu0 0
        %778 = vmatpush2.bf16.xpose.msra.mxu0 0
        %779 = vmatprep.subr.bf16.mxu0 0
        %780 = vmatpush2.bf16.xpose.msra.mxu0 0
        %781 = vmatprep.subr.bf16.mxu0 0
        %782 = vmatpush2.bf16.xpose.msra.mxu0 0
        %783 = vmatprep.mubr.bf16.mxu0 0
        %784 = vmatmul.mubr.bf16.gmra.mxu0 %v746
        %v785 = vpop.f32.mrf.mxu0
        %v786 = vadd.f32 0.0, %v785
        %v787 = vpop.f32.mrf.mxu0
        %v788 = vpop.f32.mrf.mxu0
        %v789 = vpop.f32.mrf.mxu0
        %790 = vdwg.mxu0
        %v791 = vsel %vm626, %v786, -inf
        %792 = vmax.xlane.f32.xlu0 %v791
        %v793 = vpop.xlane.xlu0 %792
        %v794 = vsub.f32 %v786, %v793
        %v795 = vmul.f32 %v794, 1.442695
        %v796 = vpow.pop %v795
        %v797 = vsel %vm626, %v796, 0.0
        %798 = vadd.xlane.f32.xlu0 %v797
        %v799 = vpop.xlane.xlu0 %798
        %v800 = vrcp.pop %v799
        %v801 = vmul.f32 %v796, %v800
        %v802 = vpack.c.bf16 %v801, %v801
        %v803 = vld [vmem:[#allocation4] sm:$0xf]
        %v805 = vunpack.c.l.b16 %v803
        %v806 = vpack.c.b16 %v805, %v805
        %807 = vrot.lane.b32.xlu0 %v806, 120
        %v808 = vpop.permute.xlu0 %807
        %v810 = vsel %vm626, %v802, 0
        %v813 = vsel %vm689, %v808, 0
        %815 = vmatprep.subr.bf16.mxu0 0
        %816 = vmatpush1.bf16.msra.mxu0 0
        %817 = vmatprep.subr.bf16.mxu0 0
        %818 = vmatpush1.bf16.msra.mxu0 0
        %819 = vmatprep.subr.bf16.mxu0 0
        %820 = vmatpush1.bf16.msra.mxu0 0
        %821 = vmatprep.subr.bf16.mxu0 0
        %822 = vmatpush1.bf16.msra.mxu0 0
        %823 = vmatprep.subr.bf16.mxu0 0
        %824 = vmatpush1.bf16.msra.mxu0 0
        %825 = vmatprep.subr.bf16.mxu0 0
        %826 = vmatpush1.bf16.msra.mxu0 0
        %827 = vmatprep.subr.bf16.mxu0 0
        %828 = vmatpush1.bf16.msra.mxu0 0
        %829 = vmatprep.subr.bf16.mxu0 0
        %830 = vmatpush1.bf16.msra.mxu0 %v813
        %831 = vmatprep.subr.bf16.mxu0 0
        %832 = vmatpush2.bf16.msra.mxu0 0
        %833 = vmatprep.subr.bf16.mxu0 0
        %834 = vmatpush2.bf16.msra.mxu0 0
        %835 = vmatprep.subr.bf16.mxu0 0
        %836 = vmatpush2.bf16.msra.mxu0 0
        %837 = vmatprep.subr.bf16.mxu0 0
        %838 = vmatpush2.bf16.msra.mxu0 0
        %839 = vmatprep.subr.bf16.mxu0 0
        %840 = vmatpush2.bf16.msra.mxu0 0
        %841 = vmatprep.subr.bf16.mxu0 0
        %842 = vmatpush2.bf16.msra.mxu0 0
        %843 = vmatprep.subr.bf16.mxu0 0
        %844 = vmatpush2.bf16.msra.mxu0 0
        %845 = vmatprep.subr.bf16.mxu0 0
        %846 = vmatpush2.bf16.msra.mxu0 0
        %847 = vmatprep.mubr.bf16.mxu0 0
        %848 = vmatmul.mubr.bf16.gmra.mxu0 %v810
        %v849 = vpop.f32.mrf.mxu0
        %v850 = vadd.f32 0.0, %v849
        %v851 = vpop.f32.mrf.mxu0
        %v852 = vpop.f32.mrf.mxu0
        %v853 = vpop.f32.mrf.mxu0
        %854 = vdwg.mxu0
        %856 = vrot.lane.b32.xlu0 %v850, 8
        %v857 = vpop.permute.xlu0 %856
        %vm859 = vcmask 130112
        %860 = vst.msk [vmem:[#allocation5] sm:$0xff] %vm859, %v857
        %v861 = vld [vmem:[#allocation3] sm:$0xf]
        %862 = vrot.lane.b32.xlu0 %v737, 112
        %v863 = vpop.permute.xlu0 %862
        %v865 = vunpack.c.l.b16 %v861
        %v866 = vpack.c.b16 %v865, %v865
        %867 = vrot.lane.b32.xlu0 %v866, 112
        %v868 = vpop.permute.xlu0 %867
        %v870 = vsel %vm626, %v863, 0
        %v873 = vsel %vm626, %v868, 0
        %875 = vmatprep.subr.bf16.mxu0 0
        %876 = vmatpush1.bf16.xpose.msra.mxu0 0
        %877 = vmatprep.subr.bf16.mxu0 0
        %878 = vmatpush1.bf16.xpose.msra.mxu0 0
        %879 = vmatprep.subr.bf16.mxu0 0
        %880 = vmatpush1.bf16.xpose.msra.mxu0 0
        %881 = vmatprep.subr.bf16.mxu0 0
        %882 = vmatpush1.bf16.xpose.msra.mxu0 0
        %883 = vmatprep.subr.bf16.mxu0 0
        %884 = vmatpush1.bf16.xpose.msra.mxu0 0
        %885 = vmatprep.subr.bf16.mxu0 0
        %886 = vmatpush1.bf16.xpose.msra.mxu0 0
        %887 = vmatprep.subr.bf16.mxu0 0
        %888 = vmatpush1.bf16.xpose.msra.mxu0 0
        %889 = vmatprep.subr.bf16.mxu0 0
        %890 = vmatpush1.bf16.xpose.msra.mxu0 %v873
        %891 = vmatprep.subr.bf16.mxu0 0
        %892 = vmatpush2.bf16.xpose.msra.mxu0 0
        %893 = vmatprep.subr.bf16.mxu0 0
        %894 = vmatpush2.bf16.xpose.msra.mxu0 0
        %895 = vmatprep.subr.bf16.mxu0 0
        %896 = vmatpush2.bf16.xpose.msra.mxu0 0
        %897 = vmatprep.subr.bf16.mxu0 0
        %898 = vmatpush2.bf16.xpose.msra.mxu0 0
        %899 = vmatprep.subr.bf16.mxu0 0
        %900 = vmatpush2.bf16.xpose.msra.mxu0 0
        %901 = vmatprep.subr.bf16.mxu0 0
        %902 = vmatpush2.bf16.xpose.msra.mxu0 0
        %903 = vmatprep.subr.bf16.mxu0 0
        %904 = vmatpush2.bf16.xpose.msra.mxu0 0
        %905 = vmatprep.subr.bf16.mxu0 0
        %906 = vmatpush2.bf16.xpose.msra.mxu0 0
        %907 = vmatprep.mubr.bf16.mxu0 0
        %908 = vmatmul.mubr.bf16.gmra.mxu0 %v870
        %v909 = vpop.f32.mrf.mxu0
        %v910 = vadd.f32 0.0, %v909
        %v911 = vpop.f32.mrf.mxu0
        %v912 = vpop.f32.mrf.mxu0
        %v913 = vpop.f32.mrf.mxu0
        %914 = vdwg.mxu0
        %v915 = vsel %vm626, %v910, -inf
        %916 = vmax.xlane.f32.xlu0 %v915
        %v917 = vpop.xlane.xlu0 %916
        %v918 = vsub.f32 %v910, %v917
        %v919 = vmul.f32 %v918, 1.442695
        %v920 = vpow.pop %v919
        %v921 = vsel %vm626, %v920, 0.0
        %922 = vadd.xlane.f32.xlu0 %v921
        %v923 = vpop.xlane.xlu0 %922
        %v924 = vrcp.pop %v923
        %v925 = vmul.f32 %v920, %v924
        %v926 = vpack.c.bf16 %v925, %v925
        %v927 = vld [vmem:[#allocation4] sm:$0xf]
        %v929 = vunpack.c.l.b16 %v927
        %v930 = vpack.c.b16 %v929, %v929
        %931 = vrot.lane.b32.xlu0 %v930, 112
        %v932 = vpop.permute.xlu0 %931
        %v934 = vsel %vm626, %v926, 0
        %v937 = vsel %vm689, %v932, 0
        %939 = vmatprep.subr.bf16.mxu0 0
        %940 = vmatpush1.bf16.msra.mxu0 0
        %941 = vmatprep.subr.bf16.mxu0 0
        %942 = vmatpush1.bf16.msra.mxu0 0
        %943 = vmatprep.subr.bf16.mxu0 0
        %944 = vmatpush1.bf16.msra.mxu0 0
        %945 = vmatprep.subr.bf16.mxu0 0
        %946 = vmatpush1.bf16.msra.mxu0 0
        %947 = vmatprep.subr.bf16.mxu0 0
        %948 = vmatpush1.bf16.msra.mxu0 0
        %949 = vmatprep.subr.bf16.mxu0 0
        %950 = vmatpush1.bf16.msra.mxu0 0
        %951 = vmatprep.subr.bf16.mxu0 0
        %952 = vmatpush1.bf16.msra.mxu0 0
        %953 = vmatprep.subr.bf16.mxu0 0
        %954 = vmatpush1.bf16.msra.mxu0 %v937
        %955 = vmatprep.subr.bf16.mxu0 0
        %956 = vmatpush2.bf16.msra.mxu0 0
        %957 = vmatprep.subr.bf16.mxu0 0
        %958 = vmatpush2.bf16.msra.mxu0 0
        %959 = vmatprep.subr.bf16.mxu0 0
        %960 = vmatpush2.bf16.msra.mxu0 0
        %961 = vmatprep.subr.bf16.mxu0 0
        %962 = vmatpush2.bf16.msra.mxu0 0
        %963 = vmatprep.subr.bf16.mxu0 0
        %964 = vmatpush2.bf16.msra.mxu0 0
        %965 = vmatprep.subr.bf16.mxu0 0
        %966 = vmatpush2.bf16.msra.mxu0 0
        %967 = vmatprep.subr.bf16.mxu0 0
        %968 = vmatpush2.bf16.msra.mxu0 0
        %969 = vmatprep.subr.bf16.mxu0 0
        %970 = vmatpush2.bf16.msra.mxu0 0
        %971 = vmatprep.mubr.bf16.mxu0 0
        %972 = vmatmul.mubr.bf16.gmra.mxu0 %v934
        %v973 = vpop.f32.mrf.mxu0
        %v974 = vadd.f32 0.0, %v973
        %v975 = vpop.f32.mrf.mxu0
        %v976 = vpop.f32.mrf.mxu0
        %v977 = vpop.f32.mrf.mxu0
        %978 = vdwg.mxu0
        %980 = vrot.lane.b32.xlu0 %v974, 16
        %v981 = vpop.permute.xlu0 %980
        %vm983 = vcmask 195712
        %984 = vst.msk [vmem:[#allocation5] sm:$0xff] %vm983, %v981
        %v985 = vld [vmem:[#allocation3] sm:$0xf]
        %986 = vrot.lane.b32.xlu0 %v737, 104
        %v987 = vpop.permute.xlu0 %986
        %v989 = vunpack.c.l.b16 %v985
        %v990 = vpack.c.b16 %v989, %v989
        %991 = vrot.lane.b32.xlu0 %v990, 104
        %v992 = vpop.permute.xlu0 %991
        %v994 = vsel %vm626, %v987, 0
        %v997 = vsel %vm626, %v992, 0
        %999 = vmatprep.subr.bf16.mxu0 0
        %1000 = vmatpush1.bf16.xpose.msra.mxu0 0
        %1001 = vmatprep.subr.bf16.mxu0 0
        %1002 = vmatpush1.bf16.xpose.msra.mxu0 0
        %1003 = vmatprep.subr.bf16.mxu0 0
        %1004 = vmatpush1.bf16.xpose.msra.mxu0 0
        %1005 = vmatprep.subr.bf16.mxu0 0
        %1006 = vmatpush1.bf16.xpose.msra.mxu0 0
        %1007 = vmatprep.subr.bf16.mxu0 0
        %1008 = vmatpush1.bf16.xpose.msra.mxu0 0
        %1009 = vmatprep.subr.bf16.mxu0 0
        %1010 = vmatpush1.bf16.xpose.msra.mxu0 0
        %1011 = vmatprep.subr.bf16.mxu0 0
        %1012 = vmatpush1.bf16.xpose.msra.mxu0 0
        %1013 = vmatprep.subr.bf16.mxu0 0
        %1014 = vmatpush1.bf16.xpose.msra.mxu0 %v997
        %1015 = vmatprep.subr.bf16.mxu0 0
        %1016 = vmatpush2.bf16.xpose.msra.mxu0 0
        %1017 = vmatprep.subr.bf16.mxu0 0
        %1018 = vmatpush2.bf16.xpose.msra.mxu0 0
        %1019 = vmatprep.subr.bf16.mxu0 0
        %1020 = vmatpush2.bf16.xpose.msra.mxu0 0
        %1021 = vmatprep.subr.bf16.mxu0 0
        %1022 = vmatpush2.bf16.xpose.msra.mxu0 0
        %1023 = vmatprep.subr.bf16.mxu0 0
        %1024 = vmatpush2.bf16.xpose.msra.mxu0 0
        %1025 = vmatprep.subr.bf16.mxu0 0
        %1026 = vmatpush2.bf16.xpose.msra.mxu0 0
        %1027 = vmatprep.subr.bf16.mxu0 0
        %1028 = vmatpush2.bf16.xpose.msra.mxu0 0
        %1029 = vmatprep.subr.bf16.mxu0 0
        %1030 = vmatpush2.bf16.xpose.msra.mxu0 0
        %1031 = vmatprep.mubr.bf16.mxu0 0
        %1032 = vmatmul.mubr.bf16.gmra.mxu0 %v994
        %v1033 = vpop.f32.mrf.mxu0
        %v1034 = vadd.f32 0.0, %v1033
        %v1035 = vpop.f32.mrf.mxu0
        %v1036 = vpop.f32.mrf.mxu0
        %v1037 = vpop.f32.mrf.mxu0
        %1038 = vdwg.mxu0
        %v1039 = vsel %vm626, %v1034, -inf
        %1040 = vmax.xlane.f32.xlu0 %v1039
        %v1041 = vpop.xlane.xlu0 %1040
        %v1042 = vsub.f32 %v1034, %v1041
        %v1043 = vmul.f32 %v1042, 1.442695
        %v1044 = vpow.pop %v1043
        %v1045 = vsel %vm626, %v1044, 0.0
        %1046 = vadd.xlane.f32.xlu0 %v1045
        %v1047 = vpop.xlane.xlu0 %1046
        %v1048 = vrcp.pop %v1047
        %v1049 = vmul.f32 %v1044, %v1048
        %v1050 = vpack.c.bf16 %v1049, %v1049
        %v1051 = vld [vmem:[#allocation4] sm:$0xf]
        %v1053 = vunpack.c.l.b16 %v1051
        %v1054 = vpack.c.b16 %v1053, %v1053
        %1055 = vrot.lane.b32.xlu0 %v1054, 104
        %v1056 = vpop.permute.xlu0 %1055
        %v1058 = vsel %vm626, %v1050, 0
        %v1061 = vsel %vm689, %v1056, 0
        %1063 = vmatprep.subr.bf16.mxu0 0
        %1064 = vmatpush1.bf16.msra.mxu0 0
        %1065 = vmatprep.subr.bf16.mxu0 0
        %1066 = vmatpush1.bf16.msra.mxu0 0
        %1067 = vmatprep.subr.bf16.mxu0 0
        %1068 = vmatpush1.bf16.msra.mxu0 0
        %1069 = vmatprep.subr.bf16.mxu0 0
        %1070 = vmatpush1.bf16.msra.mxu0 0
        %1071 = vmatprep.subr.bf16.mxu0 0
        %1072 = vmatpush1.bf16.msra.mxu0 0
        %1073 = vmatprep.subr.bf16.mxu0 0
        %1074 = vmatpush1.bf16.msra.mxu0 0
        %1075 = vmatprep.subr.bf16.mxu0 0
        %1076 = vmatpush1.bf16.msra.mxu0 0
        %1077 = vmatprep.subr.bf16.mxu0 0
        %1078 = vmatpush1.bf16.msra.mxu0 %v1061
        %1079 = vmatprep.subr.bf16.mxu0 0
        %1080 = vmatpush2.bf16.msra.mxu0 0
        %1081 = vmatprep.subr.bf16.mxu0 0
        %1082 = vmatpush2.bf16.msra.mxu0 0
        %1083 = vmatprep.subr.bf16.mxu0 0
        %1084 = vmatpush2.bf16.msra.mxu0 0
        %1085 = vmatprep.subr.bf16.mxu0 0
        %1086 = vmatpush2.bf16.msra.mxu0 0
        %1087 = vmatprep.subr.bf16.mxu0 0
        %1088 = vmatpush2.bf16.msra.mxu0 0
        %1089 = vmatprep.subr.bf16.mxu0 0
        %1090 = vmatpush2.bf16.msra.mxu0 0
        %1091 = vmatprep.subr.bf16.mxu0 0
        %1092 = vmatpush2.bf16.msra.mxu0 0
        %1093 = vmatprep.subr.bf16.mxu0 0
        %1094 = vmatpush2.bf16.msra.mxu0 0
        %1095 = vmatprep.mubr.bf16.mxu0 0
        %1096 = vmatmul.mubr.bf16.gmra.mxu0 %v1058
        %v1097 = vpop.f32.mrf.mxu0
        %v1098 = vadd.f32 0.0, %v1097
        %v1099 = vpop.f32.mrf.mxu0
        %v1100 = vpop.f32.mrf.mxu0
        %v1101 = vpop.f32.mrf.mxu0
        %1102 = vdwg.mxu0
        %1104 = vrot.lane.b32.xlu0 %v1098, 24
        %v1105 = vpop.permute.xlu0 %1104
        %vm1107 = vcmask 261312
        %1108 = vst.msk [vmem:[#allocation5] sm:$0xff] %vm1107, %v1105
        %v1109 = vld [vmem:[#allocation5] sm:$0xff]
        %v1110 = vpack.c.bf16 %v1109, %v1109
        %v1111 = vld [vmem:[%s5] sm:$0xf]
        %v1112 = vld [vmem:[%s5 + $0x4] sm:$0xf]
        %v1113 = vld [vmem:[%s5 + $0x8] sm:$0xf]
        %v1114 = vld [vmem:[%s5 + $0xc] sm:$0xf]
        %v1119 = vunpack.c.l.b16 %v1111
        %v1120 = vunpack.c.l.b16 %v1112
        %v1121 = vunpack.c.l.b16 %v1113
        %v1122 = vunpack.c.l.b16 %v1114
        %v1123 = vpack.c.b16 %v1120, %v1119
        %v1124 = vpack.c.b16 %v1122, %v1121
        %vm1127 = vcmask 261120
        %v1129 = vsel %vm1127, %v1110, 0
        %1131 = vmatprep.subr.bf16.mxu0 0
        %1132 = vmatpush1.bf16.msra.mxu0 0
        %1133 = vmatprep.subr.bf16.mxu0 0
        %1134 = vmatpush1.bf16.msra.mxu0 0
        %1135 = vmatprep.subr.bf16.mxu0 0
        %1136 = vmatpush1.bf16.msra.mxu0 0
        %1137 = vmatprep.subr.bf16.mxu0 0
        %1138 = vmatpush1.bf16.msra.mxu0 0
        %1139 = vmatprep.subr.bf16.mxu0 0
        %1140 = vmatpush1.bf16.msra.mxu0 0
        %1141 = vmatprep.subr.bf16.mxu0 0
        %1142 = vmatpush1.bf16.msra.mxu0 0
        %1143 = vmatprep.subr.bf16.mxu0 0
        %1144 = vmatpush1.bf16.msra.mxu0 %v1124
        %1145 = vmatprep.subr.bf16.mxu0 0
        %1146 = vmatpush1.bf16.msra.mxu0 %v1123
        %1147 = vmatprep.subr.bf16.mxu0 0
        %1148 = vmatpush2.bf16.msra.mxu0 0
        %1149 = vmatprep.subr.bf16.mxu0 0
        %1150 = vmatpush2.bf16.msra.mxu0 0
        %1151 = vmatprep.subr.bf16.mxu0 0
        %1152 = vmatpush2.bf16.msra.mxu0 0
        %1153 = vmatprep.subr.bf16.mxu0 0
        %1154 = vmatpush2.bf16.msra.mxu0 0
        %1155 = vmatprep.subr.bf16.mxu0 0
        %1156 = vmatpush2.bf16.msra.mxu0 0
        %1157 = vmatprep.subr.bf16.mxu0 0
        %1158 = vmatpush2.bf16.msra.mxu0 0
        %1159 = vmatprep.subr.bf16.mxu0 0
        %1160 = vmatpush2.bf16.msra.mxu0 0
        %1161 = vmatprep.subr.bf16.mxu0 0
        %1162 = vmatpush2.bf16.msra.mxu0 0
        %1163 = vmatprep.mubr.bf16.mxu0 0
        %1164 = vmatmul.mubr.bf16.gmra.mxu0 %v1129
        %v1165 = vpop.f32.mrf.mxu0
        %v1166 = vadd.f32 0.0, %v1165
        %v1167 = vpop.f32.mrf.mxu0
        %v1168 = vpop.f32.mrf.mxu0
        %v1169 = vpop.f32.mrf.mxu0
        %1170 = vdwg.mxu0
        %v1171 = vadd.f32 %v623, %v1166
        %v1172 = vld [vmem:[%s6] sm:$0x1]
        %v1174 = vlaneseq
        %v1175 = vshrl.u32 %v1174, 7
        %v1176 = vsub.s32 0, %v1175
        %v1177 = vrot.slane %v1172, %v1176
        %v1179 = vadd.f32 %v1171, %v1177
        %v1180 = vld [vmem:[#allocation6] sm:$0x1]
        %v1181 = vld [vmem:[#allocation9] sm:$0x1]
        %v1182 = vsel %vm1127, %v1179, 0.0
        %1183 = vadd.xlane.f32.xlu0 %v1182
        %v1184 = vpop.xlane.xlu0 %1183
        %v1185 = vrcp.pop 32.0
        %v1186 = vmul.f32 %v1184, %v1185
        %v1187 = vsub.f32 %v1179, %v1186
        %v1188 = vmul.f32 %v1187, %v1187
        %v1189 = vsel %vm1127, %v1188, 0.0
        %1190 = vadd.xlane.f32.xlu0 %v1189
        %v1191 = vpop.xlane.xlu0 %1190
        %v1192 = vmul.f32 %v1191, %v1185
        %v1193 = vadd.f32 %v1192, 1e-06
        %v1194 = vrsqrt.pop %v1193
        %v1195 = vmul.f32 %v1187, %v1194
        %v1197 = vlaneseq
        %v1198 = vshrl.u32 %v1197, 7
        %v1199 = vsub.s32 0, %v1198
        %v1200 = vrot.slane %v1180, %v1199
        %v1202 = vmul.f32 %v1195, %v1200
        %v1204 = vlaneseq
        %v1205 = vshrl.u32 %v1204, 7
        %v1206 = vsub.s32 0, %v1205
        %v1207 = vrot.slane %v1181, %v1206
        %v1209 = vadd.f32 %v1202, %v1207
        %v1210 = vpack.c.bf16 %v1209, %v1209
        %v1211 = vld [vmem:[%s12] sm:$0x1]
        %v1213 = vlaneseq
        %v1214 = vshrl.u32 %v1213, 7
        %v1215 = vsub.s32 0, %v1214
        %v1216 = vrot.slane %v1211, %v1215
        %v1218 = vadd.f32 %v1179, %v1216
        %v1219 = vld [vmem:[#allocation11] sm:$0xf]
        %v1220 = vld [vmem:[#allocation11 + $0x4] sm:$0xf]
        %v1221 = vld [vmem:[#allocation11 + $0x8] sm:$0xf]
        %v1222 = vld [vmem:[#allocation11 + $0xc] sm:$0xf]
        %v1223 = vld [vmem:[#allocation12] sm:$0x1]
        %v1225 = vlaneseq
        %v1226 = vshrl.u32 %v1225, 7
        %v1227 = vsub.s32 0, %v1226
        %v1228 = vrot.slane %v1223, %v1227
        %v1234 = vunpack.c.l.b16 %v1219
        %v1235 = vunpack.c.l.b16 %v1220
        %v1236 = vunpack.c.l.b16 %v1221
        %v1237 = vunpack.c.l.b16 %v1222
        %v1238 = vpack.c.b16 %v1235, %v1234
        %v1239 = vpack.c.b16 %v1237, %v1236
        %v1243 = vsel %vm1127, %v1210, 0
        %1245 = vmatprep.subr.bf16.mxu0 0
        %1246 = vmatpush1.bf16.msra.mxu0 0
        %1247 = vmatprep.subr.bf16.mxu0 0
        %1248 = vmatpush1.bf16.msra.mxu0 0
        %1249 = vmatprep.subr.bf16.mxu0 0
        %1250 = vmatpush1.bf16.msra.mxu0 0
        %1251 = vmatprep.subr.bf16.mxu0 0
        %1252 = vmatpush1.bf16.msra.mxu0 0
        %1253 = vmatprep.subr.bf16.mxu0 0
        %1254 = vmatpush1.bf16.msra.mxu0 0
        %1255 = vmatprep.subr.bf16.mxu0 0
        %1256 = vmatpush1.bf16.msra.mxu0 0
        %1257 = vmatprep.subr.bf16.mxu0 0
        %1258 = vmatpush1.bf16.msra.mxu0 %v1239
        %1259 = vmatprep.subr.bf16.mxu0 0
        %1260 = vmatpush1.bf16.msra.mxu0 %v1238
        %1261 = vmatprep.subr.bf16.mxu0 0
        %1262 = vmatpush2.bf16.msra.mxu0 0
        %1263 = vmatprep.subr.bf16.mxu0 0
        %1264 = vmatpush2.bf16.msra.mxu0 0
        %1265 = vmatprep.subr.bf16.mxu0 0
        %1266 = vmatpush2.bf16.msra.mxu0 0
        %1267 = vmatprep.subr.bf16.mxu0 0
        %1268 = vmatpush2.bf16.msra.mxu0 0
        %1269 = vmatprep.subr.bf16.mxu0 0
        %1270 = vmatpush2.bf16.msra.mxu0 0
        %1271 = vmatprep.subr.bf16.mxu0 0
        %1272 = vmatpush2.bf16.msra.mxu0 0
        %1273 = vmatprep.subr.bf16.mxu0 0
        %1274 = vmatpush2.bf16.msra.mxu0 0
        %1275 = vmatprep.subr.bf16.mxu0 0
        %1276 = vmatpush2.bf16.msra.mxu0 0
        %1277 = vmatprep.mubr.bf16.mxu0 0
        %1278 = vmatmul.mubr.bf16.gmra.mxu0 %v1243
        %v1279 = vpop.f32.mrf.mxu0
        %v1280 = vadd.f32 %v1228, %v1279
        %v1281 = vpop.f32.mrf.mxu0
        %v1282 = vpop.f32.mrf.mxu0
        %v1283 = vpop.f32.mrf.mxu0
        %1284 = vdwg.mxu0
        %v1285 = vmul.f32 %v1280, 0.5
        %v1286 = vmul.f32 %v1280, 0.044715
        %v1287 = vmul.f32 %v1286, %v1280
        %v1288 = vmul.f32 %v1287, %v1280
        %v1289 = vadd.f32 %v1280, %v1288
        %v1290 = vmul.f32 %v1289, 0.7978846
        %v1291 = vtanh.pop %v1290
        %v1292 = vadd.f32 %v1291, 1.0
        %v1293 = vmul.f32 %v1285, %v1292
        %v1294 = vpack.c.bf16 %v1293, %v1293
        %v1295 = vld [vmem:[%s11] sm:$0xf]
        %v1296 = vld [vmem:[%s11 + $0x4] sm:$0xf]
        %v1297 = vld [vmem:[%s11 + $0x8] sm:$0xf]
        %v1298 = vld [vmem:[%s11 + $0xc] sm:$0xf]
        %v1299 = vld [vmem:[%s11 + $0x10] sm:$0xf]
        %v1300 = vld [vmem:[%s11 + $0x14] sm:$0xf]
        %v1301 = vld [vmem:[%s11 + $0x18] sm:$0xf]
        %v1302 = vld [vmem:[%s11 + $0x1c] sm:$0xf]
        %v1311 = vunpack.c.l.b16 %v1295
        %v1312 = vunpack.c.l.b16 %v1296
        %v1313 = vunpack.c.l.b16 %v1297
        %v1314 = vunpack.c.l.b16 %v1298
        %v1315 = vunpack.c.l.b16 %v1299
        %v1316 = vunpack.c.l.b16 %v1300
        %v1317 = vunpack.c.l.b16 %v1301
        %v1318 = vunpack.c.l.b16 %v1302
        %v1319 = vpack.c.b16 %v1312, %v1311
        %v1320 = vpack.c.b16 %v1314, %v1313
        %v1321 = vpack.c.b16 %v1316, %v1315
        %v1322 = vpack.c.b16 %v1318, %v1317
        %vm1327 = vcmask 523264
        %v1329 = vsel %vm1327, %v1294, 0
        %1331 = vmatprep.subr.bf16.mxu0 0
        %1332 = vmatpush1.bf16.msra.mxu0 0
        %1333 = vmatprep.subr.bf16.mxu0 0
        %1334 = vmatpush1.bf16.msra.mxu0 0
        %1335 = vmatprep.subr.bf16.mxu0 0
        %1336 = vmatpush1.bf16.msra.mxu0 0
        %1337 = vmatprep.subr.bf16.mxu0 0
        %1338 = vmatpush1.bf16.msra.mxu0 0
        %1339 = vmatprep.subr.bf16.mxu0 0
        %1340 = vmatpush1.bf16.msra.mxu0 %v1322
        %1341 = vmatprep.subr.bf16.mxu0 0
        %1342 = vmatpush1.bf16.msra.mxu0 %v1321
        %1343 = vmatprep.subr.bf16.mxu0 0
        %1344 = vmatpush1.bf16.msra.mxu0 %v1320
        %1345 = vmatprep.subr.bf16.mxu0 0
        %1346 = vmatpush1.bf16.msra.mxu0 %v1319
        %1347 = vmatprep.subr.bf16.mxu0 0
        %1348 = vmatpush2.bf16.msra.mxu0 0
        %1349 = vmatprep.subr.bf16.mxu0 0
        %1350 = vmatpush2.bf16.msra.mxu0 0
        %1351 = vmatprep.subr.bf16.mxu0 0
        %1352 = vmatpush2.bf16.msra.mxu0 0
        %1353 = vmatprep.subr.bf16.mxu0 0
        %1354 = vmatpush2.bf16.msra.mxu0 0
        %1355 = vmatprep.subr.bf16.mxu0 0
        %1356 = vmatpush2.bf16.msra.mxu0 0
        %1357 = vmatprep.subr.bf16.mxu0 0
        %1358 = vmatpush2.bf16.msra.mxu0 0
        %1359 = vmatprep.subr.bf16.mxu0 0
        %1360 = vmatpush2.bf16.msra.mxu0 0
        %1361 = vmatprep.subr.bf16.mxu0 0
        %1362 = vmatpush2.bf16.msra.mxu0 0
        %1363 = vmatprep.mubr.bf16.mxu0 0
        %1364 = vmatmul.mubr.bf16.gmra.mxu0 %v1329
        %v1365 = vpop.f32.mrf.mxu0
        %v1366 = vadd.f32 0.0, %v1365
        %v1367 = vpop.f32.mrf.mxu0
        %v1368 = vpop.f32.mrf.mxu0
        %v1369 = vpop.f32.mrf.mxu0
        %1370 = vdwg.mxu0
        %v1371 = vadd.f32 %v1218, %v1366
        %1372 = vst.msk [vmem:[%s498] sm:$0xff] %vm1127, %v1371
        %s1373 = sand.u32 %s330, 1
        %s1374 = scalar_lea.sflag [#allocation8], %s1373
        %s1375 = sand.u32 %s330, 1
        %s1376 = smul.addr %s1375, 8
        %s1377 = scalar_lea.vmem [#allocation14], %s1376
        // Predicated region
        $region93: #{tpu_custom_call.1} parent=71 // pred_check
          %p1378 = pneg %p340
        $region94: #{tpu_custom_call.1} parent=71 // pred_check_branch
          %1380 = sbr.rel (%p1378) target = $region96
        $region95: #{tpu_custom_call.1} parent=71 // pred_region
          %s1382 = ssub.s32 128, 128
          %1383 = vsyncadd %s1374, %s1382
          %s1384 = sadd.s32 %s35, %s34
          %s1385 = smul.addr %s1384, 128
          %s1386 = scalar_lea.hbm %s13, %s1385
          %s1388 = sshll.u32 %s1377, 4
          %s1389 = int_to_ptr.vmem [resolvable:$true] %s1388
          %1391 = dma.vmem_to_hbm [thread:$0]  %s1389, 128, %s1386, %s1374
        $region96: #{tpu_custom_call.1} parent=71 // pred_fallthru
          _
      $region72: #{tpu_custom_call.1} parent=5 // pred_fallthru
        _
      %p1392 = scmp.le.s32.totalorder 2, %s25
      // Predicated region
      $region97: #{tpu_custom_call.1} parent=5 // pred_check
        %p1393 = pneg %p1392
      $region98: #{tpu_custom_call.1} parent=5 // pred_check_branch
        %1395 = sbr.rel (%p1393) target = $region100
      $region99: #{tpu_custom_call.1} parent=5 // pred_region
        %s1396 = ssub.s32 %s25, 2
        // Predicated region
        $region101: #{tpu_custom_call.1} parent=99 // pred_check
          %p1397 = pneg %p346
        $region102: #{tpu_custom_call.1} parent=99 // pred_check_branch
          %1399 = sbr.rel (%p1397) target = $region104
        $region103: #{tpu_custom_call.1} parent=99 // pred_region
          %s1400 = sand.u32 %s331, 1
          %s1401 = scalar_lea.sflag [#allocation8], %s1400
          %s1402 = sand.u32 %s331, 1
          %s1403 = smul.addr %s1402, 8
          %s1404 = scalar_lea.vmem [#allocation14], %s1403
          %1405 = dma.done %s1401, 128
        $region104: #{tpu_custom_call.1} parent=99 // pred_fallthru
          _
      $region100: #{tpu_custom_call.1} parent=5 // pred_fallthru
        _
    $region6: #{tpu_custom_call.1} parent=1 // loop_footer
      %s29 = sadd.s32 1, %s25
    $region7: #{tpu_custom_call.1} parent=1 // loop_footer_branch
      %24 = sbr.rel target = $region3
    $region8: #{tpu_custom_call.1} parent=1 // loop_exit
      _
    %1406 = vsyncpa [#allocation7], 1
    %s1407 = scalar_lea.sflag [#allocation7], 1
    %1408 = vsyncpa %s1407, 1
    %1409 = vsyncpa [#allocation10], 1
    %1410 = vsyncpa [#allocation13], 1
    %1411 = vsyncpa [#allocation8], 1
    %s1412 = scalar_lea.sflag [#allocation8], 1
    %1413 = vsyncpa %s1412, 1

// kernel: tpu_custom_call.1
$region0: #{tpu_custom_call.1}
  #allocation0 [shape = 'u32[]', space=smem, size = 0x4, offset = 0x4, fixed_abs, tag = 'smem constant byte address 0x4 - core index']
  #allocation1 [shape = 'u32[144,128]{1,0:T(1,128)}', space=vmem, size = 0x12000, scoped, tag = 'internal scratch']
  #allocation2 [shape = 'bf16[8,32]{1,0:T(8,128)(2,1)}', space=vmem, size = 0x800, scoped, tag = 'scratch operand']
  #allocation3 [shape = 'bf16[8,32]{1,0:T(8,128)(2,1)}', space=vmem, size = 0x800, scoped, tag = 'scratch operand']
  #allocation4 [shape = 'bf16[8,32]{1,0:T(8,128)(2,1)}', space=vmem, size = 0x800, scoped, tag = 'scratch operand']
  #allocation5 [shape = 'f32[8,32]{1,0:T(8,128)}', space=vmem, size = 0x1000, scoped, tag = 'scratch operand']
  %s0 = inlined_call_operand.vmem [shape: f32[2,8,32], index: 0, kind: input, shape index: {}]
  %s1 = inlined_call_operand.vmem [shape: f32[1,32], index: 1, kind: input, shape index: {}]
  %s2 = inlined_call_operand.vmem [shape: f32[1,32], index: 2, kind: input, shape index: {}]
  %s3 = inlined_call_operand.vmem [shape: bf16[32,96], index: 3, kind: input, shape index: {}]
  %s4 = inlined_call_operand.vmem [shape: f32[1,96], index: 4, kind: input, shape index: {}]
  %s5 = inlined_call_operand.vmem [shape: bf16[32,32], index: 5, kind: input, shape index: {}]
  %s6 = inlined_call_operand.vmem [shape: f32[1,32], index: 6, kind: input, shape index: {}]
  %s7 = inlined_call_operand.hbm [shape: f32[1,32], index: 7, kind: input, shape index: {}]
  %s8 = inlined_call_operand.hbm [shape: f32[1,32], index: 8, kind: input, shape index: {}]
  %s9 = inlined_call_operand.hbm [shape: bf16[32,64], index: 9, kind: input, shape index: {}]
  %s10 = inlined_call_operand.hbm [shape: f32[1,64], index: 10, kind: input, shape index: {}]
  %s11 = inlined_call_operand.vmem [shape: bf16[64,32], index: 11, kind: input, shape index: {}]
  %s12 = inlined_call_operand.vmem [shape: f32[1,32], index: 12, kind: input, shape index: {}]
  %s13 = inlined_call_operand.hbm [shape: f32[2,8,32], index: 13, kind: output, shape index: {}]
  %s14 = sld [smem:[#allocation0]]
  $region105: #{tpu_custom_call.1} parent=0
    _
  %s16 = ssub.s32 1, %s14
  %s17 = scalar_select 0, %s16, %s14
  $region1: #{tpu_custom_call.1} parent=0
    #allocation6 [shape = 'u8[512]{0}', space=vmem, size = 0x400, scoped, tag = 'input window, operand 7, single buffered']
    #allocation7 [shape = 's32[2]{0}', space=sflag, size = 0x8, scoped, tag = 'scoped memory for tpu_custom_call.1']
    #allocation8 [shape = 's32[2]{0}', space=sflag, size = 0x8, scoped, tag = 'scoped memory for tpu_custom_call.1']
    #allocation9 [shape = 'u8[512]{0}', space=vmem, size = 0x400, scoped, tag = 'input window, operand 8, single buffered']
    #allocation10 [shape = 's32[1]{0}', space=sflag, size = 0x4, scoped, tag = 'scoped memory for tpu_custom_call.1']
    #allocation11 [shape = 'u8[8192]{0}', space=vmem, size = 0x2000, scoped, tag = 'input window, operand 9, single buffered']
    #allocation12 [shape = 'u8[512]{0}', space=vmem, size = 0x400, scoped, tag = 'input window, operand 10, single buffered']
    #allocation13 [shape = 's32[1]{0}', space=sflag, size = 0x4, scoped, tag = 'scoped memory for tpu_custom_call.1']
    #allocation14 [shape = 'u8[8192]{0}', space=vmem, size = 0x2000, scoped, tag = 'output window, operand 0']
    %18 = vsyncpa [#allocation7], 0
    %19 = vsyncpa [#allocation10], 0
    %20 = vsyncpa [#allocation13], 0
    %21 = vsyncpa [#allocation8], 0
    %s22 = scalar_lea.sflag [#allocation8], 1
    %23 = vsyncpa %s22, 0
    loop: start=0, step=1, limit=4
    $region2: #{tpu_custom_call.1} parent=1 // loop_pre_header
      _
    $region3: #{tpu_custom_call.1} parent=1 // loop_header
      %s25 = sphi 0, %s29
      %p26 = scmp.ge.s32.totalorder %s25, 4
      %s32 = sphi 0, %s44
      %s33 = sphi 0, %s40
      %s34 = sphi 0, %s32
      %s35 = sphi 0, %s33
      %s36 = sphi 0, %s34
      %s37 = sphi 0, %s35
      %s47 = sphi 0, %s49
      %s50 = sphi 0, %s47
      %s51 = sphi 0, %s50
      %s67 = sphi 0, %s51
      %s71 = sphi 0, %s71
      %s73 = sphi 0, %s71
      %s74 = sphi 0, %s73
      %s88 = sphi 0, %s74
      %s92 = sphi 0, %s92
      %s94 = sphi 0, %s92
      %s95 = sphi 0, %s94
      %s109 = sphi 0, %s95
      %s113 = sphi 0, %s113
      %s115 = sphi 0, %s113
      %s116 = sphi 0, %s115
      %s130 = sphi 0, %s116
      %s134 = sphi 0, %s134
      %s136 = sphi 0, %s134
      %s137 = sphi 0, %s136
      %s151 = sphi 0, %s137
      %s155 = sphi 0, %s155
      %s157 = sphi 0, %s155
      %s158 = sphi 0, %s157
      %s172 = sphi 0, %s158
      %s176 = sphi 0, %s176
      %s178 = sphi 0, %s176
      %s179 = sphi 0, %s178
      %s193 = sphi 0, %s179
      %s197 = sphi 0, %s197
      %s199 = sphi 0, %s197
      %s200 = sphi 0, %s199
      %s214 = sphi 0, %s200
      %s218 = sphi 0, %s218
      %s220 = sphi 0, %s218
      %s221 = sphi 0, %s220
      %s235 = sphi 0, %s221
      %s239 = sphi 0, %s239
      %s241 = sphi 0, %s239
      %s242 = sphi 0, %s241
      %s256 = sphi 0, %s242
      %s260 = sphi 0, %s260
      %s262 = sphi 0, %s260
      %s263 = sphi 0, %s262
      %s277 = sphi 0, %s263
      %s281 = sphi 0, %s281
      %s283 = sphi 0, %s281
      %s284 = sphi 0, %s283
      %s298 = sphi 0, %s284
      %s302 = sphi 0, %s302
      %s304 = sphi 0, %s302
      %s305 = sphi 0, %s304
      %s319 = sphi 0, %s305
      %s327 = sphi 0, %s329
      %s330 = sphi 0, %s327
      %s331 = sphi 0, %s330
      %s347 = sphi 0, %s331
    $region4: #{tpu_custom_call.1} parent=1 // loop_header_branch
      %28 = sbr.rel (%p26) target = $region8
    $region5: #{tpu_custom_call.1} parent=1 // loop_body
      %s30 = ssub.s32 %s25, 1
      %s31 = ssub.s32 %s25, 2
      %s38 = sadd.s32 1, %s33
      %p39 = scmp.ge.s32.totalorder %s38, 1
      %s40 = scalar_select %p39, 0, %s38
      %s41 = sadd.s32 1, %s32
      %s42 = scalar_select %p39, %s41, %s32
      %p43 = scmp.ge.s32.totalorder %s42, 2
      %s44 = scalar_select %p43, 0, %s42
      %s45 = ssub.s32 %s32, %s44
      %p46 = scmp.eq.s32.totalorder %s45, 0
      %s48 = sadd.s32 %s47, 1
      %s49 = scalar_select %p46, %s47, %s48
      %p52 = pneg %p46
      %p53 = scmp.eq.s32.totalorder %s25, 1
      %p54 = por %p52, %p53
      %p55 = scmp.ne.s32.totalorder %s47, %s50
      %p56 = scmp.eq.s32.totalorder %s25, 0
      %p57 = por %p55, %p56
      %p58 = scmp.ne.s32.totalorder %s47, %s50
      %p59 = scmp.eq.s32.totalorder %s30, 1
      %p60 = por %p58, %p59
      %p61 = scmp.ne.s32.totalorder %s50, %s51
      %p62 = scmp.eq.s32.totalorder %s30, 0
      %p63 = por %p61, %p62
      %p64 = scmp.ne.s32.totalorder %s50, %s51
      %p65 = scmp.eq.s32.totalorder %s31, 1
      %p66 = por %p64, %p65
      %p68 = scmp.ne.s32.totalorder %s51, %s67
      %p69 = scmp.eq.s32.totalorder %s31, 0
      %p70 = por %p68, %p69
      %s72 = sadd.s32 %s71, 1
      %p75 = scmp.eq.s32.totalorder %s25, 1
      %p76 = scmp.ne.s32.totalorder %s71, %s73
      %p77 = scmp.eq.s32.totalorder %s25, 0
      %p78 = por %p76, %p77
      %p79 = scmp.ne.s32.totalorder %s71, %s73
      %p80 = scmp.eq.s32.totalorder %s30, 1
      %p81 = por %p79, %p80
      %p82 = scmp.ne.s32.totalorder %s73, %s74
      %p83 = scmp.eq.s32.totalorder %s30, 0
      %p84 = por %p82, %p83
      %p85 = scmp.ne.s32.totalorder %s73, %s74
      %p86 = scmp.eq.s32.totalorder %s31, 1
      %p87 = por %p85, %p86
      %p89 = scmp.ne.s32.totalorder %s74, %s88
      %p90 = scmp.eq.s32.totalorder %s31, 0
      %p91 = por %p89, %p90
      %s93 = sadd.s32 %s92, 1
      %p96 = scmp.eq.s32.totalorder %s25, 1
      %p97 = scmp.ne.s32.totalorder %s92, %s94
      %p98 = scmp.eq.s32.totalorder %s25, 0
      %p99 = por %p97, %p98
      %p100 = scmp.ne.s32.totalorder %s92, %s94
      %p101 = scmp.eq.s32.totalorder %s30, 1
      %p102 = por %p100, %p101
      %p103 = scmp.ne.s32.totalorder %s94, %s95
      %p104 = scmp.eq.s32.totalorder %s30, 0
      %p105 = por %p103, %p104
      %p106 = scmp.ne.s32.totalorder %s94, %s95
      %p107 = scmp.eq.s32.totalorder %s31, 1
      %p108 = por %p106, %p107
      %p110 = scmp.ne.s32.totalorder %s95, %s109
      %p111 = scmp.eq.s32.totalorder %s31, 0
      %p112 = por %p110, %p111
      %s114 = sadd.s32 %s113, 1
      %p117 = scmp.eq.s32.totalorder %s25, 1
      %p118 = scmp.ne.s32.totalorder %s113, %s115
      %p119 = scmp.eq.s32.totalorder %s25, 0
      %p120 = por %p118, %p119
      %p121 = scmp.ne.s32.totalorder %s113, %s115
      %p122 = scmp.eq.s32.totalorder %s30, 1
      %p123 = por %p121, %p122
      %p124 = scmp.ne.s32.totalorder %s115, %s116
      %p125 = scmp.eq.s32.totalorder %s30, 0
      %p126 = por %p124, %p125
      %p127 = scmp.ne.s32.totalorder %s115, %s116
      %p128 = scmp.eq.s32.totalorder %s31, 1
      %p129 = por %p127, %p128
      %p131 = scmp.ne.s32.totalorder %s116, %s130
      %p132 = scmp.eq.s32.totalorder %s31, 0
      %p133 = por %p131, %p132
      %s135 = sadd.s32 %s134, 1
      %p138 = scmp.eq.s32.totalorder %s25, 1
      %p139 = scmp.ne.s32.totalorder %s134, %s136
      %p140 = scmp.eq.s32.totalorder %s25, 0
      %p141 = por %p139, %p140
      %p142 = scmp.ne.s32.totalorder %s134, %s136
      %p143 = scmp.eq.s32.totalorder %s30, 1
      %p144 = por %p142, %p143
      %p145 = scmp.ne.s32.totalorder %s136, %s137
      %p146 = scmp.eq.s32.totalorder %s30, 0
      %p147 = por %p145, %p146
      %p148 = scmp.ne.s32.totalorder %s136, %s137
      %p149 = scmp.eq.s32.totalorder %s31, 1
      %p150 = por %p148, %p149
      %p152 = scmp.ne.s32.totalorder %s137, %s151
      %p153 = scmp.eq.s32.totalorder %s31, 0
      %p154 = por %p152, %p153
      %s156 = sadd.s32 %s155, 1
      %p159 = scmp.eq.s32.totalorder %s25, 1
      %p160 = scmp.ne.s32.totalorder %s155, %s157
      %p161 = scmp.eq.s32.totalorder %s25, 0
      %p162 = por %p160, %p161
      %p163 = scmp.ne.s32.totalorder %s155, %s157
      %p164 = scmp.eq.s32.totalorder %s30, 1
      %p165 = por %p163, %p164
      %p166 = scmp.ne.s32.totalorder %s157, %s158
      %p167 = scmp.eq.s32.totalorder %s30, 0
      %p168 = por %p166, %p167
      %p169 = scmp.ne.s32.totalorder %s157, %s158
      %p170 = scmp.eq.s32.totalorder %s31, 1
      %p171 = por %p169, %p170
      %p173 = scmp.ne.s32.totalorder %s158, %s172
      %p174 = scmp.eq.s32.totalorder %s31, 0
      %p175 = por %p173, %p174
      %s177 = sadd.s32 %s176, 1
      %p180 = scmp.eq.s32.totalorder %s25, 1
      %p181 = scmp.ne.s32.totalorder %s176, %s178
      %p182 = scmp.eq.s32.totalorder %s25, 0
      %p183 = por %p181, %p182
      %p184 = scmp.ne.s32.totalorder %s176, %s178
      %p185 = scmp.eq.s32.totalorder %s30, 1
      %p186 = por %p184, %p185
      %p187 = scmp.ne.s32.totalorder %s178, %s179
      %p188 = scmp.eq.s32.totalorder %s30, 0
      %p189 = por %p187, %p188
      %p190 = scmp.ne.s32.totalorder %s178, %s179
      %p191 = scmp.eq.s32.totalorder %s31, 1
      %p192 = por %p190, %p191
      %p194 = scmp.ne.s32.totalorder %s179, %s193
      %p195 = scmp.eq.s32.totalorder %s31, 0
      %p196 = por %p194, %p195
      %s198 = sadd.s32 %s197, 1
      %p201 = scmp.eq.s32.totalorder %s25, 1
      %p202 = scmp.ne.s32.totalorder %s197, %s199
      %p203 = scmp.eq.s32.totalorder %s25, 0
      %p204 = por %p202, %p203
      %p205 = scmp.ne.s32.totalorder %s197, %s199
      %p206 = scmp.eq.s32.totalorder %s30, 1
      %p207 = por %p205, %p206
      %p208 = scmp.ne.s32.totalorder %s199, %s200
      %p209 = scmp.eq.s32.totalorder %s30, 0
      %p210 = por %p208, %p209
      %p211 = scmp.ne.s32.totalorder %s199, %s200
      %p212 = scmp.eq.s32.totalorder %s31, 1
      %p213 = por %p211, %p212
      %p215 = scmp.ne.s32.totalorder %s200, %s214
      %p216 = scmp.eq.s32.totalorder %s31, 0
      %p217 = por %p215, %p216
      %s219 = sadd.s32 %s218, 1
      %p222 = scmp.eq.s32.totalorder %s25, 1
      %p223 = scmp.ne.s32.totalorder %s218, %s220
      %p224 = scmp.eq.s32.totalorder %s25, 0
      %p225 = por %p223, %p224
      %p226 = scmp.ne.s32.totalorder %s218, %s220
      %p227 = scmp.eq.s32.totalorder %s30, 1
      %p228 = por %p226, %p227
      %p229 = scmp.ne.s32.totalorder %s220, %s221
      %p230 = scmp.eq.s32.totalorder %s30, 0
      %p231 = por %p229, %p230
      %p232 = scmp.ne.s32.totalorder %s220, %s221
      %p233 = scmp.eq.s32.totalorder %s31, 1
      %p234 = por %p232, %p233
      %p236 = scmp.ne.s32.totalorder %s221, %s235
      %p237 = scmp.eq.s32.totalorder %s31, 0
      %p238 = por %p236, %p237
      %s240 = sadd.s32 %s239, 1
      %p243 = scmp.eq.s32.totalorder %s25, 1
      %p244 = scmp.ne.s32.totalorder %s239, %s241
      %p245 = scmp.eq.s32.totalorder %s25, 0
      %p246 = por %p244, %p245
      %p247 = scmp.ne.s32.totalorder %s239, %s241
      %p248 = scmp.eq.s32.totalorder %s30, 1
      %p249 = por %p247, %p248
      %p250 = scmp.ne.s32.totalorder %s241, %s242
      %p251 = scmp.eq.s32.totalorder %s30, 0
      %p252 = por %p250, %p251
      %p253 = scmp.ne.s32.totalorder %s241, %s242
      %p254 = scmp.eq.s32.totalorder %s31, 1
      %p255 = por %p253, %p254
      %p257 = scmp.ne.s32.totalorder %s242, %s256
      %p258 = scmp.eq.s32.totalorder %s31, 0
      %p259 = por %p257, %p258
      %s261 = sadd.s32 %s260, 1
      %p264 = scmp.eq.s32.totalorder %s25, 1
      %p265 = scmp.ne.s32.totalorder %s260, %s262
      %p266 = scmp.eq.s32.totalorder %s25, 0
      %p267 = por %p265, %p266
      %p268 = scmp.ne.s32.totalorder %s260, %s262
      %p269 = scmp.eq.s32.totalorder %s30, 1
      %p270 = por %p268, %p269
      %p271 = scmp.ne.s32.totalorder %s262, %s263
      %p272 = scmp.eq.s32.totalorder %s30, 0
      %p273 = por %p271, %p272
      %p274 = scmp.ne.s32.totalorder %s262, %s263
      %p275 = scmp.eq.s32.totalorder %s31, 1
      %p276 = por %p274, %p275
      %p278 = scmp.ne.s32.totalorder %s263, %s277
      %p279 = scmp.eq.s32.totalorder %s31, 0
      %p280 = por %p278, %p279
      %s282 = sadd.s32 %s281, 1
      %p285 = scmp.eq.s32.totalorder %s25, 1
      %p286 = scmp.ne.s32.totalorder %s281, %s283
      %p287 = scmp.eq.s32.totalorder %s25, 0
      %p288 = por %p286, %p287
      %p289 = scmp.ne.s32.totalorder %s281, %s283
      %p290 = scmp.eq.s32.totalorder %s30, 1
      %p291 = por %p289, %p290
      %p292 = scmp.ne.s32.totalorder %s283, %s284
      %p293 = scmp.eq.s32.totalorder %s30, 0
      %p294 = por %p292, %p293
      %p295 = scmp.ne.s32.totalorder %s283, %s284
      %p296 = scmp.eq.s32.totalorder %s31, 1
      %p297 = por %p295, %p296
      %p299 = scmp.ne.s32.totalorder %s284, %s298
      %p300 = scmp.eq.s32.totalorder %s31, 0
      %p301 = por %p299, %p300
      %s303 = sadd.s32 %s302, 1
      %p306 = scmp.eq.s32.totalorder %s25, 1
      %p307 = scmp.ne.s32.totalorder %s302, %s304
      %p308 = scmp.eq.s32.totalorder %s25, 0
      %p309 = por %p307, %p308
      %p310 = scmp.ne.s32.totalorder %s302, %s304
      %p311 = scmp.eq.s32.totalorder %s30, 1
      %p312 = por %p310, %p311
      %p313 = scmp.ne.s32.totalorder %s304, %s305
      %p314 = scmp.eq.s32.totalorder %s30, 0
      %p315 = por %p313, %p314
      %p316 = scmp.ne.s32.totalorder %s304, %s305
      %p317 = scmp.eq.s32.totalorder %s31, 1
      %p318 = por %p316, %p317
      %p320 = scmp.ne.s32.totalorder %s305, %s319
      %p321 = scmp.eq.s32.totalorder %s31, 0
      %p322 = por %p320, %p321
      %s323 = ssub.s32 %s32, %s44
      %s324 = ssub.s32 %s33, %s40
      %s325 = sor.u32 %s323, %s324
      %p326 = scmp.eq.s32.totalorder %s325, 0
      %s328 = sadd.s32 %s327, 1
      %s329 = scalar_select %p326, %s327, %s328
      %p332 = pneg %p326
      %p333 = scmp.eq.s32.totalorder %s25, 1
      %p334 = por %p332, %p333
      %p335 = scmp.ne.s32.totalorder %s327, %s330
      %p336 = scmp.eq.s32.totalorder %s25, 0
      %p337 = por %p335, %p336
      %p338 = scmp.ne.s32.totalorder %s327, %s330
      %p339 = scmp.eq.s32.totalorder %s30, 1
      %p340 = por %p338, %p339
      %p341 = scmp.ne.s32.totalorder %s330, %s331
      %p342 = scmp.eq.s32.totalorder %s30, 0
      %p343 = por %p341, %p342
      %p344 = scmp.ne.s32.totalorder %s330, %s331
      %p345 = scmp.eq.s32.totalorder %s31, 1
      %p346 = por %p344, %p345
      %p348 = scmp.ne.s32.totalorder %s331, %s347
      %p349 = scmp.eq.s32.totalorder %s31, 0
      %p350 = por %p348, %p349
      %p351 = scmp.le.s32.totalorder 1, %s25
      %p352 = scmp.lt.s32.totalorder %s25, 3
      %p353 = pnand %p351, %p352
      %p354 = pneg %p353
      // Predicated region
      $region9: #{tpu_custom_call.1} parent=5 // pred_check
        _
      $region10: #{tpu_custom_call.1} parent=5 // pred_check_branch
        %356 = sbr.rel (%p353) target = $region12
      $region11: #{tpu_custom_call.1} parent=5 // pred_region
        %s357 = ssub.s32 %s25, 1
        // Predicated region
        $region13: #{tpu_custom_call.1} parent=11 // pred_check
          %p358 = pneg %p84
        $region14: #{tpu_custom_call.1} parent=11 // pred_check_branch
          %360 = sbr.rel (%p358) target = $region16
        $region15: #{tpu_custom_call.1} parent=11 // pred_region
          _
        $region16: #{tpu_custom_call.1} parent=11 // pred_fallthru
          _
        // Predicated region
        $region17: #{tpu_custom_call.1} parent=11 // pred_check
          %p361 = pneg %p105
        $region18: #{tpu_custom_call.1} parent=11 // pred_check_branch
          %363 = sbr.rel (%p361) target = $region20
        $region19: #{tpu_custom_call.1} parent=11 // pred_region
          _
        $region20: #{tpu_custom_call.1} parent=11 // pred_fallthru
          _
        // Predicated region
        $region21: #{tpu_custom_call.1} parent=11 // pred_check
          %p364 = pneg %p126
        $region22: #{tpu_custom_call.1} parent=11 // pred_check_branch
          %366 = sbr.rel (%p364) target = $region24
        $region23: #{tpu_custom_call.1} parent=11 // pred_region
          _
        $region24: #{tpu_custom_call.1} parent=11 // pred_fallthru
          _
        // Predicated region
        $region25: #{tpu_custom_call.1} parent=11 // pred_check
          %p367 = pneg %p147
        $region26: #{tpu_custom_call.1} parent=11 // pred_check_branch
          %369 = sbr.rel (%p367) target = $region28
        $region27: #{tpu_custom_call.1} parent=11 // pred_region
          _
        $region28: #{tpu_custom_call.1} parent=11 // pred_fallthru
          _
        // Predicated region
        $region29: #{tpu_custom_call.1} parent=11 // pred_check
          %p370 = pneg %p168
        $region30: #{tpu_custom_call.1} parent=11 // pred_check_branch
          %372 = sbr.rel (%p370) target = $region32
        $region31: #{tpu_custom_call.1} parent=11 // pred_region
          _
        $region32: #{tpu_custom_call.1} parent=11 // pred_fallthru
          _
        // Predicated region
        $region33: #{tpu_custom_call.1} parent=11 // pred_check
          %p373 = pneg %p189
        $region34: #{tpu_custom_call.1} parent=11 // pred_check_branch
          %375 = sbr.rel (%p373) target = $region36
        $region35: #{tpu_custom_call.1} parent=11 // pred_region
          _
        $region36: #{tpu_custom_call.1} parent=11 // pred_fallthru
          _
        // Predicated region
        $region37: #{tpu_custom_call.1} parent=11 // pred_check
          %p376 = pneg %p210
        $region38: #{tpu_custom_call.1} parent=11 // pred_check_branch
          %378 = sbr.rel (%p376) target = $region40
        $region39: #{tpu_custom_call.1} parent=11 // pred_region
          %s380 = ssub.s32 16, 16
          %381 = vsyncadd [#allocation7], %s380
          %s383 = sshll.u32 [#allocation6], 4
          %s384 = int_to_ptr.vmem [resolvable:$true] %s383
          %386 = dma.hbm_to_vmem [thread:$0]  %s7, 16, %s384, [#allocation7]
        $region40: #{tpu_custom_call.1} parent=11 // pred_fallthru
          _
        // Predicated region
        $region41: #{tpu_custom_call.1} parent=11 // pred_check
          %p387 = pneg %p231
        $region42: #{tpu_custom_call.1} parent=11 // pred_check_branch
          %389 = sbr.rel (%p387) target = $region44
        $region43: #{tpu_custom_call.1} parent=11 // pred_region
          %s391 = ssub.s32 16, 16
          %392 = vsyncadd [#allocation10], %s391
          %s394 = sshll.u32 [#allocation9], 4
          %s395 = int_to_ptr.vmem [resolvable:$true] %s394
          %397 = dma.hbm_to_vmem [thread:$0]  %s8, 16, %s395, [#allocation10]
        $region44: #{tpu_custom_call.1} parent=11 // pred_fallthru
          _
        // Predicated region
        $region45: #{tpu_custom_call.1} parent=11 // pred_check
          %p398 = pneg %p252
        $region46: #{tpu_custom_call.1} parent=11 // pred_check_branch
          %400 = sbr.rel (%p398) target = $region48
        $region47: #{tpu_custom_call.1} parent=11 // pred_region
          %s402 = ssub.s32 256, 256
          %403 = vsyncadd [#allocation10], %s402
          %s404 = sshll.u32 [#allocation11], 4
          %s405 = int_to_ptr.vmem [resolvable:$true] %s404
          %410 = dma.hbm_to_vmem [thread:$0]  %s9, 256, %s405, [#allocation10], 64, 64, 4
        $region48: #{tpu_custom_call.1} parent=11 // pred_fallthru
          _
        // Predicated region
        $region49: #{tpu_custom_call.1} parent=11 // pred_check
          %p411 = pneg %p273
        $region50: #{tpu_custom_call.1} parent=11 // pred_check_branch
          %413 = sbr.rel (%p411) target = $region52
        $region51: #{tpu_custom_call.1} parent=11 // pred_region
          %s415 = ssub.s32 16, 16
          %416 = vsyncadd [#allocation13], %s415
          %s418 = sshll.u32 [#allocation12], 4
          %s419 = int_to_ptr.vmem [resolvable:$true] %s418
          %421 = dma.hbm_to_vmem [thread:$0]  %s10, 16, %s419, [#allocation13]
        $region52: #{tpu_custom_call.1} parent=11 // pred_fallthru
          _
        // Predicated region
        $region53: #{tpu_custom_call.1} parent=11 // pred_check
          %p422 = pneg %p294
        $region54: #{tpu_custom_call.1} parent=11 // pred_check_branch
          %424 = sbr.rel (%p422) target = $region56
        $region55: #{tpu_custom_call.1} parent=11 // pred_region
          _
        $region56: #{tpu_custom_call.1} parent=11 // pred_fallthru
          _
        // Predicated region
        $region57: #{tpu_custom_call.1} parent=11 // pred_check
          %p425 = pneg %p315
        $region58: #{tpu_custom_call.1} parent=11 // pred_check_branch
          %427 = sbr.rel (%p425) target = $region60
        $region59: #{tpu_custom_call.1} parent=11 // pred_region
          _
        $region60: #{tpu_custom_call.1} parent=11 // pred_fallthru
          _
      $region12: #{tpu_custom_call.1} parent=5 // pred_fallthru
        _
      %p428 = scmp.lt.s32.totalorder %s25, 2
      // Predicated region
      $region61: #{tpu_custom_call.1} parent=5 // pred_check
        %p429 = pneg %p428
      $region62: #{tpu_custom_call.1} parent=5 // pred_check_branch
        %431 = sbr.rel (%p429) target = $region64
      $region63: #{tpu_custom_call.1} parent=5 // pred_region
        // Predicated region
        $region65: #{tpu_custom_call.1} parent=63 // pred_check
          %p432 = pneg %p57
        $region66: #{tpu_custom_call.1} parent=63 // pred_check_branch
          %434 = sbr.rel (%p432) target = $region68
        $region67: #{tpu_custom_call.1} parent=63 // pred_region
          %p435 = scmp.lt.s32.totalorder %s32, 1
          %s436 = scalar_select %p435, %s32, 1
          %s437 = smul.addr %s436, 8
          %s438 = scalar_lea.vmem %s0, %s437
        $region68: #{tpu_custom_call.1} parent=63 // pred_fallthru
          _
      $region64: #{tpu_custom_call.1} parent=5 // pred_fallthru
        _
      %p439 = scmp.le.s32.totalorder 1, %s25
      %p440 = scmp.lt.s32.totalorder %s25, 3
      %p441 = pnand %p439, %p440
      %p442 = pneg %p441
      // Predicated region
      $region69: #{tpu_custom_call.1} parent=5 // pred_check
        _
      $region70: #{tpu_custom_call.1} parent=5 // pred_check_branch
        %444 = sbr.rel (%p441) target = $region72
      $region71: #{tpu_custom_call.1} parent=5 // pred_region
        %s445 = ssub.s32 %s25, 1
        // Predicated region
        $region73: #{tpu_custom_call.1} parent=71 // pred_check
          %p446 = pneg %p210
        $region74: #{tpu_custom_call.1} parent=71 // pred_check_branch
          %448 = sbr.rel (%p446) target = $region76
        $region75: #{tpu_custom_call.1} parent=71 // pred_region
          %449 = dma.done [#allocation7], 16
        $region76: #{tpu_custom_call.1} parent=71 // pred_fallthru
          _
        // Predicated region
        $region77: #{tpu_custom_call.1} parent=71 // pred_check
          %p450 = pneg %p231
        $region78: #{tpu_custom_call.1} parent=71 // pred_check_branch
          %452 = sbr.rel (%p450) target = $region80
        $region79: #{tpu_custom_call.1} parent=71 // pred_region
          %453 = dma.done [#allocation10], 16
        $region80: #{tpu_custom_call.1} parent=71 // pred_fallthru
          _
        // Predicated region
        $region81: #{tpu_custom_call.1} parent=71 // pred_check
          %p454 = pneg %p252
        $region82: #{tpu_custom_call.1} parent=71 // pred_check_branch
          %456 = sbr.rel (%p454) target = $region84
        $region83: #{tpu_custom_call.1} parent=71 // pred_region
          %457 = dma.done [#allocation10], 256
        $region84: #{tpu_custom_call.1} parent=71 // pred_fallthru
          _
        // Predicated region
        $region85: #{tpu_custom_call.1} parent=71 // pred_check
          %p458 = pneg %p273
        $region86: #{tpu_custom_call.1} parent=71 // pred_check_branch
          %460 = sbr.rel (%p458) target = $region88
        $region87: #{tpu_custom_call.1} parent=71 // pred_region
          %461 = dma.done [#allocation13], 16
        $region88: #{tpu_custom_call.1} parent=71 // pred_fallthru
          _
        %p462 = scmp.lt.s32.totalorder %s34, 1
        %s463 = scalar_select %p462, %s34, 1
        %s464 = smul.addr %s463, 8
        %s465 = scalar_lea.vmem %s0, %s464
        %p466 = pneg %p63
        %p467 = pneg %p60
        %p468 = pneg %p84
        %p469 = pneg %p81
        %p470 = pneg %p105
        %p471 = pneg %p102
        %p472 = pneg %p126
        %p473 = pneg %p123
        %p474 = pneg %p147
        %p475 = pneg %p144
        %p476 = pneg %p168
        %p477 = pneg %p165
        %p478 = pneg %p189
        %p479 = pneg %p186
        %p480 = pneg %p210
        %p481 = pneg %p207
        %p482 = pneg %p231
        %p483 = pneg %p228
        %p484 = pneg %p252
        %p485 = pneg %p249
        %p486 = pneg %p273
        %p487 = pneg %p270
        %p488 = pneg %p294
        %p489 = pneg %p291
        %p490 = pneg %p315
        %p491 = pneg %p312
        %p492 = pneg %p343
        %p493 = pneg %p340
        %s494 = sand.u32 %s330, 1
        %s495 = scalar_lea.sflag [#allocation8], %s494
        %s496 = sand.u32 %s330, 1
        %s497 = smul.addr %s496, 8
        %s498 = scalar_lea.vmem [#allocation14], %s497
        %p499 = scmp.lt.s32.totalorder %s34, 1
        %s500 = scalar_select %p499, %s34, 1
        %s501 = smul.addr %s500, 8
        %s502 = scalar_lea.vmem %s0, %s501
        %p504 = scmp.eq.s32.totalorder %s35, 0
        // Predicated region
        $region89: #{tpu_custom_call.1} parent=71 // pred_check
          %p505 = pneg %p504
        $region90: #{tpu_custom_call.1} parent=71 // pred_check_branch
          %507 = sbr.rel (%p505) target = $region92
        $region91: #{tpu_custom_call.1} parent=71 // pred_region
          %v508 = vld [vmem:[%s502] sm:$0xff]
          %v509 = vld [vmem:[%s1] sm:$0x1]
          %v510 = vld [vmem:[%s2] sm:$0x1]
          %vm511 = vcmask 261120
          %v512 = vsel %vm511, %v508, 0.0
          %513 = vadd.xlane.f32.xlu0 %v512
          %v514 = vpop.xlane.xlu0 %513
          %v515 = vrcp.pop 32.0
          %v516 = vmul.f32 %v514, %v515
          %v517 = vsub.f32 %v508, %v516
          %v518 = vmul.f32 %v517, %v517
          %v519 = vsel %vm511, %v518, 0.0
          %520 = vadd.xlane.f32.xlu0 %v519
          %v521 = vpop.xlane.xlu0 %520
          %v522 = vmul.f32 %v521, %v515
          %v523 = vadd.f32 %v522, 1e-06
          %v524 = vrsqrt.pop %v523
          %v525 = vmul.f32 %v517, %v524
          %v527 = vlaneseq
          %v528 = vshrl.u32 %v527, 7
          %v529 = vsub.s32 0, %v528
          %v530 = vrot.slane %v509, %v529
          %v532 = vmul.f32 %v525, %v530
          %v534 = vlaneseq
          %v535 = vshrl.u32 %v534, 7
          %v536 = vsub.s32 0, %v535
          %v537 = vrot.slane %v510, %v536
          %v539 = vadd.f32 %v532, %v537
          %v540 = vpack.c.bf16 %v539, %v539
          %v541 = vld [vmem:[%s3] sm:$0xf]
          %v542 = vld [vmem:[%s3 + $0x4] sm:$0xf]
          %v543 = vld [vmem:[%s3 + $0x8] sm:$0xf]
          %v544 = vld [vmem:[%s3 + $0xc] sm:$0xf]
          %v545 = vld [vmem:[%s4] sm:$0x1]
          %v547 = vlaneseq
          %v548 = vshrl.u32 %v547, 7
          %v549 = vsub.s32 0, %v548
          %v550 = vrot.slane %v545, %v549
          %v556 = vunpack.c.l.b16 %v541
          %v557 = vunpack.c.l.b16 %v542
          %v558 = vunpack.c.l.b16 %v543
          %v559 = vunpack.c.l.b16 %v544
          %v560 = vpack.c.b16 %v557, %v556
          %v561 = vpack.c.b16 %v559, %v558
          %v565 = vsel %vm511, %v540, 0
          %567 = vmatprep.subr.bf16.mxu0 0
          %568 = vmatpush1.bf16.msra.mxu0 0
          %569 = vmatprep.subr.bf16.mxu0 0
          %570 = vmatpush1.bf16.msra.mxu0 0
          %571 = vmatprep.subr.bf16.mxu0 0
          %572 = vmatpush1.bf16.msra.mxu0 0
          %573 = vmatprep.subr.bf16.mxu0 0
          %574 = vmatpush1.bf16.msra.mxu0 0
          %575 = vmatprep.subr.bf16.mxu0 0
          %576 = vmatpush1.bf16.msra.mxu0 0
          %577 = vmatprep.subr.bf16.mxu0 0
          %578 = vmatpush1.bf16.msra.mxu0 0
          %579 = vmatprep.subr.bf16.mxu0 0
          %580 = vmatpush1.bf16.msra.mxu0 %v561
          %581 = vmatprep.subr.bf16.mxu0 0
          %582 = vmatpush1.bf16.msra.mxu0 %v560
          %583 = vmatprep.subr.bf16.mxu0 0
          %584 = vmatpush2.bf16.msra.mxu0 0
          %585 = vmatprep.subr.bf16.mxu0 0
          %586 = vmatpush2.bf16.msra.mxu0 0
          %587 = vmatprep.subr.bf16.mxu0 0
          %588 = vmatpush2.bf16.msra.mxu0 0
          %589 = vmatprep.subr.bf16.mxu0 0
          %590 = vmatpush2.bf16.msra.mxu0 0
          %591 = vmatprep.subr.bf16.mxu0 0
          %592 = vmatpush2.bf16.msra.mxu0 0
          %593 = vmatprep.subr.bf16.mxu0 0
          %594 = vmatpush2.bf16.msra.mxu0 0
          %595 = vmatprep.subr.bf16.mxu0 0
          %596 = vmatpush2.bf16.msra.mxu0 0
          %597 = vmatprep.subr.bf16.mxu0 0
          %598 = vmatpush2.bf16.msra.mxu0 0
          %599 = vmatprep.mubr.bf16.mxu0 0
          %600 = vmatmul.mubr.bf16.gmra.mxu0 %v565
          %v601 = vpop.f32.mrf.mxu0
          %v602 = vadd.f32 %v550, %v601
          %v603 = vpop.f32.mrf.mxu0
          %v604 = vpop.f32.mrf.mxu0
          %v605 = vpop.f32.mrf.mxu0
          %606 = vdwg.mxu0
          %v607 = vmul.f32 %v602, 0.35355338
          %v608 = vpack.c.bf16 %v607, %v607
          %vm609 = vcmask 257024
          %610 = vst.msk [vmem:[#allocation2] sm:$0xf] %vm609, %v608
          %v611 = vpack.c.bf16 %v602, %v602
          %v613 = vunpack.c.l.b16 %v611
          %v614 = vpack.c.b16 %v613, %v613
          %615 = vrot.lane.b32.xlu0 %v614, 96
          %v616 = vpop.permute.xlu0 %615
          %618 = vst.msk [vmem:[#allocation3] sm:$0xf] %vm609, %v616
          %619 = vrot.lane.b32.xlu0 %v614, 64
          %v620 = vpop.permute.xlu0 %619
          %622 = vst.msk [vmem:[#allocation4] sm:$0xf] %vm609, %v620
        $region92: #{tpu_custom_call.1} parent=71 // pred_fallthru
          _
        %v623 = vld [vmem:[%s502] sm:$0xff]
        %v624 = vld [vmem:[#allocation2] sm:$0xf]
        %v625 = vld [vmem:[#allocation3] sm:$0xf]
        %vm626 = vcmask 64512
        %v628 = vsel %vm626, %v624, 0
        %v631 = vsel %vm626, %v625, 0
        %633 = vmatprep.subr.bf16.mxu0 0
        %634 = vmatpush1.bf16.xpose.msra.mxu0 0
        %635 = vmatprep.subr.bf16.mxu0 0
        %636 = vmatpush1.bf16.xpose.msra.mxu0 0
        %637 = vmatprep.subr.bf16.mxu0 0
        %638 = vmatpush1.bf16.xpose.msra.mxu0 0
        %639 = vmatprep.subr.bf16.mxu0 0
        %640 = vmatpush1.bf16.xpose.msra.mxu0 0
        %641 = vmatprep.subr.bf16.mxu0 0
        %642 = vmatpush1.bf16.xpose.msra.mxu0 0
        %643 = vmatprep.subr.bf16.mxu0 0
        %644 = vmatpush1.bf16.xpose.msra.mxu0 0
        %645 = vmatprep.subr.bf16.mxu0 0
        %646 = vmatpush1.bf16.xpose.msra.mxu0 0
        %647 = vmatprep.subr.bf16.mxu0 0
        %648 = vmatpush1.bf16.xpose.msra.mxu0 %v631
        %649 = vmatprep.subr.bf16.mxu0 0
        %650 = vmatpush2.bf16.xpose.msra.mxu0 0
        %651 = vmatprep.subr.bf16.mxu0 0
        %652 = vmatpush2.bf16.xpose.msra.mxu0 0
        %653 = vmatprep.subr.bf16.mxu0 0
        %654 = vmatpush2.bf16.xpose.msra.mxu0 0
        %655 = vmatprep.subr.bf16.mxu0 0
        %656 = vmatpush2.bf16.xpose.msra.mxu0 0
        %657 = vmatprep.subr.bf16.mxu0 0
        %658 = vmatpush2.bf16.xpose.msra.mxu0 0
        %659 = vmatprep.subr.bf16.mxu0 0
        %660 = vmatpush2.bf16.xpose.msra.mxu0 0
        %661 = vmatprep.subr.bf16.mxu0 0
        %662 = vmatpush2.bf16.xpose.msra.mxu0 0
        %663 = vmatprep.subr.bf16.mxu0 0
        %664 = vmatpush2.bf16.xpose.msra.mxu0 0
        %665 = vmatprep.mubr.bf16.mxu0 0
        %666 = vmatmul.mubr.bf16.gmra.mxu0 %v628
        %v667 = vpop.f32.mrf.mxu0
        %v668 = vadd.f32 0.0, %v667
        %v669 = vpop.f32.mrf.mxu0
        %v670 = vpop.f32.mrf.mxu0
        %v671 = vpop.f32.mrf.mxu0
        %672 = vdwg.mxu0
        %v673 = vsel %vm626, %v668, -inf
        %674 = vmax.xlane.f32.xlu0 %v673
        %v675 = vpop.xlane.xlu0 %674
        %v676 = vsub.f32 %v668, %v675
        %v677 = vmul.f32 %v676, 1.442695
        %v678 = vpow.pop %v677
        %v679 = vsel %vm626, %v678, 0.0
        %680 = vadd.xlane.f32.xlu0 %v679
        %v681 = vpop.xlane.xlu0 %680
        %v682 = vrcp.pop %v681
        %v683 = vmul.f32 %v678, %v682
        %v684 = vpack.c.bf16 %v683, %v683
        %v685 = vld [vmem:[#allocation4] sm:$0xf]
        %v687 = vsel %vm626, %v684, 0
        %vm689 = vcmask 1043456
        %v691 = vsel %vm689, %v685, 0
        %693 = vmatprep.subr.bf16.mxu0 0
        %694 = vmatpush1.bf16.msra.mxu0 0
        %695 = vmatprep.subr.bf16.mxu0 0
        %696 = vmatpush1.bf16.msra.mxu0 0
        %697 = vmatprep.subr.bf16.mxu0 0
        %698 = vmatpush1.bf16.msra.mxu0 0
        %699 = vmatprep.subr.bf16.mxu0 0
        %700 = vmatpush1.bf16.msra.mxu0 0
        %701 = vmatprep.subr.bf16.mxu0 0
        %702 = vmatpush1.bf16.msra.mxu0 0
        %703 = vmatprep.subr.bf16.mxu0 0
        %704 = vmatpush1.bf16.msra.mxu0 0
        %705 = vmatprep.subr.bf16.mxu0 0
        %706 = vmatpush1.bf16.msra.mxu0 0
        %707 = vmatprep.subr.bf16.mxu0 0
        %708 = vmatpush1.bf16.msra.mxu0 %v691
        %709 = vmatprep.subr.bf16.mxu0 0
        %710 = vmatpush2.bf16.msra.mxu0 0
        %711 = vmatprep.subr.bf16.mxu0 0
        %712 = vmatpush2.bf16.msra.mxu0 0
        %713 = vmatprep.subr.bf16.mxu0 0
        %714 = vmatpush2.bf16.msra.mxu0 0
        %715 = vmatprep.subr.bf16.mxu0 0
        %716 = vmatpush2.bf16.msra.mxu0 0
        %717 = vmatprep.subr.bf16.mxu0 0
        %718 = vmatpush2.bf16.msra.mxu0 0
        %719 = vmatprep.subr.bf16.mxu0 0
        %720 = vmatpush2.bf16.msra.mxu0 0
        %721 = vmatprep.subr.bf16.mxu0 0
        %722 = vmatpush2.bf16.msra.mxu0 0
        %723 = vmatprep.subr.bf16.mxu0 0
        %724 = vmatpush2.bf16.msra.mxu0 0
        %725 = vmatprep.mubr.bf16.mxu0 0
        %726 = vmatmul.mubr.bf16.gmra.mxu0 %v687
        %v727 = vpop.f32.mrf.mxu0
        %v728 = vadd.f32 0.0, %v727
        %v729 = vpop.f32.mrf.mxu0
        %v730 = vpop.f32.mrf.mxu0
        %v731 = vpop.f32.mrf.mxu0
        %732 = vdwg.mxu0
        %733 = vst.msk [vmem:[#allocation5] sm:$0xff] %vm626, %v728
        %v734 = vld [vmem:[#allocation3] sm:$0xf]
        %v736 = vunpack.c.l.b16 %v624
        %v737 = vpack.c.b16 %v736, %v736
        %738 = vrot.lane.b32.xlu0 %v737, 120
        %v739 = vpop.permute.xlu0 %738
        %v741 = vunpack.c.l.b16 %v734
        %v742 = vpack.c.b16 %v741, %v741
        %743 = vrot.lane.b32.xlu0 %v742, 120
        %v744 = vpop.permute.xlu0 %743
        %v746 = vsel %vm626, %v739, 0
        %v749 = vsel %vm626, %v744, 0
        %751 = vmatprep.subr.bf16.mxu0 0
        %752 = vmatpush1.bf16.xpose.msra.mxu0 0
        %753 = vmatprep.subr.bf16.mxu0 0
        %754 = vmatpush1.bf16.xpose.msra.mxu0 0
        %755 = vmatprep.subr.bf16.mxu0 0
        %756 = vmatpush1.bf16.xpose.msra.mxu0 0
        %757 = vmatprep.subr.bf16.mxu0 0
        %758 = vmatpush1.bf16.xpose.msra.mxu0 0
        %759 = vmatprep.subr.bf16.mxu0 0
        %760 = vmatpush1.bf16.xpose.msra.mxu0 0
        %761 = vmatprep.subr.bf16.mxu0 0
        %762 = vmatpush1.bf16.xpose.msra.mxu0 0
        %763 = vmatprep.subr.bf16.mxu0 0
        %764 = vmatpush1.bf16.xpose.msra.mxu0 0
        %765 = vmatprep.subr.bf16.mxu0 0
        %766 = vmatpush1.bf16.xpose.msra.mxu0 %v749
        %767 = vmatprep.subr.bf16.mxu0 0
        %768 = vmatpush2.bf16.xpose.msra.mxu0 0
        %769 = vmatprep.subr.bf16.mxu0 0
        %770 = vmatpush2.bf16.xpose.msra.mxu0 0
        %771 = vmatprep.subr.bf16.mxu0 0
        %772 = vmatpush2.bf16.xpose.msra.mxu0 0
        %773 = vmatprep.subr.bf16.mxu0 0
        %774 = vmatpush2.bf16.xpose.msra.mxu0 0
        %775 = vmatprep.subr.bf16.mxu0 0
        %776 = vmatpush2.bf16.xpose.msra.mxu0 0
        %777 = vmatprep.subr.bf16.mxu0 0
        %778 = vmatpush2.bf16.xpose.msra.mxu0 0
        %779 = vmatprep.subr.bf16.mxu0 0
        %780 = vmatpush2.bf16.xpose.msra.mxu0 0
        %781 = vmatprep.subr.bf16.mxu0 0
        %782 = vmatpush2.bf16.xpose.msra.mxu0 0
        %783 = vmatprep.mubr.bf16.mxu0 0
        %784 = vmatmul.mubr.bf16.gmra.mxu0 %v746
        %v785 = vpop.f32.mrf.mxu0
        %v786 = vadd.f32 0.0, %v785
        %v787 = vpop.f32.mrf.mxu0
        %v788 = vpop.f32.mrf.mxu0
        %v789 = vpop.f32.mrf.mxu0
        %790 = vdwg.mxu0
        %v791 = vsel %vm626, %v786, -inf
        %792 = vmax.xlane.f32.xlu0 %v791
        %v793 = vpop.xlane.xlu0 %792
        %v794 = vsub.f32 %v786, %v793
        %v795 = vmul.f32 %v794, 1.442695
        %v796 = vpow.pop %v795
        %v797 = vsel %vm626, %v796, 0.0
        %798 = vadd.xlane.f32.xlu0 %v797
        %v799 = vpop.xlane.xlu0 %798
        %v800 = vrcp.pop %v799
        %v801 = vmul.f32 %v796, %v800
        %v802 = vpack.c.bf16 %v801, %v801
        %v803 = vld [vmem:[#allocation4] sm:$0xf]
        %v805 = vunpack.c.l.b16 %v803
        %v806 = vpack.c.b16 %v805, %v805
        %807 = vrot.lane.b32.xlu0 %v806, 120
        %v808 = vpop.permute.xlu0 %807
        %v810 = vsel %vm626, %v802, 0
        %v813 = vsel %vm689, %v808, 0
        %815 = vmatprep.subr.bf16.mxu0 0
        %816 = vmatpush1.bf16.msra.mxu0 0
        %817 = vmatprep.subr.bf16.mxu0 0
        %818 = vmatpush1.bf16.msra.mxu0 0
        %819 = vmatprep.subr.bf16.mxu0 0
        %820 = vmatpush1.bf16.msra.mxu0 0
        %821 = vmatprep.subr.bf16.mxu0 0
        %822 = vmatpush1.bf16.msra.mxu0 0
        %823 = vmatprep.subr.bf16.mxu0 0
        %824 = vmatpush1.bf16.msra.mxu0 0
        %825 = vmatprep.subr.bf16.mxu0 0
        %826 = vmatpush1.bf16.msra.mxu0 0
        %827 = vmatprep.subr.bf16.mxu0 0
        %828 = vmatpush1.bf16.msra.mxu0 0
        %829 = vmatprep.subr.bf16.mxu0 0
        %830 = vmatpush1.bf16.msra.mxu0 %v813
        %831 = vmatprep.subr.bf16.mxu0 0
        %832 = vmatpush2.bf16.msra.mxu0 0
        %833 = vmatprep.subr.bf16.mxu0 0
        %834 = vmatpush2.bf16.msra.mxu0 0
        %835 = vmatprep.subr.bf16.mxu0 0
        %836 = vmatpush2.bf16.msra.mxu0 0
        %837 = vmatprep.subr.bf16.mxu0 0
        %838 = vmatpush2.bf16.msra.mxu0 0
        %839 = vmatprep.subr.bf16.mxu0 0
        %840 = vmatpush2.bf16.msra.mxu0 0
        %841 = vmatprep.subr.bf16.mxu0 0
        %842 = vmatpush2.bf16.msra.mxu0 0
        %843 = vmatprep.subr.bf16.mxu0 0
        %844 = vmatpush2.bf16.msra.mxu0 0
        %845 = vmatprep.subr.bf16.mxu0 0
        %846 = vmatpush2.bf16.msra.mxu0 0
        %847 = vmatprep.mubr.bf16.mxu0 0
        %848 = vmatmul.mubr.bf16.gmra.mxu0 %v810
        %v849 = vpop.f32.mrf.mxu0
        %v850 = vadd.f32 0.0, %v849
        %v851 = vpop.f32.mrf.mxu0
        %v852 = vpop.f32.mrf.mxu0
        %v853 = vpop.f32.mrf.mxu0
        %854 = vdwg.mxu0
        %856 = vrot.lane.b32.xlu0 %v850, 8
        %v857 = vpop.permute.xlu0 %856
        %vm859 = vcmask 130112
        %860 = vst.msk [vmem:[#allocation5] sm:$0xff] %vm859, %v857
        %v861 = vld [vmem:[#allocation3] sm:$0xf]
        %862 = vrot.lane.b32.xlu0 %v737, 112
        %v863 = vpop.permute.xlu0 %862
        %v865 = vunpack.c.l.b16 %v861
        %v866 = vpack.c.b16 %v865, %v865
        %867 = vrot.lane.b32.xlu0 %v866, 112
        %v868 = vpop.permute.xlu0 %867
        %v870 = vsel %vm626, %v863, 0
        %v873 = vsel %vm626, %v868, 0
        %875 = vmatprep.subr.bf16.mxu0 0
        %876 = vmatpush1.bf16.xpose.msra.mxu0 0
        %877 = vmatprep.subr.bf16.mxu0 0
        %878 = vmatpush1.bf16.xpose.msra.mxu0 0
        %879 = vmatprep.subr.bf16.mxu0 0
        %880 = vmatpush1.bf16.xpose.msra.mxu0 0
        %881 = vmatprep.subr.bf16.mxu0 0
        %882 = vmatpush1.bf16.xpose.msra.mxu0 0
        %883 = vmatprep.subr.bf16.mxu0 0
        %884 = vmatpush1.bf16.xpose.msra.mxu0 0
        %885 = vmatprep.subr.bf16.mxu0 0
        %886 = vmatpush1.bf16.xpose.msra.mxu0 0
        %887 = vmatprep.subr.bf16.mxu0 0
        %888 = vmatpush1.bf16.xpose.msra.mxu0 0
        %889 = vmatprep.subr.bf16.mxu0 0
        %890 = vmatpush1.bf16.xpose.msra.mxu0 %v873
        %891 = vmatprep.subr.bf16.mxu0 0
        %892 = vmatpush2.bf16.xpose.msra.mxu0 0
        %893 = vmatprep.subr.bf16.mxu0 0
        %894 = vmatpush2.bf16.xpose.msra.mxu0 0
        %895 = vmatprep.subr.bf16.mxu0 0
        %896 = vmatpush2.bf16.xpose.msra.mxu0 0
        %897 = vmatprep.subr.bf16.mxu0 0
        %898 = vmatpush2.bf16.xpose.msra.mxu0 0
        %899 = vmatprep.subr.bf16.mxu0 0
        %900 = vmatpush2.bf16.xpose.msra.mxu0 0
        %901 = vmatprep.subr.bf16.mxu0 0
        %902 = vmatpush2.bf16.xpose.msra.mxu0 0
        %903 = vmatprep.subr.bf16.mxu0 0
        %904 = vmatpush2.bf16.xpose.msra.mxu0 0
        %905 = vmatprep.subr.bf16.mxu0 0
        %906 = vmatpush2.bf16.xpose.msra.mxu0 0
        %907 = vmatprep.mubr.bf16.mxu0 0
        %908 = vmatmul.mubr.bf16.gmra.mxu0 %v870
        %v909 = vpop.f32.mrf.mxu0
        %v910 = vadd.f32 0.0, %v909
        %v911 = vpop.f32.mrf.mxu0
        %v912 = vpop.f32.mrf.mxu0
        %v913 = vpop.f32.mrf.mxu0
        %914 = vdwg.mxu0
        %v915 = vsel %vm626, %v910, -inf
        %916 = vmax.xlane.f32.xlu0 %v915
        %v917 = vpop.xlane.xlu0 %916
        %v918 = vsub.f32 %v910, %v917
        %v919 = vmul.f32 %v918, 1.442695
        %v920 = vpow.pop %v919
        %v921 = vsel %vm626, %v920, 0.0
        %922 = vadd.xlane.f32.xlu0 %v921
        %v923 = vpop.xlane.xlu0 %922
        %v924 = vrcp.pop %v923
        %v925 = vmul.f32 %v920, %v924
        %v926 = vpack.c.bf16 %v925, %v925
        %v927 = vld [vmem:[#allocation4] sm:$0xf]
        %v929 = vunpack.c.l.b16 %v927
        %v930 = vpack.c.b16 %v929, %v929
        %931 = vrot.lane.b32.xlu0 %v930, 112
        %v932 = vpop.permute.xlu0 %931
        %v934 = vsel %vm626, %v926, 0
        %v937 = vsel %vm689, %v932, 0
        %939 = vmatprep.subr.bf16.mxu0 0
        %940 = vmatpush1.bf16.msra.mxu0 0
        %941 = vmatprep.subr.bf16.mxu0 0
        %942 = vmatpush1.bf16.msra.mxu0 0
        %943 = vmatprep.subr.bf16.mxu0 0
        %944 = vmatpush1.bf16.msra.mxu0 0
        %945 = vmatprep.subr.bf16.mxu0 0
        %946 = vmatpush1.bf16.msra.mxu0 0
        %947 = vmatprep.subr.bf16.mxu0 0
        %948 = vmatpush1.bf16.msra.mxu0 0
        %949 = vmatprep.subr.bf16.mxu0 0
        %950 = vmatpush1.bf16.msra.mxu0 0
        %951 = vmatprep.subr.bf16.mxu0 0
        %952 = vmatpush1.bf16.msra.mxu0 0
        %953 = vmatprep.subr.bf16.mxu0 0
        %954 = vmatpush1.bf16.msra.mxu0 %v937
        %955 = vmatprep.subr.bf16.mxu0 0
        %956 = vmatpush2.bf16.msra.mxu0 0
        %957 = vmatprep.subr.bf16.mxu0 0
        %958 = vmatpush2.bf16.msra.mxu0 0
        %959 = vmatprep.subr.bf16.mxu0 0
        %960 = vmatpush2.bf16.msra.mxu0 0
        %961 = vmatprep.subr.bf16.mxu0 0
        %962 = vmatpush2.bf16.msra.mxu0 0
        %963 = vmatprep.subr.bf16.mxu0 0
        %964 = vmatpush2.bf16.msra.mxu0 0
        %965 = vmatprep.subr.bf16.mxu0 0
        %966 = vmatpush2.bf16.msra.mxu0 0
        %967 = vmatprep.subr.bf16.mxu0 0
        %968 = vmatpush2.bf16.msra.mxu0 0
        %969 = vmatprep.subr.bf16.mxu0 0
        %970 = vmatpush2.bf16.msra.mxu0 0
        %971 = vmatprep.mubr.bf16.mxu0 0
        %972 = vmatmul.mubr.bf16.gmra.mxu0 %v934
        %v973 = vpop.f32.mrf.mxu0
        %v974 = vadd.f32 0.0, %v973
        %v975 = vpop.f32.mrf.mxu0
        %v976 = vpop.f32.mrf.mxu0
        %v977 = vpop.f32.mrf.mxu0
        %978 = vdwg.mxu0
        %980 = vrot.lane.b32.xlu0 %v974, 16
        %v981 = vpop.permute.xlu0 %980
        %vm983 = vcmask 195712
        %984 = vst.msk [vmem:[#allocation5] sm:$0xff] %vm983, %v981
        %v985 = vld [vmem:[#allocation3] sm:$0xf]
        %986 = vrot.lane.b32.xlu0 %v737, 104
        %v987 = vpop.permute.xlu0 %986
        %v989 = vunpack.c.l.b16 %v985
        %v990 = vpack.c.b16 %v989, %v989
        %991 = vrot.lane.b32.xlu0 %v990, 104
        %v992 = vpop.permute.xlu0 %991
        %v994 = vsel %vm626, %v987, 0
        %v997 = vsel %vm626, %v992, 0
        %999 = vmatprep.subr.bf16.mxu0 0
        %1000 = vmatpush1.bf16.xpose.msra.mxu0 0
        %1001 = vmatprep.subr.bf16.mxu0 0
        %1002 = vmatpush1.bf16.xpose.msra.mxu0 0
        %1003 = vmatprep.subr.bf16.mxu0 0
        %1004 = vmatpush1.bf16.xpose.msra.mxu0 0
        %1005 = vmatprep.subr.bf16.mxu0 0
        %1006 = vmatpush1.bf16.xpose.msra.mxu0 0
        %1007 = vmatprep.subr.bf16.mxu0 0
        %1008 = vmatpush1.bf16.xpose.msra.mxu0 0
        %1009 = vmatprep.subr.bf16.mxu0 0
        %1010 = vmatpush1.bf16.xpose.msra.mxu0 0
        %1011 = vmatprep.subr.bf16.mxu0 0
        %1012 = vmatpush1.bf16.xpose.msra.mxu0 0
        %1013 = vmatprep.subr.bf16.mxu0 0
        %1014 = vmatpush1.bf16.xpose.msra.mxu0 %v997
        %1015 = vmatprep.subr.bf16.mxu0 0
        %1016 = vmatpush2.bf16.xpose.msra.mxu0 0
        %1017 = vmatprep.subr.bf16.mxu0 0
        %1018 = vmatpush2.bf16.xpose.msra.mxu0 0
        %1019 = vmatprep.subr.bf16.mxu0 0
        %1020 = vmatpush2.bf16.xpose.msra.mxu0 0
        %1021 = vmatprep.subr.bf16.mxu0 0
        %1022 = vmatpush2.bf16.xpose.msra.mxu0 0
        %1023 = vmatprep.subr.bf16.mxu0 0
        %1024 = vmatpush2.bf16.xpose.msra.mxu0 0
        %1025 = vmatprep.subr.bf16.mxu0 0
        %1026 = vmatpush2.bf16.xpose.msra.mxu0 0
        %1027 = vmatprep.subr.bf16.mxu0 0
        %1028 = vmatpush2.bf16.xpose.msra.mxu0 0
        %1029 = vmatprep.subr.bf16.mxu0 0
        %1030 = vmatpush2.bf16.xpose.msra.mxu0 0
        %1031 = vmatprep.mubr.bf16.mxu0 0
        %1032 = vmatmul.mubr.bf16.gmra.mxu0 %v994
        %v1033 = vpop.f32.mrf.mxu0
        %v1034 = vadd.f32 0.0, %v1033
        %v1035 = vpop.f32.mrf.mxu0
        %v1036 = vpop.f32.mrf.mxu0
        %v1037 = vpop.f32.mrf.mxu0
        %1038 = vdwg.mxu0
        %v1039 = vsel %vm626, %v1034, -inf
        %1040 = vmax.xlane.f32.xlu0 %v1039
        %v1041 = vpop.xlane.xlu0 %1040
        %v1042 = vsub.f32 %v1034, %v1041
        %v1043 = vmul.f32 %v1042, 1.442695
        %v1044 = vpow.pop %v1043
        %v1045 = vsel %vm626, %v1044, 0.0
        %1046 = vadd.xlane.f32.xlu0 %v1045
        %v1047 = vpop.xlane.xlu0 %1046
        %v1048 = vrcp.pop %v1047
        %v1049 = vmul.f32 %v1044, %v1048
        %v1050 = vpack.c.bf16 %v1049, %v1049
        %v1051 = vld [vmem:[#allocation4] sm:$0xf]
        %v1053 = vunpack.c.l.b16 %v1051
        %v1054 = vpack.c.b16 %v1053, %v1053
        %1055 = vrot.lane.b32.xlu0 %v1054, 104
        %v1056 = vpop.permute.xlu0 %1055
        %v1058 = vsel %vm626, %v1050, 0
        %v1061 = vsel %vm689, %v1056, 0
        %1063 = vmatprep.subr.bf16.mxu0 0
        %1064 = vmatpush1.bf16.msra.mxu0 0
        %1065 = vmatprep.subr.bf16.mxu0 0
        %1066 = vmatpush1.bf16.msra.mxu0 0
        %1067 = vmatprep.subr.bf16.mxu0 0
        %1068 = vmatpush1.bf16.msra.mxu0 0
        %1069 = vmatprep.subr.bf16.mxu0 0
        %1070 = vmatpush1.bf16.msra.mxu0 0
        %1071 = vmatprep.subr.bf16.mxu0 0
        %1072 = vmatpush1.bf16.msra.mxu0 0
        %1073 = vmatprep.subr.bf16.mxu0 0
        %1074 = vmatpush1.bf16.msra.mxu0 0
        %1075 = vmatprep.subr.bf16.mxu0 0
        %1076 = vmatpush1.bf16.msra.mxu0 0
        %1077 = vmatprep.subr.bf16.mxu0 0
        %1078 = vmatpush1.bf16.msra.mxu0 %v1061
        %1079 = vmatprep.subr.bf16.mxu0 0
        %1080 = vmatpush2.bf16.msra.mxu0 0
        %1081 = vmatprep.subr.bf16.mxu0 0
        %1082 = vmatpush2.bf16.msra.mxu0 0
        %1083 = vmatprep.subr.bf16.mxu0 0
        %1084 = vmatpush2.bf16.msra.mxu0 0
        %1085 = vmatprep.subr.bf16.mxu0 0
        %1086 = vmatpush2.bf16.msra.mxu0 0
        %1087 = vmatprep.subr.bf16.mxu0 0
        %1088 = vmatpush2.bf16.msra.mxu0 0
        %1089 = vmatprep.subr.bf16.mxu0 0
        %1090 = vmatpush2.bf16.msra.mxu0 0
        %1091 = vmatprep.subr.bf16.mxu0 0
        %1092 = vmatpush2.bf16.msra.mxu0 0
        %1093 = vmatprep.subr.bf16.mxu0 0
        %1094 = vmatpush2.bf16.msra.mxu0 0
        %1095 = vmatprep.mubr.bf16.mxu0 0
        %1096 = vmatmul.mubr.bf16.gmra.mxu0 %v1058
        %v1097 = vpop.f32.mrf.mxu0
        %v1098 = vadd.f32 0.0, %v1097
        %v1099 = vpop.f32.mrf.mxu0
        %v1100 = vpop.f32.mrf.mxu0
        %v1101 = vpop.f32.mrf.mxu0
        %1102 = vdwg.mxu0
        %1104 = vrot.lane.b32.xlu0 %v1098, 24
        %v1105 = vpop.permute.xlu0 %1104
        %vm1107 = vcmask 261312
        %1108 = vst.msk [vmem:[#allocation5] sm:$0xff] %vm1107, %v1105
        %v1109 = vld [vmem:[#allocation5] sm:$0xff]
        %v1110 = vpack.c.bf16 %v1109, %v1109
        %v1111 = vld [vmem:[%s5] sm:$0xf]
        %v1112 = vld [vmem:[%s5 + $0x4] sm:$0xf]
        %v1113 = vld [vmem:[%s5 + $0x8] sm:$0xf]
        %v1114 = vld [vmem:[%s5 + $0xc] sm:$0xf]
        %v1119 = vunpack.c.l.b16 %v1111
        %v1120 = vunpack.c.l.b16 %v1112
        %v1121 = vunpack.c.l.b16 %v1113
        %v1122 = vunpack.c.l.b16 %v1114
        %v1123 = vpack.c.b16 %v1120, %v1119
        %v1124 = vpack.c.b16 %v1122, %v1121
        %vm1127 = vcmask 261120
        %v1129 = vsel %vm1127, %v1110, 0
        %1131 = vmatprep.subr.bf16.mxu0 0
        %1132 = vmatpush1.bf16.msra.mxu0 0
        %1133 = vmatprep.subr.bf16.mxu0 0
        %1134 = vmatpush1.bf16.msra.mxu0 0
        %1135 = vmatprep.subr.bf16.mxu0 0
        %1136 = vmatpush1.bf16.msra.mxu0 0
        %1137 = vmatprep.subr.bf16.mxu0 0
        %1138 = vmatpush1.bf16.msra.mxu0 0
        %1139 = vmatprep.subr.bf16.mxu0 0
        %1140 = vmatpush1.bf16.msra.mxu0 0
        %1141 = vmatprep.subr.bf16.mxu0 0
        %1142 = vmatpush1.bf16.msra.mxu0 0
        %1143 = vmatprep.subr.bf16.mxu0 0
        %1144 = vmatpush1.bf16.msra.mxu0 %v1124
        %1145 = vmatprep.subr.bf16.mxu0 0
        %1146 = vmatpush1.bf16.msra.mxu0 %v1123
        %1147 = vmatprep.subr.bf16.mxu0 0
        %1148 = vmatpush2.bf16.msra.mxu0 0
        %1149 = vmatprep.subr.bf16.mxu0 0
        %1150 = vmatpush2.bf16.msra.mxu0 0
        %1151 = vmatprep.subr.bf16.mxu0 0
        %1152 = vmatpush2.bf16.msra.mxu0 0
        %1153 = vmatprep.subr.bf16.mxu0 0
        %1154 = vmatpush2.bf16.msra.mxu0 0
        %1155 = vmatprep.subr.bf16.mxu0 0
        %1156 = vmatpush2.bf16.msra.mxu0 0
        %1157 = vmatprep.subr.bf16.mxu0 0
        %1158 = vmatpush2.bf16.msra.mxu0 0
        %1159 = vmatprep.subr.bf16.mxu0 0
        %1160 = vmatpush2.bf16.msra.mxu0 0
        %1161 = vmatprep.subr.bf16.mxu0 0
        %1162 = vmatpush2.bf16.msra.mxu0 0
        %1163 = vmatprep.mubr.bf16.mxu0 0
        %1164 = vmatmul.mubr.bf16.gmra.mxu0 %v1129
        %v1165 = vpop.f32.mrf.mxu0
        %v1166 = vadd.f32 0.0, %v1165
        %v1167 = vpop.f32.mrf.mxu0
        %v1168 = vpop.f32.mrf.mxu0
        %v1169 = vpop.f32.mrf.mxu0
        %1170 = vdwg.mxu0
        %v1171 = vadd.f32 %v623, %v1166
        %v1172 = vld [vmem:[%s6] sm:$0x1]
        %v1174 = vlaneseq
        %v1175 = vshrl.u32 %v1174, 7
        %v1176 = vsub.s32 0, %v1175
        %v1177 = vrot.slane %v1172, %v1176
        %v1179 = vadd.f32 %v1171, %v1177
        %v1180 = vld [vmem:[#allocation6] sm:$0x1]
        %v1181 = vld [vmem:[#allocation9] sm:$0x1]
        %v1182 = vsel %vm1127, %v1179, 0.0
        %1183 = vadd.xlane.f32.xlu0 %v1182
        %v1184 = vpop.xlane.xlu0 %1183
        %v1185 = vrcp.pop 32.0
        %v1186 = vmul.f32 %v1184, %v1185
        %v1187 = vsub.f32 %v1179, %v1186
        %v1188 = vmul.f32 %v1187, %v1187
        %v1189 = vsel %vm1127, %v1188, 0.0
        %1190 = vadd.xlane.f32.xlu0 %v1189
        %v1191 = vpop.xlane.xlu0 %1190
        %v1192 = vmul.f32 %v1191, %v1185
        %v1193 = vadd.f32 %v1192, 1e-06
        %v1194 = vrsqrt.pop %v1193
        %v1195 = vmul.f32 %v1187, %v1194
        %v1197 = vlaneseq
        %v1198 = vshrl.u32 %v1197, 7
        %v1199 = vsub.s32 0, %v1198
        %v1200 = vrot.slane %v1180, %v1199
        %v1202 = vmul.f32 %v1195, %v1200
        %v1204 = vlaneseq
        %v1205 = vshrl.u32 %v1204, 7
        %v1206 = vsub.s32 0, %v1205
        %v1207 = vrot.slane %v1181, %v1206
        %v1209 = vadd.f32 %v1202, %v1207
        %v1210 = vpack.c.bf16 %v1209, %v1209
        %v1211 = vld [vmem:[%s12] sm:$0x1]
        %v1213 = vlaneseq
        %v1214 = vshrl.u32 %v1213, 7
        %v1215 = vsub.s32 0, %v1214
        %v1216 = vrot.slane %v1211, %v1215
        %v1218 = vadd.f32 %v1179, %v1216
        %v1219 = vld [vmem:[#allocation11] sm:$0xf]
        %v1220 = vld [vmem:[#allocation11 + $0x4] sm:$0xf]
        %v1221 = vld [vmem:[#allocation11 + $0x8] sm:$0xf]
        %v1222 = vld [vmem:[#allocation11 + $0xc] sm:$0xf]
        %v1223 = vld [vmem:[#allocation12] sm:$0x1]
        %v1225 = vlaneseq
        %v1226 = vshrl.u32 %v1225, 7
        %v1227 = vsub.s32 0, %v1226
        %v1228 = vrot.slane %v1223, %v1227
        %v1234 = vunpack.c.l.b16 %v1219
        %v1235 = vunpack.c.l.b16 %v1220
        %v1236 = vunpack.c.l.b16 %v1221
        %v1237 = vunpack.c.l.b16 %v1222
        %v1238 = vpack.c.b16 %v1235, %v1234
        %v1239 = vpack.c.b16 %v1237, %v1236
        %v1243 = vsel %vm1127, %v1210, 0
        %1245 = vmatprep.subr.bf16.mxu0 0
        %1246 = vmatpush1.bf16.msra.mxu0 0
        %1247 = vmatprep.subr.bf16.mxu0 0
        %1248 = vmatpush1.bf16.msra.mxu0 0
        %1249 = vmatprep.subr.bf16.mxu0 0
        %1250 = vmatpush1.bf16.msra.mxu0 0
        %1251 = vmatprep.subr.bf16.mxu0 0
        %1252 = vmatpush1.bf16.msra.mxu0 0
        %1253 = vmatprep.subr.bf16.mxu0 0
        %1254 = vmatpush1.bf16.msra.mxu0 0
        %1255 = vmatprep.subr.bf16.mxu0 0
        %1256 = vmatpush1.bf16.msra.mxu0 0
        %1257 = vmatprep.subr.bf16.mxu0 0
        %1258 = vmatpush1.bf16.msra.mxu0 %v1239
        %1259 = vmatprep.subr.bf16.mxu0 0
        %1260 = vmatpush1.bf16.msra.mxu0 %v1238
        %1261 = vmatprep.subr.bf16.mxu0 0
        %1262 = vmatpush2.bf16.msra.mxu0 0
        %1263 = vmatprep.subr.bf16.mxu0 0
        %1264 = vmatpush2.bf16.msra.mxu0 0
        %1265 = vmatprep.subr.bf16.mxu0 0
        %1266 = vmatpush2.bf16.msra.mxu0 0
        %1267 = vmatprep.subr.bf16.mxu0 0
        %1268 = vmatpush2.bf16.msra.mxu0 0
        %1269 = vmatprep.subr.bf16.mxu0 0
        %1270 = vmatpush2.bf16.msra.mxu0 0
        %1271 = vmatprep.subr.bf16.mxu0 0
        %1272 = vmatpush2.bf16.msra.mxu0 0
        %1273 = vmatprep.subr.bf16.mxu0 0
        %1274 = vmatpush2.bf16.msra.mxu0 0
        %1275 = vmatprep.subr.bf16.mxu0 0
        %1276 = vmatpush2.bf16.msra.mxu0 0
        %1277 = vmatprep.mubr.bf16.mxu0 0
        %1278 = vmatmul.mubr.bf16.gmra.mxu0 %v1243
        %v1279 = vpop.f32.mrf.mxu0
        %v1280 = vadd.f32 %v1228, %v1279
        %v1281 = vpop.f32.mrf.mxu0
        %v1282 = vpop.f32.mrf.mxu0
        %v1283 = vpop.f32.mrf.mxu0
        %1284 = vdwg.mxu0
        %v1285 = vmul.f32 %v1280, 0.5
        %v1286 = vmul.f32 %v1280, 0.044715
        %v1287 = vmul.f32 %v1286, %v1280
        %v1288 = vmul.f32 %v1287, %v1280
        %v1289 = vadd.f32 %v1280, %v1288
        %v1290 = vmul.f32 %v1289, 0.7978846
        %v1291 = vtanh.pop %v1290
        %v1292 = vadd.f32 %v1291, 1.0
        %v1293 = vmul.f32 %v1285, %v1292
        %v1294 = vpack.c.bf16 %v1293, %v1293
        %v1295 = vld [vmem:[%s11] sm:$0xf]
        %v1296 = vld [vmem:[%s11 + $0x4] sm:$0xf]
        %v1297 = vld [vmem:[%s11 + $0x8] sm:$0xf]
        %v1298 = vld [vmem:[%s11 + $0xc] sm:$0xf]
        %v1299 = vld [vmem:[%s11 + $0x10] sm:$0xf]
        %v1300 = vld [vmem:[%s11 + $0x14] sm:$0xf]
        %v1301 = vld [vmem:[%s11 + $0x18] sm:$0xf]
        %v1302 = vld [vmem:[%s11 + $0x1c] sm:$0xf]
        %v1311 = vunpack.c.l.b16 %v1295
        %v1312 = vunpack.c.l.b16 %v1296
        %v1313 = vunpack.c.l.b16 %v1297
        %v1314 = vunpack.c.l.b16 %v1298
        %v1315 = vunpack.c.l.b16 %v1299
        %v1316 = vunpack.c.l.b16 %v1300
        %v1317 = vunpack.c.l.b16 %v1301
        %v1318 = vunpack.c.l.b16 %v1302
        %v1319 = vpack.c.b16 %v1312, %v1311
        %v1320 = vpack.c.b16 %v1314, %v1313
        %v1321 = vpack.c.b16 %v1316, %v1315
        %v1322 = vpack.c.b16 %v1318, %v1317
        %vm1327 = vcmask 523264
        %v1329 = vsel %vm1327, %v1294, 0
        %1331 = vmatprep.subr.bf16.mxu0 0
        %1332 = vmatpush1.bf16.msra.mxu0 0
        %1333 = vmatprep.subr.bf16.mxu0 0
        %1334 = vmatpush1.bf16.msra.mxu0 0
        %1335 = vmatprep.subr.bf16.mxu0 0
        %1336 = vmatpush1.bf16.msra.mxu0 0
        %1337 = vmatprep.subr.bf16.mxu0 0
        %1338 = vmatpush1.bf16.msra.mxu0 0
        %1339 = vmatprep.subr.bf16.mxu0 0
        %1340 = vmatpush1.bf16.msra.mxu0 %v1322
        %1341 = vmatprep.subr.bf16.mxu0 0
        %1342 = vmatpush1.bf16.msra.mxu0 %v1321
        %1343 = vmatprep.subr.bf16.mxu0 0
        %1344 = vmatpush1.bf16.msra.mxu0 %v1320
        %1345 = vmatprep.subr.bf16.mxu0 0
        %1346 = vmatpush1.bf16.msra.mxu0 %v1319
        %1347 = vmatprep.subr.bf16.mxu0 0
        %1348 = vmatpush2.bf16.msra.mxu0 0
        %1349 = vmatprep.subr.bf16.mxu0 0
        %1350 = vmatpush2.bf16.msra.mxu0 0
        %1351 = vmatprep.subr.bf16.mxu0 0
        %1352 = vmatpush2.bf16.msra.mxu0 0
        %1353 = vmatprep.subr.bf16.mxu0 0
        %1354 = vmatpush2.bf16.msra.mxu0 0
        %1355 = vmatprep.subr.bf16.mxu0 0
        %1356 = vmatpush2.bf16.msra.mxu0 0
        %1357 = vmatprep.subr.bf16.mxu0 0
        %1358 = vmatpush2.bf16.msra.mxu0 0
        %1359 = vmatprep.subr.bf16.mxu0 0
        %1360 = vmatpush2.bf16.msra.mxu0 0
        %1361 = vmatprep.subr.bf16.mxu0 0
        %1362 = vmatpush2.bf16.msra.mxu0 0
        %1363 = vmatprep.mubr.bf16.mxu0 0
        %1364 = vmatmul.mubr.bf16.gmra.mxu0 %v1329
        %v1365 = vpop.f32.mrf.mxu0
        %v1366 = vadd.f32 0.0, %v1365
        %v1367 = vpop.f32.mrf.mxu0
        %v1368 = vpop.f32.mrf.mxu0
        %v1369 = vpop.f32.mrf.mxu0
        %1370 = vdwg.mxu0
        %v1371 = vadd.f32 %v1218, %v1366
        %1372 = vst.msk [vmem:[%s498] sm:$0xff] %vm1127, %v1371
        %s1373 = sand.u32 %s330, 1
        %s1374 = scalar_lea.sflag [#allocation8], %s1373
        %s1375 = sand.u32 %s330, 1
        %s1376 = smul.addr %s1375, 8
        %s1377 = scalar_lea.vmem [#allocation14], %s1376
        // Predicated region
        $region93: #{tpu_custom_call.1} parent=71 // pred_check
          %p1378 = pneg %p340
        $region94: #{tpu_custom_call.1} parent=71 // pred_check_branch
          %1380 = sbr.rel (%p1378) target = $region96
        $region95: #{tpu_custom_call.1} parent=71 // pred_region
          %s1382 = ssub.s32 128, 128
          %1383 = vsyncadd %s1374, %s1382
          %s1384 = sadd.s32 %s35, %s34
          %s1385 = smul.addr %s1384, 128
          %s1386 = scalar_lea.hbm %s13, %s1385
          %s1388 = sshll.u32 %s1377, 4
          %s1389 = int_to_ptr.vmem [resolvable:$true] %s1388
          %1391 = dma.vmem_to_hbm [thread:$0]  %s1389, 128, %s1386, %s1374
        $region96: #{tpu_custom_call.1} parent=71 // pred_fallthru
          _
      $region72: #{tpu_custom_call.1} parent=5 // pred_fallthru
        _
      %p1392 = scmp.le.s32.totalorder 2, %s25
      // Predicated region
      $region97: #{tpu_custom_call.1} parent=5 // pred_check
        %p1393 = pneg %p1392
      $region98: #{tpu_custom_call.1} parent=5 // pred_check_branch
        %1395 = sbr.rel (%p1393) target = $region100
      $region99: #{tpu_custom_call.1} parent=5 // pred_region
        %s1396 = ssub.s32 %s25, 2
        // Predicated region
        $region101: #{tpu_custom_call.1} parent=99 // pred_check
          %p1397 = pneg %p346
        $region102: #{tpu_custom_call.1} parent=99 // pred_check_branch
          %1399 = sbr.rel (%p1397) target = $region104
        $region103: #{tpu_custom_call.1} parent=99 // pred_region
          %s1400 = sand.u32 %s331, 1
          %s1401 = scalar_lea.sflag [#allocation8], %s1400
          %s1402 = sand.u32 %s331, 1
          %s1403 = smul.addr %s1402, 8
          %s1404 = scalar_lea.vmem [#allocation14], %s1403
          %1405 = dma.done %s1401, 128
        $region104: #{tpu_custom_call.1} parent=99 // pred_fallthru
          _
      $region100: #{tpu_custom_call.1} parent=5 // pred_fallthru
        _
    $region6: #{tpu_custom_call.1} parent=1 // loop_footer
      %s29 = sadd.s32 1, %s25
    $region7: #{tpu_custom_call.1} parent=1 // loop_footer_branch
      %24 = sbr.rel target = $region3
    $region8: #{tpu_custom_call.1} parent=1 // loop_exit
      _
    %1406 = vsyncpa [#allocation7], 1
    %s1407 = scalar_lea.sflag [#allocation7], 1
    %1408 = vsyncpa %s1407, 1
    %1409 = vsyncpa [#allocation10], 1
    %1410 = vsyncpa [#allocation13], 1
    %1411 = vsyncpa [#allocation8], 1
    %s1412 = scalar_lea.sflag [#allocation8], 1
    %1413 = vsyncpa %s1412, 1

</llo_original>
